<compile_context>
chip_gen: v7x
topology: tpu7x:2x2x1
jax: 0.10.0
libtpu: 0.0.40
codegen_flags: <defaults>
</compile_context>

<pallas_src>
import numpy as np
import jax
import jax.numpy as jnp
from jax.experimental import pallas as pl
from jax.experimental.pallas import tpu as pltpu


# ------------------------------ parameters ---------------------------------

def init_params(key, cin=3, c1=8, c2=8, img_size=(28, 28), num_classes=16):
    """PyTorch-layout params: Conv2d (cout, cin, kh, kw); Linear (out, in)."""
    kh, kw = img_size[0] // 7, img_size[1] // 7
    ks = jax.random.split(key, 8)
    s = 0.05
    return dict(
        w1=jax.random.normal(ks[0], (c1, cin, 3, 3), jnp.float32) * s,
        b1=jax.random.normal(ks[1], (c1,), jnp.float32) * s,
        w2=jax.random.normal(ks[2], (c2, c1, 3, 3), jnp.float32) * s,
        b2=jax.random.normal(ks[3], (c2,), jnp.float32) * s,
        w3=jax.random.normal(ks[4], (c2, c2, kh, kw), jnp.float32) * s,
        b3=jax.random.normal(ks[5], (c2,), jnp.float32) * s,
        wfc=jax.random.normal(ks[6], (num_classes, c2 * 49), jnp.float32) * s,
        bfc=jax.random.normal(ks[7], (num_classes,), jnp.float32) * s,
    )


def _geometry(H, W):
    KH, KW = H // 7, W // 7
    WP = W + 2
    NQ = (H + 2) * WP                                  # zero-padded grid, flattened
    tail = max(2 * WP + 2, (KH - 1) * WP + (KW - 1))   # largest in-kernel tap offset
    NBUF = NQ + tail                                   # tap slices stay in-bounds
    return KH, KW, WP, NQ, NBUF


def prepare_params(params, img_size):
    """One-time repack of PyTorch-layout weights into the kernel layout."""
    H, W = img_size
    KH, KW, WP, NQ, NBUF = _geometry(H, W)
    c1, cin = params["w1"].shape[:2]
    c2 = params["w2"].shape[0]
    ncls = params["wfc"].shape[0]
    cp = -(-cin // 8) * 8                              # pad cin up to a sublane tile

    # conv weights -> (cout, taps*cin): tap order (dh, dw), cin minor
    w1p = jnp.pad(params["w1"], ((0, 0), (0, cp - cin), (0, 0), (0, 0)))
    w1f = jnp.transpose(w1p, (0, 2, 3, 1)).reshape(c1, 9 * cp)
    w2f = jnp.transpose(params["w2"], (0, 2, 3, 1)).reshape(c2, 9 * c1)
    w3f = jnp.transpose(params["w3"], (0, 2, 3, 1)).reshape(c2, KH * KW * c2)
    # fc weight pre-permuted to the (c, 7, 7) order the kernel produces
    wfcs = params["wfc"].reshape(ncls, c2, 49).transpose(1, 2, 0)

    # interior mask of the padded grid (re-padding between the two 3x3 convs)
    r = np.arange(NBUF)
    a, b = r // WP, r % WP
    mask = (r < NQ) & (a >= 1) & (a <= H) & (b >= 1) & (b <= W)
    mask = jnp.asarray(mask.astype(np.float32).reshape(1, NBUF))
    # flat anchor index of each of the 7x7 kernel==stride patches
    py, px = np.meshgrid(np.arange(7), np.arange(7), indexing="ij")
    base = jnp.asarray((KH * py * WP + KW * px).reshape(1, 49).astype(np.int32))

    return dict(
        w1f=w1f, b1=params["b1"].reshape(c1, 1),
        w2f=w2f, b2=params["b2"].reshape(c2, 1),
        w3f=w3f, b3=params["b3"].reshape(c2, 1),
        wfc=wfcs, bfc=params["bfc"].reshape(1, ncls),
        mask=mask, base=base,
    )


# ----------------------------- fused forward -------------------------------

def obj_det_cnn_forward(x_nchw, prep):
    x = x_nchw.astype(jnp.float32)
    N, cin, H, W = x.shape
    KH, KW, WP, NQ, NBUF = _geometry(H, W)
    c1 = prep["w1f"].shape[0]
    c2 = prep["w2f"].shape[0]
    cp = prep["w1f"].shape[1] // 9
    ncls = prep["bfc"].shape[-1]
    npatch = prep["base"].shape[-1]                    # 49
    off3 = [dh * WP + dw for dh in range(3) for dw in range(3)]
    offp = [dh * WP + dw for dh in range(KH) for dw in range(KW)]
    trows = max(9 * cp, 9 * c1, KH * KW * c2)
    cact = max(cp, c1, c2)

    # glue on the raw network input only: pad channels to a sublane tile, pad
    # spatially (zeros for the 'same' conv), flatten the padded grid, extend.
    xp = jnp.pad(x, ((0, 0), (0, cp - cin), (1, 1), (1, 1)))
    xflat = jnp.pad(xp.reshape(N, cp, NQ), ((0, 0), (0, 0), (0, NBUF - NQ)))

    def kernel(x_ref, mask_ref, base_ref, w1_ref, b1_ref, w2_ref, b2_ref,
               w3_ref, b3_ref, wfc_ref, bfc_ref, o_ref, taps_ref, pad_ref):
        f32 = jnp.float32

        def fold_taps(src, offs, c):
            # stack shifted taps on the sublane axis -> ONE MXU contraction
            for t, off in enumerate(offs):
                taps_ref[t * c:(t + 1) * c, :] = src[:, off:off + NQ]
            return taps_ref[0:len(offs) * c, :]

        # ---- layer1: 3x3 'same' conv + ReLU (dense over the padded grid) ----
        t1 = fold_taps(x_ref[0], off3, cp)
        z1 = jnp.dot(w1_ref[...], t1, preferred_element_type=f32)
        z1 = jnp.maximum(z1 + b1_ref[...], 0.0)                   # (c1, NQ)

        # re-embed layer1 output into a zero-padded grid (shift + border mask)
        pad_ref[...] = jnp.zeros_like(pad_ref)
        pad_ref[0:c1, WP + 1:WP + 1 + NQ] = z1
        pad_ref[...] = pad_ref[...] * mask_ref[...]

        # ---- layer2: 3x3 'same' conv + ReLU ----
        t2 = fold_taps(pad_ref[0:c1, :], off3, c1)
        z2 = jnp.dot(w2_ref[...], t2, preferred_element_type=f32)
        z2 = jnp.maximum(z2 + b2_ref[...], 0.0)                   # (c2, NQ)

        # ---- layer3: kernel==stride patch conv + ReLU ----
        # dense 'valid' conv at every grid position via one folded matmul, then
        # gather the 49 patch anchors with a one-hot selection matmul (MXU).
        pad_ref[...] = jnp.zeros_like(pad_ref)
        pad_ref[0:c2, 0:NQ] = z2
        t3 = fold_taps(pad_ref[0:c2, :], offp, c2)
        dense = jnp.dot(w3_ref[...], t3, preferred_element_type=f32)   # (c2, NQ)
        q_iota = jax.lax.broadcasted_iota(jnp.int32, (NQ, npatch), 0)
        sel = (q_iota == base_ref[...]).astype(f32)               # (NQ, 49) one-hot
        y3 = jnp.dot(dense, sel, preferred_element_type=f32)
        y3 = jnp.maximum(y3 + b3_ref[...], 0.0)                   # (c2, 49)

        # ---- fc1: wfc pre-permuted to (c2, 49, ncls) == PyTorch (C,7,7) flatten
        out = bfc_ref[...]                                        # (1, ncls)
        for co in range(c2):
            out = out + jnp.dot(y3[co:co + 1, :], wfc_ref[co],
                                preferred_element_type=f32)
        o_ref[0] = out

    out = pl.pallas_call(
        kernel,
        out_shape=jax.ShapeDtypeStruct((N, 1, ncls), jnp.float32),
        grid=(N,),
        in_specs=[
            pl.BlockSpec((1, cp, NBUF), lambda n: (n, 0, 0)),
            pl.BlockSpec((1, NBUF), lambda n: (0, 0)),
            pl.BlockSpec((1, npatch), lambda n: (0, 0)),
            pl.BlockSpec((c1, 9 * cp), lambda n: (0, 0)),
            pl.BlockSpec((c1, 1), lambda n: (0, 0)),
            pl.BlockSpec((c2, 9 * c1), lambda n: (0, 0)),
            pl.BlockSpec((c2, 1), lambda n: (0, 0)),
            pl.BlockSpec((c2, KH * KW * c2), lambda n: (0, 0)),
            pl.BlockSpec((c2, 1), lambda n: (0, 0)),
            pl.BlockSpec((c2, npatch, ncls), lambda n: (0, 0, 0)),
            pl.BlockSpec((1, ncls), lambda n: (0, 0)),
        ],
        out_specs=pl.BlockSpec((1, 1, ncls), lambda n: (n, 0, 0)),
        scratch_shapes=[
            pltpu.VMEM((trows, NQ), jnp.float32),    # folded tap stack
            pltpu.VMEM((cact, NBUF), jnp.float32),   # padded/extended activations
        ],
        compiler_params=pltpu.CompilerParams(
            dimension_semantics=("parallel",)),      # v7x: one image per TensorCore
    )(xflat, prep["mask"], prep["base"], prep["w1f"], prep["b1"],
      prep["w2f"], prep["b2"], prep["w3f"], prep["b3"],
      prep["wfc"], prep["bfc"])
    return out[:, 0, :]


# ----------------------------- XLA reference --------------------------------

def reference_forward(x, params):
    """Pure-JAX reference matching the PyTorch module."""
    dn = ("NCHW", "OIHW", "NCHW")
    hi = jax.lax.Precision.HIGHEST
    kh, kw = params["w3"].shape[2:]
    y = jax.lax.conv_general_dilated(x, params["w1"], (1, 1), "SAME",
                                     dimension_numbers=dn, precision=hi)
    y = jax.nn.relu(y + params["b1"][None, :, None, None])
    y = jax.lax.conv_general_dilated(y, params["w2"], (1, 1), "SAME",
                                     dimension_numbers=dn, precision=hi)
    y = jax.nn.relu(y + params["b2"][None, :, None, None])
    y = jax.lax.conv_general_dilated(y, params["w3"], (kh, kw), "VALID",
                                     dimension_numbers=dn, precision=hi)
    y = jax.nn.relu(y + params["b3"][None, :, None, None])
    y = y.reshape(y.shape[0], -1)                     # PyTorch Flatten: (C, 7, 7)
    return jnp.dot(y, params["wfc"].T, precision=hi) + params["bfc"]


if __name__ == "__main__":
    # Small shapes consistent with the module: img_size=(28, 28) so layer3 has
    # kernel == stride == (4, 4); channels 3 -> 8 -> 8; num_classes=16; batch=2.
    IMG, CIN, C1, C2, NCLS = (28, 28), 3, 8, 8, 16
    key = jax.random.PRNGKey(0)
    kp, kx = jax.random.split(key)
    params = init_params(kp, cin=CIN, c1=C1, c2=C2, img_size=IMG,
                         num_classes=NCLS)
    x = jax.random.normal(kx, (2, CIN, IMG[0], IMG[1]), jnp.float32)

    prep = prepare_params(params, IMG)
    fwd = jax.jit(obj_det_cnn_forward)
    out = jax.block_until_ready(fwd(x, prep))
    assert out.shape == (2, NCLS) and out.dtype == jnp.float32

    ref = reference_forward(x, params)
    np.testing.assert_allclose(np.asarray(out), np.asarray(ref),
                               rtol=2e-2, atol=1e-3)
    print("KERNEL_OK")
</pallas_src>

<mosaic_0001>
module attributes {stable_mosaic.version = 11 : i64} {
  func.func @kernel(%arg0: i32, %arg1: memref<1x8x993xf32, #tpu.memory_space<vmem>>, %arg2: memref<1x993xf32, #tpu.memory_space<vmem>>, %arg3: memref<1x49xi32, #tpu.memory_space<vmem>>, %arg4: memref<8x72xf32, #tpu.memory_space<vmem>>, %arg5: memref<8x1xf32, #tpu.memory_space<vmem>>, %arg6: memref<8x72xf32, #tpu.memory_space<vmem>>, %arg7: memref<8x1xf32, #tpu.memory_space<vmem>>, %arg8: memref<8x128xf32, #tpu.memory_space<vmem>>, %arg9: memref<8x1xf32, #tpu.memory_space<vmem>>, %arg10: memref<8x49x16xf32, #tpu.memory_space<vmem>>, %arg11: memref<1x16xf32, #tpu.memory_space<vmem>>, %arg12: memref<1x1x16xf32, #tpu.memory_space<vmem>>, %arg13: memref<128x900xf32, #tpu.memory_space<vmem>>, %arg14: memref<8x993xf32, #tpu.memory_space<vmem>>) attributes {dimension_semantics = [#tpu.dimension_semantics<parallel>], iteration_bounds = array<i64: 2>, scalar_prefetch = 0 : i64, scratch_operands = 2 : i64, tpu.core_type = #tpu.core_type<tc>, window_params = [{transform_indices = @transform_0, window_bounds = array<i64: 1, 8, 993>}, {pipeline_mode = #tpu.pipeline_mode<synchronous>, transform_indices = @transform_1, window_bounds = array<i64: 1, 993>}, {pipeline_mode = #tpu.pipeline_mode<synchronous>, transform_indices = @transform_2, window_bounds = array<i64: 1, 49>}, {pipeline_mode = #tpu.pipeline_mode<synchronous>, transform_indices = @transform_3, window_bounds = array<i64: 8, 72>}, {pipeline_mode = #tpu.pipeline_mode<synchronous>, transform_indices = @transform_4, window_bounds = array<i64: 8, 1>}, {pipeline_mode = #tpu.pipeline_mode<synchronous>, transform_indices = @transform_5, window_bounds = array<i64: 8, 72>}, {pipeline_mode = #tpu.pipeline_mode<synchronous>, transform_indices = @transform_6, window_bounds = array<i64: 8, 1>}, {pipeline_mode = #tpu.pipeline_mode<synchronous>, transform_indices = @transform_7, window_bounds = array<i64: 8, 128>}, {pipeline_mode = #tpu.pipeline_mode<synchronous>, transform_indices = @transform_8, window_bounds = array<i64: 8, 1>}, {pipeline_mode = #tpu.pipeline_mode<synchronous>, transform_indices = @transform_9, window_bounds = array<i64: 8, 49, 16>}, {pipeline_mode = #tpu.pipeline_mode<synchronous>, transform_indices = @transform_10, window_bounds = array<i64: 1, 16>}, {transform_indices = @transform_11, window_bounds = array<i64: 1, 1, 16>}]} {
    %c0 = arith.constant 0 : index
    %c0_0 = arith.constant 0 : index
    %c0_1 = arith.constant 0 : index
    %0 = vector.load %arg1[%c0, %c0_0, %c0_1] : memref<1x8x993xf32, #tpu.memory_space<vmem>>, vector<1x8x993xf32>
    %1 = vector.shape_cast %0 : vector<1x8x993xf32> to vector<8x993xf32>
    %2 = vector.extract_strided_slice %1 {offsets = [0, 0], sizes = [8, 900], strides = [1, 1]} : vector<8x993xf32> to vector<8x900xf32>
    %c0_2 = arith.constant 0 : index
    %c0_3 = arith.constant 0 : index
    %3 = vector.load %arg13[%c0_2, %c0_3] : memref<128x900xf32, #tpu.memory_space<vmem>>, vector<8x900xf32>
    tpu.vector_store %arg13[%c0_2, %c0_3], %2 {strides = array<i32>} : memref<128x900xf32, #tpu.memory_space<vmem>>, vector<8x900xf32>,
    %4 = vector.extract_strided_slice %1 {offsets = [0, 1], sizes = [8, 900], strides = [1, 1]} : vector<8x993xf32> to vector<8x900xf32>
    %c8 = arith.constant 8 : index
    %c0_4 = arith.constant 0 : index
    %5 = vector.load %arg13[%c8, %c0_4] : memref<128x900xf32, #tpu.memory_space<vmem>>, vector<8x900xf32>
    tpu.vector_store %arg13[%c8, %c0_4], %4 {strides = array<i32>} : memref<128x900xf32, #tpu.memory_space<vmem>>, vector<8x900xf32>,
    %6 = vector.extract_strided_slice %1 {offsets = [0, 2], sizes = [8, 900], strides = [1, 1]} : vector<8x993xf32> to vector<8x900xf32>
    %c16 = arith.constant 16 : index
    %c0_5 = arith.constant 0 : index
    %7 = vector.load %arg13[%c16, %c0_5] : memref<128x900xf32, #tpu.memory_space<vmem>>, vector<8x900xf32>
    tpu.vector_store %arg13[%c16, %c0_5], %6 {strides = array<i32>} : memref<128x900xf32, #tpu.memory_space<vmem>>, vector<8x900xf32>,
    %8 = vector.extract_strided_slice %1 {offsets = [0, 30], sizes = [8, 900], strides = [1, 1]} : vector<8x993xf32> to vector<8x900xf32>
    %c24 = arith.constant 24 : index
    %c0_6 = arith.constant 0 : index
    %9 = vector.load %arg13[%c24, %c0_6] : memref<128x900xf32, #tpu.memory_space<vmem>>, vector<8x900xf32>
    tpu.vector_store %arg13[%c24, %c0_6], %8 {strides = array<i32>} : memref<128x900xf32, #tpu.memory_space<vmem>>, vector<8x900xf32>,
    %10 = vector.extract_strided_slice %1 {offsets = [0, 31], sizes = [8, 900], strides = [1, 1]} : vector<8x993xf32> to vector<8x900xf32>
    %c32 = arith.constant 32 : index
    %c0_7 = arith.constant 0 : index
    %11 = vector.load %arg13[%c32, %c0_7] : memref<128x900xf32, #tpu.memory_space<vmem>>, vector<8x900xf32>
    tpu.vector_store %arg13[%c32, %c0_7], %10 {strides = array<i32>} : memref<128x900xf32, #tpu.memory_space<vmem>>, vector<8x900xf32>,
    %12 = vector.extract_strided_slice %1 {offsets = [0, 32], sizes = [8, 900], strides = [1, 1]} : vector<8x993xf32> to vector<8x900xf32>
    %c40 = arith.constant 40 : index
    %c0_8 = arith.constant 0 : index
    %13 = vector.load %arg13[%c40, %c0_8] : memref<128x900xf32, #tpu.memory_space<vmem>>, vector<8x900xf32>
    tpu.vector_store %arg13[%c40, %c0_8], %12 {strides = array<i32>} : memref<128x900xf32, #tpu.memory_space<vmem>>, vector<8x900xf32>,
    %14 = vector.extract_strided_slice %1 {offsets = [0, 60], sizes = [8, 900], strides = [1, 1]} : vector<8x993xf32> to vector<8x900xf32>
    %c48 = arith.constant 48 : index
    %c0_9 = arith.constant 0 : index
    %15 = vector.load %arg13[%c48, %c0_9] : memref<128x900xf32, #tpu.memory_space<vmem>>, vector<8x900xf32>
    tpu.vector_store %arg13[%c48, %c0_9], %14 {strides = array<i32>} : memref<128x900xf32, #tpu.memory_space<vmem>>, vector<8x900xf32>,
    %16 = vector.extract_strided_slice %1 {offsets = [0, 61], sizes = [8, 900], strides = [1, 1]} : vector<8x993xf32> to vector<8x900xf32>
    %c56 = arith.constant 56 : index
    %c0_10 = arith.constant 0 : index
    %17 = vector.load %arg13[%c56, %c0_10] : memref<128x900xf32, #tpu.memory_space<vmem>>, vector<8x900xf32>
    tpu.vector_store %arg13[%c56, %c0_10], %16 {strides = array<i32>} : memref<128x900xf32, #tpu.memory_space<vmem>>, vector<8x900xf32>,
    %18 = vector.extract_strided_slice %1 {offsets = [0, 62], sizes = [8, 900], strides = [1, 1]} : vector<8x993xf32> to vector<8x900xf32>
    %c64 = arith.constant 64 : index
    %c0_11 = arith.constant 0 : index
    %19 = vector.load %arg13[%c64, %c0_11] : memref<128x900xf32, #tpu.memory_space<vmem>>, vector<8x900xf32>
    tpu.vector_store %arg13[%c64, %c0_11], %18 {strides = array<i32>} : memref<128x900xf32, #tpu.memory_space<vmem>>, vector<8x900xf32>,
    %c0_12 = arith.constant 0 : index
    %c0_13 = arith.constant 0 : index
    %20 = vector.load %arg13[%c0_12, %c0_13] : memref<128x900xf32, #tpu.memory_space<vmem>>, vector<72x900xf32>
    %c0_14 = arith.constant 0 : index
    %c0_15 = arith.constant 0 : index
    %21 = vector.load %arg4[%c0_14, %c0_15] : memref<8x72xf32, #tpu.memory_space<vmem>>, vector<8x72xf32>
    %cst = arith.constant dense<0.000000e+00> : vector<8x900xf32>
    %22 = tpu.matmul %21, %20, %cst {dimension_numbers = #tpu.dot_dimension_numbers<[1], [0], [0], [1], [0, 0, 1, 1], [], []>} : vector<8x72xf32>, vector<72x900xf32>, vector<8x900xf32> -> vector<8x900xf32>
    %c0_16 = arith.constant 0 : index
    %c0_17 = arith.constant 0 : index
    %23 = vector.load %arg5[%c0_16, %c0_17] : memref<8x1xf32, #tpu.memory_space<vmem>>, vector<8x1xf32>
    %24 = vector.broadcast %23 : vector<8x1xf32> to vector<8x900xf32>
    %25 = arith.addf %22, %24 : vector<8x900xf32>
    %cst_18 = arith.constant 0.000000e+00 : f32
    %26 = vector.broadcast %cst_18 : f32 to vector<8x900xf32>
    %27 = arith.maximumf %25, %26 : vector<8x900xf32>
    %cst_19 = arith.constant 0.000000e+00 : f32
    %28 = vector.broadcast %cst_19 : f32 to vector<8x993xf32>
    %c0_20 = arith.constant 0 : index
    %c0_21 = arith.constant 0 : index
    %29 = vector.load %arg14[%c0_20, %c0_21] : memref<8x993xf32, #tpu.memory_space<vmem>>, vector<8x993xf32>
    tpu.vector_store %arg14[%c0_20, %c0_21], %28 {strides = array<i32>} : memref<8x993xf32, #tpu.memory_space<vmem>>, vector<8x993xf32>,
    %c0_22 = arith.constant 0 : index
    %c31 = arith.constant 31 : index
    %30 = vector.load %arg14[%c0_22, %c31] : memref<8x993xf32, #tpu.memory_space<vmem>>, vector<8x900xf32>
    tpu.vector_store %arg14[%c0_22, %c31], %27 {strides = array<i32>} : memref<8x993xf32, #tpu.memory_space<vmem>>, vector<8x900xf32>,
    %c0_23 = arith.constant 0 : index
    %c0_24 = arith.constant 0 : index
    %31 = vector.load %arg14[%c0_23, %c0_24] : memref<8x993xf32, #tpu.memory_space<vmem>>, vector<8x993xf32>
    %c0_25 = arith.constant 0 : index
    %c0_26 = arith.constant 0 : index
    %32 = vector.load %arg2[%c0_25, %c0_26] : memref<1x993xf32, #tpu.memory_space<vmem>>, vector<1x993xf32>
    %33 = vector.broadcast %32 : vector<1x993xf32> to vector<8x993xf32>
    %34 = arith.mulf %31, %33 : vector<8x993xf32>
    %c0_27 = arith.constant 0 : index
    %c0_28 = arith.constant 0 : index
    %35 = vector.load %arg14[%c0_27, %c0_28] : memref<8x993xf32, #tpu.memory_space<vmem>>, vector<8x993xf32>
    tpu.vector_store %arg14[%c0_27, %c0_28], %34 {strides = array<i32>} : memref<8x993xf32, #tpu.memory_space<vmem>>, vector<8x993xf32>,
    %c0_29 = arith.constant 0 : index
    %c0_30 = arith.constant 0 : index
    %36 = vector.load %arg14[%c0_29, %c0_30] : memref<8x993xf32, #tpu.memory_space<vmem>>, vector<8x993xf32>
    %37 = vector.extract_strided_slice %36 {offsets = [0, 0], sizes = [8, 900], strides = [1, 1]} : vector<8x993xf32> to vector<8x900xf32>
    %c0_31 = arith.constant 0 : index
    %c0_32 = arith.constant 0 : index
    %38 = vector.load %arg13[%c0_31, %c0_32] : memref<128x900xf32, #tpu.memory_space<vmem>>, vector<8x900xf32>
    tpu.vector_store %arg13[%c0_31, %c0_32], %37 {strides = array<i32>} : memref<128x900xf32, #tpu.memory_space<vmem>>, vector<8x900xf32>,
    %39 = vector.extract_strided_slice %36 {offsets = [0, 1], sizes = [8, 900], strides = [1, 1]} : vector<8x993xf32> to vector<8x900xf32>
    %c8_33 = arith.constant 8 : index
    %c0_34 = arith.constant 0 : index
    %40 = vector.load %arg13[%c8_33, %c0_34] : memref<128x900xf32, #tpu.memory_space<vmem>>, vector<8x900xf32>
    tpu.vector_store %arg13[%c8_33, %c0_34], %39 {strides = array<i32>} : memref<128x900xf32, #tpu.memory_space<vmem>>, vector<8x900xf32>,
    %41 = vector.extract_strided_slice %36 {offsets = [0, 2], sizes = [8, 900], strides = [1, 1]} : vector<8x993xf32> to vector<8x900xf32>
    %c16_35 = arith.constant 16 : index
    %c0_36 = arith.constant 0 : index
    %42 = vector.load %arg13[%c16_35, %c0_36] : memref<128x900xf32, #tpu.memory_space<vmem>>, vector<8x900xf32>
    tpu.vector_store %arg13[%c16_35, %c0_36], %41 {strides = array<i32>} : memref<128x900xf32, #tpu.memory_space<vmem>>, vector<8x900xf32>,
    %43 = vector.extract_strided_slice %36 {offsets = [0, 30], sizes = [8, 900], strides = [1, 1]} : vector<8x993xf32> to vector<8x900xf32>
    %c24_37 = arith.constant 24 : index
    %c0_38 = arith.constant 0 : index
    %44 = vector.load %arg13[%c24_37, %c0_38] : memref<128x900xf32, #tpu.memory_space<vmem>>, vector<8x900xf32>
    tpu.vector_store %arg13[%c24_37, %c0_38], %43 {strides = array<i32>} : memref<128x900xf32, #tpu.memory_space<vmem>>, vector<8x900xf32>,
    %45 = vector.extract_strided_slice %36 {offsets = [0, 31], sizes = [8, 900], strides = [1, 1]} : vector<8x993xf32> to vector<8x900xf32>
    %c32_39 = arith.constant 32 : index
    %c0_40 = arith.constant 0 : index
    %46 = vector.load %arg13[%c32_39, %c0_40] : memref<128x900xf32, #tpu.memory_space<vmem>>, vector<8x900xf32>
    tpu.vector_store %arg13[%c32_39, %c0_40], %45 {strides = array<i32>} : memref<128x900xf32, #tpu.memory_space<vmem>>, vector<8x900xf32>,
    %47 = vector.extract_strided_slice %36 {offsets = [0, 32], sizes = [8, 900], strides = [1, 1]} : vector<8x993xf32> to vector<8x900xf32>
    %c40_41 = arith.constant 40 : index
    %c0_42 = arith.constant 0 : index
    %48 = vector.load %arg13[%c40_41, %c0_42] : memref<128x900xf32, #tpu.memory_space<vmem>>, vector<8x900xf32>
    tpu.vector_store %arg13[%c40_41, %c0_42], %47 {strides = array<i32>} : memref<128x900xf32, #tpu.memory_space<vmem>>, vector<8x900xf32>,
    %49 = vector.extract_strided_slice %36 {offsets = [0, 60], sizes = [8, 900], strides = [1, 1]} : vector<8x993xf32> to vector<8x900xf32>
    %c48_43 = arith.constant 48 : index
    %c0_44 = arith.constant 0 : index
    %50 = vector.load %arg13[%c48_43, %c0_44] : memref<128x900xf32, #tpu.memory_space<vmem>>, vector<8x900xf32>
    tpu.vector_store %arg13[%c48_43, %c0_44], %49 {strides = array<i32>} : memref<128x900xf32, #tpu.memory_space<vmem>>, vector<8x900xf32>,
    %51 = vector.extract_strided_slice %36 {offsets = [0, 61], sizes = [8, 900], strides = [1, 1]} : vector<8x993xf32> to vector<8x900xf32>
    %c56_45 = arith.constant 56 : index
    %c0_46 = arith.constant 0 : index
    %52 = vector.load %arg13[%c56_45, %c0_46] : memref<128x900xf32, #tpu.memory_space<vmem>>, vector<8x900xf32>
    tpu.vector_store %arg13[%c56_45, %c0_46], %51 {strides = array<i32>} : memref<128x900xf32, #tpu.memory_space<vmem>>, vector<8x900xf32>,
    %53 = vector.extract_strided_slice %36 {offsets = [0, 62], sizes = [8, 900], strides = [1, 1]} : vector<8x993xf32> to vector<8x900xf32>
    %c64_47 = arith.constant 64 : index
    %c0_48 = arith.constant 0 : index
    %54 = vector.load %arg13[%c64_47, %c0_48] : memref<128x900xf32, #tpu.memory_space<vmem>>, vector<8x900xf32>
    tpu.vector_store %arg13[%c64_47, %c0_48], %53 {strides = array<i32>} : memref<128x900xf32, #tpu.memory_space<vmem>>, vector<8x900xf32>,
    %c0_49 = arith.constant 0 : index
    %c0_50 = arith.constant 0 : index
    %55 = vector.load %arg13[%c0_49, %c0_50] : memref<128x900xf32, #tpu.memory_space<vmem>>, vector<72x900xf32>
    %c0_51 = arith.constant 0 : index
    %c0_52 = arith.constant 0 : index
    %56 = vector.load %arg6[%c0_51, %c0_52] : memref<8x72xf32, #tpu.memory_space<vmem>>, vector<8x72xf32>
    %cst_53 = arith.constant dense<0.000000e+00> : vector<8x900xf32>
    %57 = tpu.matmul %56, %55, %cst_53 {dimension_numbers = #tpu.dot_dimension_numbers<[1], [0], [0], [1], [0, 0, 1, 1], [], []>} : vector<8x72xf32>, vector<72x900xf32>, vector<8x900xf32> -> vector<8x900xf32>
    %c0_54 = arith.constant 0 : index
    %c0_55 = arith.constant 0 : index
    %58 = vector.load %arg7[%c0_54, %c0_55] : memref<8x1xf32, #tpu.memory_space<vmem>>, vector<8x1xf32>
    %59 = vector.broadcast %58 : vector<8x1xf32> to vector<8x900xf32>
    %60 = arith.addf %57, %59 : vector<8x900xf32>
    %cst_56 = arith.constant 0.000000e+00 : f32
    %61 = vector.broadcast %cst_56 : f32 to vector<8x900xf32>
    %62 = arith.maximumf %60, %61 : vector<8x900xf32>
    %cst_57 = arith.constant 0.000000e+00 : f32
    %63 = vector.broadcast %cst_57 : f32 to vector<8x993xf32>
    %c0_58 = arith.constant 0 : index
    %c0_59 = arith.constant 0 : index
    %64 = vector.load %arg14[%c0_58, %c0_59] : memref<8x993xf32, #tpu.memory_space<vmem>>, vector<8x993xf32>
    tpu.vector_store %arg14[%c0_58, %c0_59], %63 {strides = array<i32>} : memref<8x993xf32, #tpu.memory_space<vmem>>, vector<8x993xf32>,
    %c0_60 = arith.constant 0 : index
    %c0_61 = arith.constant 0 : index
    %65 = vector.load %arg14[%c0_60, %c0_61] : memref<8x993xf32, #tpu.memory_space<vmem>>, vector<8x900xf32>
    tpu.vector_store %arg14[%c0_60, %c0_61], %62 {strides = array<i32>} : memref<8x993xf32, #tpu.memory_space<vmem>>, vector<8x900xf32>,
    %c0_62 = arith.constant 0 : index
    %c0_63 = arith.constant 0 : index
    %66 = vector.load %arg14[%c0_62, %c0_63] : memref<8x993xf32, #tpu.memory_space<vmem>>, vector<8x993xf32>
    %67 = vector.extract_strided_slice %66 {offsets = [0, 0], sizes = [8, 900], strides = [1, 1]} : vector<8x993xf32> to vector<8x900xf32>
    %c0_64 = arith.constant 0 : index
    %c0_65 = arith.constant 0 : index
    %68 = vector.load %arg13[%c0_64, %c0_65] : memref<128x900xf32, #tpu.memory_space<vmem>>, vector<8x900xf32>
    tpu.vector_store %arg13[%c0_64, %c0_65], %67 {strides = array<i32>} : memref<128x900xf32, #tpu.memory_space<vmem>>, vector<8x900xf32>,
    %69 = vector.extract_strided_slice %66 {offsets = [0, 1], sizes = [8, 900], strides = [1, 1]} : vector<8x993xf32> to vector<8x900xf32>
    %c8_66 = arith.constant 8 : index
    %c0_67 = arith.constant 0 : index
    %70 = vector.load %arg13[%c8_66, %c0_67] : memref<128x900xf32, #tpu.memory_space<vmem>>, vector<8x900xf32>
    tpu.vector_store %arg13[%c8_66, %c0_67], %69 {strides = array<i32>} : memref<128x900xf32, #tpu.memory_space<vmem>>, vector<8x900xf32>,
    %71 = vector.extract_strided_slice %66 {offsets = [0, 2], sizes = [8, 900], strides = [1, 1]} : vector<8x993xf32> to vector<8x900xf32>
    %c16_68 = arith.constant 16 : index
    %c0_69 = arith.constant 0 : index
    %72 = vector.load %arg13[%c16_68, %c0_69] : memref<128x900xf32, #tpu.memory_space<vmem>>, vector<8x900xf32>
    tpu.vector_store %arg13[%c16_68, %c0_69], %71 {strides = array<i32>} : memref<128x900xf32, #tpu.memory_space<vmem>>, vector<8x900xf32>,
    %73 = vector.extract_strided_slice %66 {offsets = [0, 3], sizes = [8, 900], strides = [1, 1]} : vector<8x993xf32> to vector<8x900xf32>
    %c24_70 = arith.constant 24 : index
    %c0_71 = arith.constant 0 : index
    %74 = vector.load %arg13[%c24_70, %c0_71] : memref<128x900xf32, #tpu.memory_space<vmem>>, vector<8x900xf32>
    tpu.vector_store %arg13[%c24_70, %c0_71], %73 {strides = array<i32>} : memref<128x900xf32, #tpu.memory_space<vmem>>, vector<8x900xf32>,
    %75 = vector.extract_strided_slice %66 {offsets = [0, 30], sizes = [8, 900], strides = [1, 1]} : vector<8x993xf32> to vector<8x900xf32>
    %c32_72 = arith.constant 32 : index
    %c0_73 = arith.constant 0 : index
    %76 = vector.load %arg13[%c32_72, %c0_73] : memref<128x900xf32, #tpu.memory_space<vmem>>, vector<8x900xf32>
    tpu.vector_store %arg13[%c32_72, %c0_73], %75 {strides = array<i32>} : memref<128x900xf32, #tpu.memory_space<vmem>>, vector<8x900xf32>,
    %77 = vector.extract_strided_slice %66 {offsets = [0, 31], sizes = [8, 900], strides = [1, 1]} : vector<8x993xf32> to vector<8x900xf32>
    %c40_74 = arith.constant 40 : index
    %c0_75 = arith.constant 0 : index
    %78 = vector.load %arg13[%c40_74, %c0_75] : memref<128x900xf32, #tpu.memory_space<vmem>>, vector<8x900xf32>
    tpu.vector_store %arg13[%c40_74, %c0_75], %77 {strides = array<i32>} : memref<128x900xf32, #tpu.memory_space<vmem>>, vector<8x900xf32>,
    %79 = vector.extract_strided_slice %66 {offsets = [0, 32], sizes = [8, 900], strides = [1, 1]} : vector<8x993xf32> to vector<8x900xf32>
    %c48_76 = arith.constant 48 : index
    %c0_77 = arith.constant 0 : index
    %80 = vector.load %arg13[%c48_76, %c0_77] : memref<128x900xf32, #tpu.memory_space<vmem>>, vector<8x900xf32>
    tpu.vector_store %arg13[%c48_76, %c0_77], %79 {strides = array<i32>} : memref<128x900xf32, #tpu.memory_space<vmem>>, vector<8x900xf32>,
    %81 = vector.extract_strided_slice %66 {offsets = [0, 33], sizes = [8, 900], strides = [1, 1]} : vector<8x993xf32> to vector<8x900xf32>
    %c56_78 = arith.constant 56 : index
    %c0_79 = arith.constant 0 : index
    %82 = vector.load %arg13[%c56_78, %c0_79] : memref<128x900xf32, #tpu.memory_space<vmem>>, vector<8x900xf32>
    tpu.vector_store %arg13[%c56_78, %c0_79], %81 {strides = array<i32>} : memref<128x900xf32, #tpu.memory_space<vmem>>, vector<8x900xf32>,
    %83 = vector.extract_strided_slice %66 {offsets = [0, 60], sizes = [8, 900], strides = [1, 1]} : vector<8x993xf32> to vector<8x900xf32>
    %c64_80 = arith.constant 64 : index
    %c0_81 = arith.constant 0 : index
    %84 = vector.load %arg13[%c64_80, %c0_81] : memref<128x900xf32, #tpu.memory_space<vmem>>, vector<8x900xf32>
    tpu.vector_store %arg13[%c64_80, %c0_81], %83 {strides = array<i32>} : memref<128x900xf32, #tpu.memory_space<vmem>>, vector<8x900xf32>,
    %85 = vector.extract_strided_slice %66 {offsets = [0, 61], sizes = [8, 900], strides = [1, 1]} : vector<8x993xf32> to vector<8x900xf32>
    %c72 = arith.constant 72 : index
    %c0_82 = arith.constant 0 : index
    %86 = vector.load %arg13[%c72, %c0_82] : memref<128x900xf32, #tpu.memory_space<vmem>>, vector<8x900xf32>
    tpu.vector_store %arg13[%c72, %c0_82], %85 {strides = array<i32>} : memref<128x900xf32, #tpu.memory_space<vmem>>, vector<8x900xf32>,
    %87 = vector.extract_strided_slice %66 {offsets = [0, 62], sizes = [8, 900], strides = [1, 1]} : vector<8x993xf32> to vector<8x900xf32>
    %c80 = arith.constant 80 : index
    %c0_83 = arith.constant 0 : index
    %88 = vector.load %arg13[%c80, %c0_83] : memref<128x900xf32, #tpu.memory_space<vmem>>, vector<8x900xf32>
    tpu.vector_store %arg13[%c80, %c0_83], %87 {strides = array<i32>} : memref<128x900xf32, #tpu.memory_space<vmem>>, vector<8x900xf32>,
    %89 = vector.extract_strided_slice %66 {offsets = [0, 63], sizes = [8, 900], strides = [1, 1]} : vector<8x993xf32> to vector<8x900xf32>
    %c88 = arith.constant 88 : index
    %c0_84 = arith.constant 0 : index
    %90 = vector.load %arg13[%c88, %c0_84] : memref<128x900xf32, #tpu.memory_space<vmem>>, vector<8x900xf32>
    tpu.vector_store %arg13[%c88, %c0_84], %89 {strides = array<i32>} : memref<128x900xf32, #tpu.memory_space<vmem>>, vector<8x900xf32>,
    %91 = vector.extract_strided_slice %66 {offsets = [0, 90], sizes = [8, 900], strides = [1, 1]} : vector<8x993xf32> to vector<8x900xf32>
    %c96 = arith.constant 96 : index
    %c0_85 = arith.constant 0 : index
    %92 = vector.load %arg13[%c96, %c0_85] : memref<128x900xf32, #tpu.memory_space<vmem>>, vector<8x900xf32>
    tpu.vector_store %arg13[%c96, %c0_85], %91 {strides = array<i32>} : memref<128x900xf32, #tpu.memory_space<vmem>>, vector<8x900xf32>,
    %93 = vector.extract_strided_slice %66 {offsets = [0, 91], sizes = [8, 900], strides = [1, 1]} : vector<8x993xf32> to vector<8x900xf32>
    %c104 = arith.constant 104 : index
    %c0_86 = arith.constant 0 : index
    %94 = vector.load %arg13[%c104, %c0_86] : memref<128x900xf32, #tpu.memory_space<vmem>>, vector<8x900xf32>
    tpu.vector_store %arg13[%c104, %c0_86], %93 {strides = array<i32>} : memref<128x900xf32, #tpu.memory_space<vmem>>, vector<8x900xf32>,
    %95 = vector.extract_strided_slice %66 {offsets = [0, 92], sizes = [8, 900], strides = [1, 1]} : vector<8x993xf32> to vector<8x900xf32>
    %c112 = arith.constant 112 : index
    %c0_87 = arith.constant 0 : index
    %96 = vector.load %arg13[%c112, %c0_87] : memref<128x900xf32, #tpu.memory_space<vmem>>, vector<8x900xf32>
    tpu.vector_store %arg13[%c112, %c0_87], %95 {strides = array<i32>} : memref<128x900xf32, #tpu.memory_space<vmem>>, vector<8x900xf32>,
    %97 = vector.extract_strided_slice %66 {offsets = [0, 93], sizes = [8, 900], strides = [1, 1]} : vector<8x993xf32> to vector<8x900xf32>
    %c120 = arith.constant 120 : index
    %c0_88 = arith.constant 0 : index
    %98 = vector.load %arg13[%c120, %c0_88] : memref<128x900xf32, #tpu.memory_space<vmem>>, vector<8x900xf32>
    tpu.vector_store %arg13[%c120, %c0_88], %97 {strides = array<i32>} : memref<128x900xf32, #tpu.memory_space<vmem>>, vector<8x900xf32>,
    %c0_89 = arith.constant 0 : index
    %c0_90 = arith.constant 0 : index
    %99 = vector.load %arg13[%c0_89, %c0_90] : memref<128x900xf32, #tpu.memory_space<vmem>>, vector<128x900xf32>
    %c0_91 = arith.constant 0 : index
    %c0_92 = arith.constant 0 : index
    %100 = vector.load %arg8[%c0_91, %c0_92] : memref<8x128xf32, #tpu.memory_space<vmem>>, vector<8x128xf32>
    %cst_93 = arith.constant dense<0.000000e+00> : vector<8x900xf32>
    %101 = tpu.matmul %100, %99, %cst_93 {dimension_numbers = #tpu.dot_dimension_numbers<[1], [0], [0], [1], [0, 0, 1, 1], [], []>} : vector<8x128xf32>, vector<128x900xf32>, vector<8x900xf32> -> vector<8x900xf32>
    %102 = tpu.iota {dimensions = array<i32: 0>} : vector<900x49xi32>
    %c0_94 = arith.constant 0 : index
    %c0_95 = arith.constant 0 : index
    %103 = vector.load %arg3[%c0_94, %c0_95] : memref<1x49xi32, #tpu.memory_space<vmem>>, vector<1x49xi32>
    %104 = vector.broadcast %103 : vector<1x49xi32> to vector<900x49xi32>
    %105 = arith.cmpi eq, %102, %104 : vector<900x49xi32>
    %106 = arith.extui %105 : vector<900x49xi1> to vector<900x49xi32>
    %107 = arith.sitofp %106 : vector<900x49xi32> to vector<900x49xf32>
    %cst_96 = arith.constant dense<0.000000e+00> : vector<8x49xf32>
    %108 = tpu.matmul %101, %107, %cst_96 {dimension_numbers = #tpu.dot_dimension_numbers<[1], [0], [0], [1], [0, 0, 1, 1], [], []>} : vector<8x900xf32>, vector<900x49xf32>, vector<8x49xf32> -> vector<8x49xf32>
    %c0_97 = arith.constant 0 : index
    %c0_98 = arith.constant 0 : index
    %109 = vector.load %arg9[%c0_97, %c0_98] : memref<8x1xf32, #tpu.memory_space<vmem>>, vector<8x1xf32>
    %110 = vector.broadcast %109 : vector<8x1xf32> to vector<8x49xf32>
    %111 = arith.addf %108, %110 : vector<8x49xf32>
    %cst_99 = arith.constant 0.000000e+00 : f32
    %112 = vector.broadcast %cst_99 : f32 to vector<8x49xf32>
    %113 = arith.maximumf %111, %112 : vector<8x49xf32>
    %c0_100 = arith.constant 0 : index
    %c0_101 = arith.constant 0 : index
    %114 = vector.load %arg11[%c0_100, %c0_101] : memref<1x16xf32, #tpu.memory_space<vmem>>, vector<1x16xf32>
    %115 = vector.extract_strided_slice %113 {offsets = [0, 0], sizes = [1, 49], strides = [1, 1]} : vector<8x49xf32> to vector<1x49xf32>
    %c0_102 = arith.constant 0 : index
    %c0_103 = arith.constant 0 : index
    %c0_104 = arith.constant 0 : index
    %116 = vector.load %arg10[%c0_102, %c0_103, %c0_104] : memref<8x49x16xf32, #tpu.memory_space<vmem>>, vector<1x49x16xf32>
    %117 = vector.shape_cast %116 : vector<1x49x16xf32> to vector<49x16xf32>
    %cst_105 = arith.constant dense<0.000000e+00> : vector<1x16xf32>
    %118 = tpu.matmul %115, %117, %cst_105 {dimension_numbers = #tpu.dot_dimension_numbers<[1], [0], [0], [1], [0, 0, 1, 1], [], []>} : vector<1x49xf32>, vector<49x16xf32>, vector<1x16xf32> -> vector<1x16xf32>
    %119 = arith.addf %114, %118 : vector<1x16xf32>
    %120 = vector.extract_strided_slice %113 {offsets = [1, 0], sizes = [1, 49], strides = [1, 1]} : vector<8x49xf32> to vector<1x49xf32>
    %c1 = arith.constant 1 : index
    %c0_106 = arith.constant 0 : index
    %c0_107 = arith.constant 0 : index
    %121 = vector.load %arg10[%c1, %c0_106, %c0_107] : memref<8x49x16xf32, #tpu.memory_space<vmem>>, vector<1x49x16xf32>
    %122 = vector.shape_cast %121 : vector<1x49x16xf32> to vector<49x16xf32>
    %cst_108 = arith.constant dense<0.000000e+00> : vector<1x16xf32>
    %123 = tpu.matmul %120, %122, %cst_108 {dimension_numbers = #tpu.dot_dimension_numbers<[1], [0], [0], [1], [0, 0, 1, 1], [], []>} : vector<1x49xf32>, vector<49x16xf32>, vector<1x16xf32> -> vector<1x16xf32>
    %124 = arith.addf %119, %123 : vector<1x16xf32>
    %125 = vector.extract_strided_slice %113 {offsets = [2, 0], sizes = [1, 49], strides = [1, 1]} : vector<8x49xf32> to vector<1x49xf32>
    %c2 = arith.constant 2 : index
    %c0_109 = arith.constant 0 : index
    %c0_110 = arith.constant 0 : index
    %126 = vector.load %arg10[%c2, %c0_109, %c0_110] : memref<8x49x16xf32, #tpu.memory_space<vmem>>, vector<1x49x16xf32>
    %127 = vector.shape_cast %126 : vector<1x49x16xf32> to vector<49x16xf32>
    %cst_111 = arith.constant dense<0.000000e+00> : vector<1x16xf32>
    %128 = tpu.matmul %125, %127, %cst_111 {dimension_numbers = #tpu.dot_dimension_numbers<[1], [0], [0], [1], [0, 0, 1, 1], [], []>} : vector<1x49xf32>, vector<49x16xf32>, vector<1x16xf32> -> vector<1x16xf32>
    %129 = arith.addf %124, %128 : vector<1x16xf32>
    %130 = vector.extract_strided_slice %113 {offsets = [3, 0], sizes = [1, 49], strides = [1, 1]} : vector<8x49xf32> to vector<1x49xf32>
    %c3 = arith.constant 3 : index
    %c0_112 = arith.constant 0 : index
    %c0_113 = arith.constant 0 : index
    %131 = vector.load %arg10[%c3, %c0_112, %c0_113] : memref<8x49x16xf32, #tpu.memory_space<vmem>>, vector<1x49x16xf32>
    %132 = vector.shape_cast %131 : vector<1x49x16xf32> to vector<49x16xf32>
    %cst_114 = arith.constant dense<0.000000e+00> : vector<1x16xf32>
    %133 = tpu.matmul %130, %132, %cst_114 {dimension_numbers = #tpu.dot_dimension_numbers<[1], [0], [0], [1], [0, 0, 1, 1], [], []>} : vector<1x49xf32>, vector<49x16xf32>, vector<1x16xf32> -> vector<1x16xf32>
    %134 = arith.addf %129, %133 : vector<1x16xf32>
    %135 = vector.extract_strided_slice %113 {offsets = [4, 0], sizes = [1, 49], strides = [1, 1]} : vector<8x49xf32> to vector<1x49xf32>
    %c4 = arith.constant 4 : index
    %c0_115 = arith.constant 0 : index
    %c0_116 = arith.constant 0 : index
    %136 = vector.load %arg10[%c4, %c0_115, %c0_116] : memref<8x49x16xf32, #tpu.memory_space<vmem>>, vector<1x49x16xf32>
    %137 = vector.shape_cast %136 : vector<1x49x16xf32> to vector<49x16xf32>
    %cst_117 = arith.constant dense<0.000000e+00> : vector<1x16xf32>
    %138 = tpu.matmul %135, %137, %cst_117 {dimension_numbers = #tpu.dot_dimension_numbers<[1], [0], [0], [1], [0, 0, 1, 1], [], []>} : vector<1x49xf32>, vector<49x16xf32>, vector<1x16xf32> -> vector<1x16xf32>
    %139 = arith.addf %134, %138 : vector<1x16xf32>
    %140 = vector.extract_strided_slice %113 {offsets = [5, 0], sizes = [1, 49], strides = [1, 1]} : vector<8x49xf32> to vector<1x49xf32>
    %c5 = arith.constant 5 : index
    %c0_118 = arith.constant 0 : index
    %c0_119 = arith.constant 0 : index
    %141 = vector.load %arg10[%c5, %c0_118, %c0_119] : memref<8x49x16xf32, #tpu.memory_space<vmem>>, vector<1x49x16xf32>
    %142 = vector.shape_cast %141 : vector<1x49x16xf32> to vector<49x16xf32>
    %cst_120 = arith.constant dense<0.000000e+00> : vector<1x16xf32>
    %143 = tpu.matmul %140, %142, %cst_120 {dimension_numbers = #tpu.dot_dimension_numbers<[1], [0], [0], [1], [0, 0, 1, 1], [], []>} : vector<1x49xf32>, vector<49x16xf32>, vector<1x16xf32> -> vector<1x16xf32>
    %144 = arith.addf %139, %143 : vector<1x16xf32>
    %145 = vector.extract_strided_slice %113 {offsets = [6, 0], sizes = [1, 49], strides = [1, 1]} : vector<8x49xf32> to vector<1x49xf32>
    %c6 = arith.constant 6 : index
    %c0_121 = arith.constant 0 : index
    %c0_122 = arith.constant 0 : index
    %146 = vector.load %arg10[%c6, %c0_121, %c0_122] : memref<8x49x16xf32, #tpu.memory_space<vmem>>, vector<1x49x16xf32>
    %147 = vector.shape_cast %146 : vector<1x49x16xf32> to vector<49x16xf32>
    %cst_123 = arith.constant dense<0.000000e+00> : vector<1x16xf32>
    %148 = tpu.matmul %145, %147, %cst_123 {dimension_numbers = #tpu.dot_dimension_numbers<[1], [0], [0], [1], [0, 0, 1, 1], [], []>} : vector<1x49xf32>, vector<49x16xf32>, vector<1x16xf32> -> vector<1x16xf32>
    %149 = arith.addf %144, %148 : vector<1x16xf32>
    %150 = vector.extract_strided_slice %113 {offsets = [7, 0], sizes = [1, 49], strides = [1, 1]} : vector<8x49xf32> to vector<1x49xf32>
    %c7 = arith.constant 7 : index
    %c0_124 = arith.constant 0 : index
    %c0_125 = arith.constant 0 : index
    %151 = vector.load %arg10[%c7, %c0_124, %c0_125] : memref<8x49x16xf32, #tpu.memory_space<vmem>>, vector<1x49x16xf32>
    %152 = vector.shape_cast %151 : vector<1x49x16xf32> to vector<49x16xf32>
    %cst_126 = arith.constant dense<0.000000e+00> : vector<1x16xf32>
    %153 = tpu.matmul %150, %152, %cst_126 {dimension_numbers = #tpu.dot_dimension_numbers<[1], [0], [0], [1], [0, 0, 1, 1], [], []>} : vector<1x49xf32>, vector<49x16xf32>, vector<1x16xf32> -> vector<1x16xf32>
    %154 = arith.addf %149, %153 : vector<1x16xf32>
    %c0_127 = arith.constant 0 : index
    %c0_128 = arith.constant 0 : index
    %c0_129 = arith.constant 0 : index
    %155 = vector.load %arg12[%c0_127, %c0_128, %c0_129] : memref<1x1x16xf32, #tpu.memory_space<vmem>>, vector<1x1x16xf32>
    %156 = vector.shape_cast %155 : vector<1x1x16xf32> to vector<1x16xf32>
    %157 = vector.shape_cast %154 : vector<1x16xf32> to vector<1x1x16xf32>
    tpu.vector_store %arg12[%c0_127, %c0_128, %c0_129], %157 {strides = array<i32>} : memref<1x1x16xf32, #tpu.memory_space<vmem>>, vector<1x1x16xf32>,
    return
  }
  func.func @transform_0(%arg0: i32) -> (i32, i32, i32) {
    %c0_i32 = arith.constant 0 : i32
    %c0_i32_0 = arith.constant 0 : i32
    %c0_i32_1 = arith.constant 0 : i32
    return %arg0, %c0_i32, %c0_i32_0 : i32, i32, i32
  }
  func.func @transform_1(%arg0: i32) -> (i32, i32) {
    %c0_i32 = arith.constant 0 : i32
    %c0_i32_0 = arith.constant 0 : i32
    %c0_i32_1 = arith.constant 0 : i32
    return %c0_i32, %c0_i32_0 : i32, i32
  }
  func.func @transform_2(%arg0: i32) -> (i32, i32) {
    %c0_i32 = arith.constant 0 : i32
    %c0_i32_0 = arith.constant 0 : i32
    %c0_i32_1 = arith.constant 0 : i32
    return %c0_i32, %c0_i32_0 : i32, i32
  }
  func.func @transform_3(%arg0: i32) -> (i32, i32) {
    %c0_i32 = arith.constant 0 : i32
    %c0_i32_0 = arith.constant 0 : i32
    %c0_i32_1 = arith.constant 0 : i32
    return %c0_i32, %c0_i32_0 : i32, i32
  }
  func.func @transform_4(%arg0: i32) -> (i32, i32) {
    %c0_i32 = arith.constant 0 : i32
    %c0_i32_0 = arith.constant 0 : i32
    %c0_i32_1 = arith.constant 0 : i32
    return %c0_i32, %c0_i32_0 : i32, i32
  }
  func.func @transform_5(%arg0: i32) -> (i32, i32) {
    %c0_i32 = arith.constant 0 : i32
    %c0_i32_0 = arith.constant 0 : i32
    %c0_i32_1 = arith.constant 0 : i32
    return %c0_i32, %c0_i32_0 : i32, i32
  }
  func.func @transform_6(%arg0: i32) -> (i32, i32) {
    %c0_i32 = arith.constant 0 : i32
    %c0_i32_0 = arith.constant 0 : i32
    %c0_i32_1 = arith.constant 0 : i32
    return %c0_i32, %c0_i32_0 : i32, i32
  }
  func.func @transform_7(%arg0: i32) -> (i32, i32) {
    %c0_i32 = arith.constant 0 : i32
    %c0_i32_0 = arith.constant 0 : i32
    %c0_i32_1 = arith.constant 0 : i32
    return %c0_i32, %c0_i32_0 : i32, i32
  }
  func.func @transform_8(%arg0: i32) -> (i32, i32) {
    %c0_i32 = arith.constant 0 : i32
    %c0_i32_0 = arith.constant 0 : i32
    %c0_i32_1 = arith.constant 0 : i32
    return %c0_i32, %c0_i32_0 : i32, i32
  }
  func.func @transform_9(%arg0: i32) -> (i32, i32, i32) {
    %c0_i32 = arith.constant 0 : i32
    %c0_i32_0 = arith.constant 0 : i32
    %c0_i32_1 = arith.constant 0 : i32
    %c0_i32_2 = arith.constant 0 : i32
    return %c0_i32, %c0_i32_0, %c0_i32_1 : i32, i32, i32
  }
  func.func @transform_10(%arg0: i32) -> (i32, i32) {
    %c0_i32 = arith.constant 0 : i32
    %c0_i32_0 = arith.constant 0 : i32
    %c0_i32_1 = arith.constant 0 : i32
    return %c0_i32, %c0_i32_0 : i32, i32
  }
  func.func @transform_11(%arg0: i32) -> (i32, i32, i32) {
    %c0_i32 = arith.constant 0 : i32
    %c0_i32_0 = arith.constant 0 : i32
    %c0_i32_1 = arith.constant 0 : i32
    return %arg0, %c0_i32, %c0_i32_0 : i32, i32, i32
  }
}

</mosaic_0001>

<llo_original>
// kernel: obj_det_cnn_forward.1
$region0: #{obj_det_cnn_forward.1}
  #allocation0 [shape = 'u32[]', space=smem, size = 0x4, offset = 0x4, fixed_abs, tag = 'smem constant byte address 0x4 - core index']
  #allocation1 [shape = 'u32[144,128]{1,0:T(1,128)}', space=vmem, size = 0x12000, scoped, tag = 'internal scratch']
  #allocation2 [shape = 'f32[128,900]{1,0:T(8,128)}', space=vmem, size = 0x80000, scoped, tag = 'scratch operand']
  #allocation3 [shape = 'f32[8,993]{1,0:T(8,128)}', space=vmem, size = 0x8000, scoped, tag = 'scratch operand']
  %s0 = inlined_call_operand.vmem [shape: f32[2,8,993], index: 0, kind: input, shape index: {}]
  %s1 = inlined_call_operand.vmem [shape: f32[1,993], index: 1, kind: input, shape index: {}]
  %s2 = inlined_call_operand.vmem [shape: s32[1,49], index: 2, kind: input, shape index: {}]
  %s3 = inlined_call_operand.vmem [shape: f32[8,72], index: 3, kind: input, shape index: {}]
  %s4 = inlined_call_operand.vmem [shape: f32[8,1], index: 4, kind: input, shape index: {}]
  %s5 = inlined_call_operand.vmem [shape: f32[8,72], index: 5, kind: input, shape index: {}]
  %s6 = inlined_call_operand.vmem [shape: f32[8,1], index: 6, kind: input, shape index: {}]
  %s7 = inlined_call_operand.vmem [shape: f32[8,128], index: 7, kind: input, shape index: {}]
  %s8 = inlined_call_operand.vmem [shape: f32[8,1], index: 8, kind: input, shape index: {}]
  %s9 = inlined_call_operand.vmem [shape: f32[8,49,16], index: 9, kind: input, shape index: {}]
  %s10 = inlined_call_operand.vmem [shape: f32[1,16], index: 10, kind: input, shape index: {}]
  %s11 = inlined_call_operand.hbm [shape: f32[2,1,16], index: 11, kind: output, shape index: {}]
  %s12 = sld [smem:[#allocation0]]
  $region77: #{obj_det_cnn_forward.1} parent=0
    _
  %s14 = ssub.s32 1, %s12
  %s15 = scalar_select 0, %s14, %s12
  $region1: #{obj_det_cnn_forward.1} parent=0
    #allocation4 [shape = 'u8[1024]{0}', space=vmem, size = 0x400, scoped, tag = 'output window, operand 0']
    #allocation5 [shape = 's32[2]{0}', space=sflag, size = 0x8, scoped, tag = 'scoped memory for obj_det_cnn_forward.1']
    %16 = vsyncpa [#allocation5], 0
    %s17 = scalar_lea.sflag [#allocation5], 1
    %18 = vsyncpa %s17, 0
    loop: start=0, step=1, limit=4
    $region2: #{obj_det_cnn_forward.1} parent=1 // loop_pre_header
      _
    $region3: #{obj_det_cnn_forward.1} parent=1 // loop_header
      %s20 = sphi 0, %s24
      %p21 = scmp.ge.s32.totalorder %s20, 4
      %s30 = sphi 0, %s32
      %s33 = sphi 0, %s30
      %s34 = sphi 0, %s33
      %s50 = sphi 0, %s34
      %s54 = sphi 0, %s54
      %s56 = sphi 0, %s54
      %s57 = sphi 0, %s56
      %s71 = sphi 0, %s57
      %s75 = sphi 0, %s75
      %s77 = sphi 0, %s75
      %s78 = sphi 0, %s77
      %s92 = sphi 0, %s78
      %s96 = sphi 0, %s96
      %s98 = sphi 0, %s96
      %s99 = sphi 0, %s98
      %s113 = sphi 0, %s99
      %s117 = sphi 0, %s117
      %s119 = sphi 0, %s117
      %s120 = sphi 0, %s119
      %s134 = sphi 0, %s120
      %s138 = sphi 0, %s138
      %s140 = sphi 0, %s138
      %s141 = sphi 0, %s140
      %s155 = sphi 0, %s141
      %s159 = sphi 0, %s159
      %s161 = sphi 0, %s159
      %s162 = sphi 0, %s161
      %s176 = sphi 0, %s162
      %s180 = sphi 0, %s180
      %s182 = sphi 0, %s180
      %s183 = sphi 0, %s182
      %s197 = sphi 0, %s183
      %s201 = sphi 0, %s201
      %s203 = sphi 0, %s201
      %s204 = sphi 0, %s203
      %s218 = sphi 0, %s204
      %s222 = sphi 0, %s222
      %s224 = sphi 0, %s222
      %s225 = sphi 0, %s224
      %s239 = sphi 0, %s225
      %s243 = sphi 0, %s243
      %s245 = sphi 0, %s243
      %s246 = sphi 0, %s245
      %s260 = sphi 0, %s246
      %s266 = sphi 0, %s268
      %s269 = sphi 0, %s266
      %s270 = sphi 0, %s269
      %s286 = sphi 0, %s270
    $region4: #{obj_det_cnn_forward.1} parent=1 // loop_header_branch
      %23 = sbr.rel (%p21) target = $region8
    $region5: #{obj_det_cnn_forward.1} parent=1 // loop_body
      %s25 = ssub.s32 %s20, 1
      %s26 = ssub.s32 %s20, 2
      %s27 = sadd.s32 %s20, 1
      %s28 = ssub.s32 %s20, %s27
      %p29 = scmp.eq.s32.totalorder %s28, 0
      %s31 = sadd.s32 %s30, 1
      %s32 = scalar_select %p29, %s30, %s31
      %p35 = pneg %p29
      %p36 = scmp.eq.s32.totalorder %s20, 1
      %p37 = por %p35, %p36
      %p38 = scmp.ne.s32.totalorder %s30, %s33
      %p39 = scmp.eq.s32.totalorder %s20, 0
      %p40 = por %p38, %p39
      %p41 = scmp.ne.s32.totalorder %s30, %s33
      %p42 = scmp.eq.s32.totalorder %s25, 1
      %p43 = por %p41, %p42
      %p44 = scmp.ne.s32.totalorder %s33, %s34
      %p45 = scmp.eq.s32.totalorder %s25, 0
      %p46 = por %p44, %p45
      %p47 = scmp.ne.s32.totalorder %s33, %s34
      %p48 = scmp.eq.s32.totalorder %s26, 1
      %p49 = por %p47, %p48
      %p51 = scmp.ne.s32.totalorder %s34, %s50
      %p52 = scmp.eq.s32.totalorder %s26, 0
      %p53 = por %p51, %p52
      %s55 = sadd.s32 %s54, 1
      %p58 = scmp.eq.s32.totalorder %s20, 1
      %p59 = scmp.ne.s32.totalorder %s54, %s56
      %p60 = scmp.eq.s32.totalorder %s20, 0
      %p61 = por %p59, %p60
      %p62 = scmp.ne.s32.totalorder %s54, %s56
      %p63 = scmp.eq.s32.totalorder %s25, 1
      %p64 = por %p62, %p63
      %p65 = scmp.ne.s32.totalorder %s56, %s57
      %p66 = scmp.eq.s32.totalorder %s25, 0
      %p67 = por %p65, %p66
      %p68 = scmp.ne.s32.totalorder %s56, %s57
      %p69 = scmp.eq.s32.totalorder %s26, 1
      %p70 = por %p68, %p69
      %p72 = scmp.ne.s32.totalorder %s57, %s71
      %p73 = scmp.eq.s32.totalorder %s26, 0
      %p74 = por %p72, %p73
      %s76 = sadd.s32 %s75, 1
      %p79 = scmp.eq.s32.totalorder %s20, 1
      %p80 = scmp.ne.s32.totalorder %s75, %s77
      %p81 = scmp.eq.s32.totalorder %s20, 0
      %p82 = por %p80, %p81
      %p83 = scmp.ne.s32.totalorder %s75, %s77
      %p84 = scmp.eq.s32.totalorder %s25, 1
      %p85 = por %p83, %p84
      %p86 = scmp.ne.s32.totalorder %s77, %s78
      %p87 = scmp.eq.s32.totalorder %s25, 0
      %p88 = por %p86, %p87
      %p89 = scmp.ne.s32.totalorder %s77, %s78
      %p90 = scmp.eq.s32.totalorder %s26, 1
      %p91 = por %p89, %p90
      %p93 = scmp.ne.s32.totalorder %s78, %s92
      %p94 = scmp.eq.s32.totalorder %s26, 0
      %p95 = por %p93, %p94
      %s97 = sadd.s32 %s96, 1
      %p100 = scmp.eq.s32.totalorder %s20, 1
      %p101 = scmp.ne.s32.totalorder %s96, %s98
      %p102 = scmp.eq.s32.totalorder %s20, 0
      %p103 = por %p101, %p102
      %p104 = scmp.ne.s32.totalorder %s96, %s98
      %p105 = scmp.eq.s32.totalorder %s25, 1
      %p106 = por %p104, %p105
      %p107 = scmp.ne.s32.totalorder %s98, %s99
      %p108 = scmp.eq.s32.totalorder %s25, 0
      %p109 = por %p107, %p108
      %p110 = scmp.ne.s32.totalorder %s98, %s99
      %p111 = scmp.eq.s32.totalorder %s26, 1
      %p112 = por %p110, %p111
      %p114 = scmp.ne.s32.totalorder %s99, %s113
      %p115 = scmp.eq.s32.totalorder %s26, 0
      %p116 = por %p114, %p115
      %s118 = sadd.s32 %s117, 1
      %p121 = scmp.eq.s32.totalorder %s20, 1
      %p122 = scmp.ne.s32.totalorder %s117, %s119
      %p123 = scmp.eq.s32.totalorder %s20, 0
      %p124 = por %p122, %p123
      %p125 = scmp.ne.s32.totalorder %s117, %s119
      %p126 = scmp.eq.s32.totalorder %s25, 1
      %p127 = por %p125, %p126
      %p128 = scmp.ne.s32.totalorder %s119, %s120
      %p129 = scmp.eq.s32.totalorder %s25, 0
      %p130 = por %p128, %p129
      %p131 = scmp.ne.s32.totalorder %s119, %s120
      %p132 = scmp.eq.s32.totalorder %s26, 1
      %p133 = por %p131, %p132
      %p135 = scmp.ne.s32.totalorder %s120, %s134
      %p136 = scmp.eq.s32.totalorder %s26, 0
      %p137 = por %p135, %p136
      %s139 = sadd.s32 %s138, 1
      %p142 = scmp.eq.s32.totalorder %s20, 1
      %p143 = scmp.ne.s32.totalorder %s138, %s140
      %p144 = scmp.eq.s32.totalorder %s20, 0
      %p145 = por %p143, %p144
      %p146 = scmp.ne.s32.totalorder %s138, %s140
      %p147 = scmp.eq.s32.totalorder %s25, 1
      %p148 = por %p146, %p147
      %p149 = scmp.ne.s32.totalorder %s140, %s141
      %p150 = scmp.eq.s32.totalorder %s25, 0
      %p151 = por %p149, %p150
      %p152 = scmp.ne.s32.totalorder %s140, %s141
      %p153 = scmp.eq.s32.totalorder %s26, 1
      %p154 = por %p152, %p153
      %p156 = scmp.ne.s32.totalorder %s141, %s155
      %p157 = scmp.eq.s32.totalorder %s26, 0
      %p158 = por %p156, %p157
      %s160 = sadd.s32 %s159, 1
      %p163 = scmp.eq.s32.totalorder %s20, 1
      %p164 = scmp.ne.s32.totalorder %s159, %s161
      %p165 = scmp.eq.s32.totalorder %s20, 0
      %p166 = por %p164, %p165
      %p167 = scmp.ne.s32.totalorder %s159, %s161
      %p168 = scmp.eq.s32.totalorder %s25, 1
      %p169 = por %p167, %p168
      %p170 = scmp.ne.s32.totalorder %s161, %s162
      %p171 = scmp.eq.s32.totalorder %s25, 0
      %p172 = por %p170, %p171
      %p173 = scmp.ne.s32.totalorder %s161, %s162
      %p174 = scmp.eq.s32.totalorder %s26, 1
      %p175 = por %p173, %p174
      %p177 = scmp.ne.s32.totalorder %s162, %s176
      %p178 = scmp.eq.s32.totalorder %s26, 0
      %p179 = por %p177, %p178
      %s181 = sadd.s32 %s180, 1
      %p184 = scmp.eq.s32.totalorder %s20, 1
      %p185 = scmp.ne.s32.totalorder %s180, %s182
      %p186 = scmp.eq.s32.totalorder %s20, 0
      %p187 = por %p185, %p186
      %p188 = scmp.ne.s32.totalorder %s180, %s182
      %p189 = scmp.eq.s32.totalorder %s25, 1
      %p190 = por %p188, %p189
      %p191 = scmp.ne.s32.totalorder %s182, %s183
      %p192 = scmp.eq.s32.totalorder %s25, 0
      %p193 = por %p191, %p192
      %p194 = scmp.ne.s32.totalorder %s182, %s183
      %p195 = scmp.eq.s32.totalorder %s26, 1
      %p196 = por %p194, %p195
      %p198 = scmp.ne.s32.totalorder %s183, %s197
      %p199 = scmp.eq.s32.totalorder %s26, 0
      %p200 = por %p198, %p199
      %s202 = sadd.s32 %s201, 1
      %p205 = scmp.eq.s32.totalorder %s20, 1
      %p206 = scmp.ne.s32.totalorder %s201, %s203
      %p207 = scmp.eq.s32.totalorder %s20, 0
      %p208 = por %p206, %p207
      %p209 = scmp.ne.s32.totalorder %s201, %s203
      %p210 = scmp.eq.s32.totalorder %s25, 1
      %p211 = por %p209, %p210
      %p212 = scmp.ne.s32.totalorder %s203, %s204
      %p213 = scmp.eq.s32.totalorder %s25, 0
      %p214 = por %p212, %p213
      %p215 = scmp.ne.s32.totalorder %s203, %s204
      %p216 = scmp.eq.s32.totalorder %s26, 1
      %p217 = por %p215, %p216
      %p219 = scmp.ne.s32.totalorder %s204, %s218
      %p220 = scmp.eq.s32.totalorder %s26, 0
      %p221 = por %p219, %p220
      %s223 = sadd.s32 %s222, 1
      %p226 = scmp.eq.s32.totalorder %s20, 1
      %p227 = scmp.ne.s32.totalorder %s222, %s224
      %p228 = scmp.eq.s32.totalorder %s20, 0
      %p229 = por %p227, %p228
      %p230 = scmp.ne.s32.totalorder %s222, %s224
      %p231 = scmp.eq.s32.totalorder %s25, 1
      %p232 = por %p230, %p231
      %p233 = scmp.ne.s32.totalorder %s224, %s225
      %p234 = scmp.eq.s32.totalorder %s25, 0
      %p235 = por %p233, %p234
      %p236 = scmp.ne.s32.totalorder %s224, %s225
      %p237 = scmp.eq.s32.totalorder %s26, 1
      %p238 = por %p236, %p237
      %p240 = scmp.ne.s32.totalorder %s225, %s239
      %p241 = scmp.eq.s32.totalorder %s26, 0
      %p242 = por %p240, %p241
      %s244 = sadd.s32 %s243, 1
      %p247 = scmp.eq.s32.totalorder %s20, 1
      %p248 = scmp.ne.s32.totalorder %s243, %s245
      %p249 = scmp.eq.s32.totalorder %s20, 0
      %p250 = por %p248, %p249
      %p251 = scmp.ne.s32.totalorder %s243, %s245
      %p252 = scmp.eq.s32.totalorder %s25, 1
      %p253 = por %p251, %p252
      %p254 = scmp.ne.s32.totalorder %s245, %s246
      %p255 = scmp.eq.s32.totalorder %s25, 0
      %p256 = por %p254, %p255
      %p257 = scmp.ne.s32.totalorder %s245, %s246
      %p258 = scmp.eq.s32.totalorder %s26, 1
      %p259 = por %p257, %p258
      %p261 = scmp.ne.s32.totalorder %s246, %s260
      %p262 = scmp.eq.s32.totalorder %s26, 0
      %p263 = por %p261, %p262
      %s264 = ssub.s32 %s20, %s27
      %p265 = scmp.eq.s32.totalorder %s264, 0
      %s267 = sadd.s32 %s266, 1
      %s268 = scalar_select %p265, %s266, %s267
      %p271 = pneg %p265
      %p272 = scmp.eq.s32.totalorder %s20, 1
      %p273 = por %p271, %p272
      %p274 = scmp.ne.s32.totalorder %s266, %s269
      %p275 = scmp.eq.s32.totalorder %s20, 0
      %p276 = por %p274, %p275
      %p277 = scmp.ne.s32.totalorder %s266, %s269
      %p278 = scmp.eq.s32.totalorder %s25, 1
      %p279 = por %p277, %p278
      %p280 = scmp.ne.s32.totalorder %s269, %s270
      %p281 = scmp.eq.s32.totalorder %s25, 0
      %p282 = por %p280, %p281
      %p283 = scmp.ne.s32.totalorder %s269, %s270
      %p284 = scmp.eq.s32.totalorder %s26, 1
      %p285 = por %p283, %p284
      %p287 = scmp.ne.s32.totalorder %s270, %s286
      %p288 = scmp.eq.s32.totalorder %s26, 0
      %p289 = por %p287, %p288
      %p290 = scmp.le.s32.totalorder 1, %s20
      %p291 = scmp.lt.s32.totalorder %s20, 3
      %p292 = pnand %p290, %p291
      %p293 = pneg %p292
      // Predicated region
      $region9: #{obj_det_cnn_forward.1} parent=5 // pred_check
        _
      $region10: #{obj_det_cnn_forward.1} parent=5 // pred_check_branch
        %295 = sbr.rel (%p292) target = $region12
      $region11: #{obj_det_cnn_forward.1} parent=5 // pred_region
        %s296 = ssub.s32 %s20, 1
        // Predicated region
        $region13: #{obj_det_cnn_forward.1} parent=11 // pred_check
          %p297 = pneg %p67
        $region14: #{obj_det_cnn_forward.1} parent=11 // pred_check_branch
          %299 = sbr.rel (%p297) target = $region16
        $region15: #{obj_det_cnn_forward.1} parent=11 // pred_region
          _
        $region16: #{obj_det_cnn_forward.1} parent=11 // pred_fallthru
          _
        // Predicated region
        $region17: #{obj_det_cnn_forward.1} parent=11 // pred_check
          %p300 = pneg %p88
        $region18: #{obj_det_cnn_forward.1} parent=11 // pred_check_branch
          %302 = sbr.rel (%p300) target = $region20
        $region19: #{obj_det_cnn_forward.1} parent=11 // pred_region
          _
        $region20: #{obj_det_cnn_forward.1} parent=11 // pred_fallthru
          _
        // Predicated region
        $region21: #{obj_det_cnn_forward.1} parent=11 // pred_check
          %p303 = pneg %p109
        $region22: #{obj_det_cnn_forward.1} parent=11 // pred_check_branch
          %305 = sbr.rel (%p303) target = $region24
        $region23: #{obj_det_cnn_forward.1} parent=11 // pred_region
          _
        $region24: #{obj_det_cnn_forward.1} parent=11 // pred_fallthru
          _
        // Predicated region
        $region25: #{obj_det_cnn_forward.1} parent=11 // pred_check
          %p306 = pneg %p130
        $region26: #{obj_det_cnn_forward.1} parent=11 // pred_check_branch
          %308 = sbr.rel (%p306) target = $region28
        $region27: #{obj_det_cnn_forward.1} parent=11 // pred_region
          _
        $region28: #{obj_det_cnn_forward.1} parent=11 // pred_fallthru
          _
        // Predicated region
        $region29: #{obj_det_cnn_forward.1} parent=11 // pred_check
          %p309 = pneg %p151
        $region30: #{obj_det_cnn_forward.1} parent=11 // pred_check_branch
          %311 = sbr.rel (%p309) target = $region32
        $region31: #{obj_det_cnn_forward.1} parent=11 // pred_region
          _
        $region32: #{obj_det_cnn_forward.1} parent=11 // pred_fallthru
          _
        // Predicated region
        $region33: #{obj_det_cnn_forward.1} parent=11 // pred_check
          %p312 = pneg %p172
        $region34: #{obj_det_cnn_forward.1} parent=11 // pred_check_branch
          %314 = sbr.rel (%p312) target = $region36
        $region35: #{obj_det_cnn_forward.1} parent=11 // pred_region
          _
        $region36: #{obj_det_cnn_forward.1} parent=11 // pred_fallthru
          _
        // Predicated region
        $region37: #{obj_det_cnn_forward.1} parent=11 // pred_check
          %p315 = pneg %p193
        $region38: #{obj_det_cnn_forward.1} parent=11 // pred_check_branch
          %317 = sbr.rel (%p315) target = $region40
        $region39: #{obj_det_cnn_forward.1} parent=11 // pred_region
          _
        $region40: #{obj_det_cnn_forward.1} parent=11 // pred_fallthru
          _
        // Predicated region
        $region41: #{obj_det_cnn_forward.1} parent=11 // pred_check
          %p318 = pneg %p214
        $region42: #{obj_det_cnn_forward.1} parent=11 // pred_check_branch
          %320 = sbr.rel (%p318) target = $region44
        $region43: #{obj_det_cnn_forward.1} parent=11 // pred_region
          _
        $region44: #{obj_det_cnn_forward.1} parent=11 // pred_fallthru
          _
        // Predicated region
        $region45: #{obj_det_cnn_forward.1} parent=11 // pred_check
          %p321 = pneg %p235
        $region46: #{obj_det_cnn_forward.1} parent=11 // pred_check_branch
          %323 = sbr.rel (%p321) target = $region48
        $region47: #{obj_det_cnn_forward.1} parent=11 // pred_region
          _
        $region48: #{obj_det_cnn_forward.1} parent=11 // pred_fallthru
          _
        // Predicated region
        $region49: #{obj_det_cnn_forward.1} parent=11 // pred_check
          %p324 = pneg %p256
        $region50: #{obj_det_cnn_forward.1} parent=11 // pred_check_branch
          %326 = sbr.rel (%p324) target = $region52
        $region51: #{obj_det_cnn_forward.1} parent=11 // pred_region
          _
        $region52: #{obj_det_cnn_forward.1} parent=11 // pred_fallthru
          _
      $region12: #{obj_det_cnn_forward.1} parent=5 // pred_fallthru
        _
      %p327 = scmp.lt.s32.totalorder %s20, 2
      // Predicated region
      $region53: #{obj_det_cnn_forward.1} parent=5 // pred_check
        %p328 = pneg %p327
      $region54: #{obj_det_cnn_forward.1} parent=5 // pred_check_branch
        %330 = sbr.rel (%p328) target = $region56
      $region55: #{obj_det_cnn_forward.1} parent=5 // pred_region
        // Predicated region
        $region57: #{obj_det_cnn_forward.1} parent=55 // pred_check
          %p331 = pneg %p40
        $region58: #{obj_det_cnn_forward.1} parent=55 // pred_check_branch
          %333 = sbr.rel (%p331) target = $region60
        $region59: #{obj_det_cnn_forward.1} parent=55 // pred_region
          %p334 = scmp.lt.s32.totalorder %s20, 1
          %s335 = scalar_select %p334, %s20, 1
          %s336 = smul.addr %s335, 8
          %s337 = smul.addr %s336, 8
          %s338 = scalar_lea.vmem %s0, %s337
        $region60: #{obj_det_cnn_forward.1} parent=55 // pred_fallthru
          _
      $region56: #{obj_det_cnn_forward.1} parent=5 // pred_fallthru
        _
      %p339 = scmp.le.s32.totalorder 1, %s20
      %p340 = scmp.lt.s32.totalorder %s20, 3
      %p341 = pnand %p339, %p340
      %p342 = pneg %p341
      // Predicated region
      $region61: #{obj_det_cnn_forward.1} parent=5 // pred_check
        _
      $region62: #{obj_det_cnn_forward.1} parent=5 // pred_check_branch
        %344 = sbr.rel (%p341) target = $region64
      $region63: #{obj_det_cnn_forward.1} parent=5 // pred_region
        %s345 = ssub.s32 %s20, 1
        %p346 = scmp.lt.s32.totalorder %s25, 1
        %s347 = scalar_select %p346, %s25, 1
        %s348 = smul.addr %s347, 8
        %s349 = smul.addr %s348, 8
        %s350 = scalar_lea.vmem %s0, %s349
        %p351 = pneg %p46
        %p352 = pneg %p43
        %p353 = pneg %p67
        %p354 = pneg %p64
        %p355 = pneg %p88
        %p356 = pneg %p85
        %p357 = pneg %p109
        %p358 = pneg %p106
        %p359 = pneg %p130
        %p360 = pneg %p127
        %p361 = pneg %p151
        %p362 = pneg %p148
        %p363 = pneg %p172
        %p364 = pneg %p169
        %p365 = pneg %p193
        %p366 = pneg %p190
        %p367 = pneg %p214
        %p368 = pneg %p211
        %p369 = pneg %p235
        %p370 = pneg %p232
        %p371 = pneg %p256
        %p372 = pneg %p253
        %p373 = pneg %p282
        %p374 = pneg %p279
        %s375 = sand.u32 %s269, 1
        %s376 = scalar_lea.sflag [#allocation5], %s375
        %s377 = sand.u32 %s269, 1
        %s378 = scalar_lea.vmem [#allocation4], %s377
        %p379 = scmp.lt.s32.totalorder %s25, 1
        %s380 = scalar_select %p379, %s25, 1
        %s381 = smul.addr %s380, 8
        %s382 = smul.addr %s381, 8
        %s383 = scalar_lea.vmem %s0, %s382
        %v384 = vld [vmem:[%s383] sm:$0xff]
        %v385 = vld [vmem:[%s383 + $0x8] sm:$0xff]
        %v386 = vld [vmem:[%s383 + $0x10] sm:$0xff]
        %v387 = vld [vmem:[%s383 + $0x18] sm:$0xff]
        %v388 = vld [vmem:[%s383 + $0x20] sm:$0xff]
        %v389 = vld [vmem:[%s383 + $0x28] sm:$0xff]
        %v390 = vld [vmem:[%s383 + $0x30] sm:$0xff]
        %v391 = vld [vmem:[%s383 + $0x38] sm:$0xff]
        %392 = vst [vmem:[#allocation2] sm:$0xff] %v384
        %393 = vst [vmem:[#allocation2 + $0x8] sm:$0xff] %v385
        %394 = vst [vmem:[#allocation2 + $0x10] sm:$0xff] %v386
        %395 = vst [vmem:[#allocation2 + $0x18] sm:$0xff] %v387
        %396 = vst [vmem:[#allocation2 + $0x20] sm:$0xff] %v388
        %397 = vst [vmem:[#allocation2 + $0x28] sm:$0xff] %v389
        %398 = vst [vmem:[#allocation2 + $0x30] sm:$0xff] %v390
        %vm399 = vcmask 31744
        %400 = vst.msk [vmem:[#allocation2 + $0x38] sm:$0xff] %vm399, %v391
        %409 = vrot.lane.b32.xlu0 %v384, 127
        %v410 = vpop.permute.xlu0 %409
        %411 = vrot.lane.b32.xlu0 %v385, 127
        %v412 = vpop.permute.xlu0 %411
        %413 = vrot.lane.b32.xlu0 %v386, 127
        %v414 = vpop.permute.xlu0 %413
        %415 = vrot.lane.b32.xlu0 %v387, 127
        %v416 = vpop.permute.xlu0 %415
        %417 = vrot.lane.b32.xlu0 %v388, 127
        %v418 = vpop.permute.xlu0 %417
        %419 = vrot.lane.b32.xlu0 %v389, 127
        %v420 = vpop.permute.xlu0 %419
        %421 = vrot.lane.b32.xlu0 %v390, 127
        %v422 = vpop.permute.xlu0 %421
        %423 = vrot.lane.b32.xlu0 %v391, 127
        %v424 = vpop.permute.xlu0 %423
        %vm425 = vcmask 1039360
        %v426 = vsel %vm425, %v410, %v412
        %v427 = vsel %vm425, %v412, %v414
        %v428 = vsel %vm425, %v414, %v416
        %v429 = vsel %vm425, %v416, %v418
        %v430 = vsel %vm425, %v418, %v420
        %v431 = vsel %vm425, %v420, %v422
        %v432 = vsel %vm425, %v422, %v424
        %441 = vst [vmem:[#allocation2 + $0x40] sm:$0xff] %v426
        %442 = vst [vmem:[#allocation2 + $0x48] sm:$0xff] %v427
        %443 = vst [vmem:[#allocation2 + $0x50] sm:$0xff] %v428
        %444 = vst [vmem:[#allocation2 + $0x58] sm:$0xff] %v429
        %445 = vst [vmem:[#allocation2 + $0x60] sm:$0xff] %v430
        %446 = vst [vmem:[#allocation2 + $0x68] sm:$0xff] %v431
        %447 = vst [vmem:[#allocation2 + $0x70] sm:$0xff] %v432
        %448 = vst.msk [vmem:[#allocation2 + $0x78] sm:$0xff] %vm399, %v424
        %449 = vrot.lane.b32.xlu0 %v384, 126
        %v450 = vpop.permute.xlu0 %449
        %451 = vrot.lane.b32.xlu0 %v385, 126
        %v452 = vpop.permute.xlu0 %451
        %453 = vrot.lane.b32.xlu0 %v386, 126
        %v454 = vpop.permute.xlu0 %453
        %455 = vrot.lane.b32.xlu0 %v387, 126
        %v456 = vpop.permute.xlu0 %455
        %457 = vrot.lane.b32.xlu0 %v388, 126
        %v458 = vpop.permute.xlu0 %457
        %459 = vrot.lane.b32.xlu0 %v389, 126
        %v460 = vpop.permute.xlu0 %459
        %461 = vrot.lane.b32.xlu0 %v390, 126
        %v462 = vpop.permute.xlu0 %461
        %463 = vrot.lane.b32.xlu0 %v391, 126
        %v464 = vpop.permute.xlu0 %463
        %vm465 = vcmask 1031168
        %v466 = vsel %vm465, %v450, %v452
        %v467 = vsel %vm465, %v452, %v454
        %v468 = vsel %vm465, %v454, %v456
        %v469 = vsel %vm465, %v456, %v458
        %v470 = vsel %vm465, %v458, %v460
        %v471 = vsel %vm465, %v460, %v462
        %v472 = vsel %vm465, %v462, %v464
        %481 = vst [vmem:[#allocation2 + $0x80] sm:$0xff] %v466
        %482 = vst [vmem:[#allocation2 + $0x88] sm:$0xff] %v467
        %483 = vst [vmem:[#allocation2 + $0x90] sm:$0xff] %v468
        %484 = vst [vmem:[#allocation2 + $0x98] sm:$0xff] %v469
        %485 = vst [vmem:[#allocation2 + $0xa0] sm:$0xff] %v470
        %486 = vst [vmem:[#allocation2 + $0xa8] sm:$0xff] %v471
        %487 = vst [vmem:[#allocation2 + $0xb0] sm:$0xff] %v472
        %488 = vst.msk [vmem:[#allocation2 + $0xb8] sm:$0xff] %vm399, %v464
        %489 = vrot.lane.b32.xlu0 %v384, 98
        %v490 = vpop.permute.xlu0 %489
        %491 = vrot.lane.b32.xlu0 %v385, 98
        %v492 = vpop.permute.xlu0 %491
        %493 = vrot.lane.b32.xlu0 %v386, 98
        %v494 = vpop.permute.xlu0 %493
        %495 = vrot.lane.b32.xlu0 %v387, 98
        %v496 = vpop.permute.xlu0 %495
        %497 = vrot.lane.b32.xlu0 %v388, 98
        %v498 = vpop.permute.xlu0 %497
        %499 = vrot.lane.b32.xlu0 %v389, 98
        %v500 = vpop.permute.xlu0 %499
        %501 = vrot.lane.b32.xlu0 %v390, 98
        %v502 = vpop.permute.xlu0 %501
        %503 = vrot.lane.b32.xlu0 %v391, 98
        %v504 = vpop.permute.xlu0 %503
        %vm505 = vcmask 801792
        %v506 = vsel %vm505, %v490, %v492
        %v507 = vsel %vm505, %v492, %v494
        %v508 = vsel %vm505, %v494, %v496
        %v509 = vsel %vm505, %v496, %v498
        %v510 = vsel %vm505, %v498, %v500
        %v511 = vsel %vm505, %v500, %v502
        %v512 = vsel %vm505, %v502, %v504
        %521 = vst [vmem:[#allocation2 + $0xc0] sm:$0xff] %v506
        %522 = vst [vmem:[#allocation2 + $0xc8] sm:$0xff] %v507
        %523 = vst [vmem:[#allocation2 + $0xd0] sm:$0xff] %v508
        %524 = vst [vmem:[#allocation2 + $0xd8] sm:$0xff] %v509
        %525 = vst [vmem:[#allocation2 + $0xe0] sm:$0xff] %v510
        %526 = vst [vmem:[#allocation2 + $0xe8] sm:$0xff] %v511
        %527 = vst [vmem:[#allocation2 + $0xf0] sm:$0xff] %v512
        %528 = vst.msk [vmem:[#allocation2 + $0xf8] sm:$0xff] %vm399, %v504
        %529 = vrot.lane.b32.xlu0 %v384, 97
        %v530 = vpop.permute.xlu0 %529
        %531 = vrot.lane.b32.xlu0 %v385, 97
        %v532 = vpop.permute.xlu0 %531
        %533 = vrot.lane.b32.xlu0 %v386, 97
        %v534 = vpop.permute.xlu0 %533
        %535 = vrot.lane.b32.xlu0 %v387, 97
        %v536 = vpop.permute.xlu0 %535
        %537 = vrot.lane.b32.xlu0 %v388, 97
        %v538 = vpop.permute.xlu0 %537
        %539 = vrot.lane.b32.xlu0 %v389, 97
        %v540 = vpop.permute.xlu0 %539
        %541 = vrot.lane.b32.xlu0 %v390, 97
        %v542 = vpop.permute.xlu0 %541
        %543 = vrot.lane.b32.xlu0 %v391, 97
        %v544 = vpop.permute.xlu0 %543
        %vm545 = vcmask 793600
        %v546 = vsel %vm545, %v530, %v532
        %v547 = vsel %vm545, %v532, %v534
        %v548 = vsel %vm545, %v534, %v536
        %v549 = vsel %vm545, %v536, %v538
        %v550 = vsel %vm545, %v538, %v540
        %v551 = vsel %vm545, %v540, %v542
        %v552 = vsel %vm545, %v542, %v544
        %561 = vst [vmem:[#allocation2 + $0x100] sm:$0xff] %v546
        %562 = vst [vmem:[#allocation2 + $0x108] sm:$0xff] %v547
        %563 = vst [vmem:[#allocation2 + $0x110] sm:$0xff] %v548
        %564 = vst [vmem:[#allocation2 + $0x118] sm:$0xff] %v549
        %565 = vst [vmem:[#allocation2 + $0x120] sm:$0xff] %v550
        %566 = vst [vmem:[#allocation2 + $0x128] sm:$0xff] %v551
        %567 = vst [vmem:[#allocation2 + $0x130] sm:$0xff] %v552
        %568 = vst.msk [vmem:[#allocation2 + $0x138] sm:$0xff] %vm399, %v544
        %569 = vrot.lane.b32.xlu0 %v384, 96
        %v570 = vpop.permute.xlu0 %569
        %571 = vrot.lane.b32.xlu0 %v385, 96
        %v572 = vpop.permute.xlu0 %571
        %573 = vrot.lane.b32.xlu0 %v386, 96
        %v574 = vpop.permute.xlu0 %573
        %575 = vrot.lane.b32.xlu0 %v387, 96
        %v576 = vpop.permute.xlu0 %575
        %577 = vrot.lane.b32.xlu0 %v388, 96
        %v578 = vpop.permute.xlu0 %577
        %579 = vrot.lane.b32.xlu0 %v389, 96
        %v580 = vpop.permute.xlu0 %579
        %581 = vrot.lane.b32.xlu0 %v390, 96
        %v582 = vpop.permute.xlu0 %581
        %583 = vrot.lane.b32.xlu0 %v391, 96
        %v584 = vpop.permute.xlu0 %583
        %vm585 = vcmask 785408
        %v586 = vsel %vm585, %v570, %v572
        %v587 = vsel %vm585, %v572, %v574
        %v588 = vsel %vm585, %v574, %v576
        %v589 = vsel %vm585, %v576, %v578
        %v590 = vsel %vm585, %v578, %v580
        %v591 = vsel %vm585, %v580, %v582
        %v592 = vsel %vm585, %v582, %v584
        %601 = vst [vmem:[#allocation2 + $0x140] sm:$0xff] %v586
        %602 = vst [vmem:[#allocation2 + $0x148] sm:$0xff] %v587
        %603 = vst [vmem:[#allocation2 + $0x150] sm:$0xff] %v588
        %604 = vst [vmem:[#allocation2 + $0x158] sm:$0xff] %v589
        %605 = vst [vmem:[#allocation2 + $0x160] sm:$0xff] %v590
        %606 = vst [vmem:[#allocation2 + $0x168] sm:$0xff] %v591
        %607 = vst [vmem:[#allocation2 + $0x170] sm:$0xff] %v592
        %608 = vst.msk [vmem:[#allocation2 + $0x178] sm:$0xff] %vm399, %v584
        %609 = vrot.lane.b32.xlu0 %v384, 68
        %v610 = vpop.permute.xlu0 %609
        %611 = vrot.lane.b32.xlu0 %v385, 68
        %v612 = vpop.permute.xlu0 %611
        %613 = vrot.lane.b32.xlu0 %v386, 68
        %v614 = vpop.permute.xlu0 %613
        %615 = vrot.lane.b32.xlu0 %v387, 68
        %v616 = vpop.permute.xlu0 %615
        %617 = vrot.lane.b32.xlu0 %v388, 68
        %v618 = vpop.permute.xlu0 %617
        %619 = vrot.lane.b32.xlu0 %v389, 68
        %v620 = vpop.permute.xlu0 %619
        %621 = vrot.lane.b32.xlu0 %v390, 68
        %v622 = vpop.permute.xlu0 %621
        %623 = vrot.lane.b32.xlu0 %v391, 68
        %v624 = vpop.permute.xlu0 %623
        %vm625 = vcmask 556032
        %v626 = vsel %vm625, %v610, %v612
        %v627 = vsel %vm625, %v612, %v614
        %v628 = vsel %vm625, %v614, %v616
        %v629 = vsel %vm625, %v616, %v618
        %v630 = vsel %vm625, %v618, %v620
        %v631 = vsel %vm625, %v620, %v622
        %v632 = vsel %vm625, %v622, %v624
        %641 = vst [vmem:[#allocation2 + $0x180] sm:$0xff] %v626
        %642 = vst [vmem:[#allocation2 + $0x188] sm:$0xff] %v627
        %643 = vst [vmem:[#allocation2 + $0x190] sm:$0xff] %v628
        %644 = vst [vmem:[#allocation2 + $0x198] sm:$0xff] %v629
        %645 = vst [vmem:[#allocation2 + $0x1a0] sm:$0xff] %v630
        %646 = vst [vmem:[#allocation2 + $0x1a8] sm:$0xff] %v631
        %647 = vst [vmem:[#allocation2 + $0x1b0] sm:$0xff] %v632
        %648 = vst.msk [vmem:[#allocation2 + $0x1b8] sm:$0xff] %vm399, %v624
        %649 = vrot.lane.b32.xlu0 %v384, 67
        %v650 = vpop.permute.xlu0 %649
        %651 = vrot.lane.b32.xlu0 %v385, 67
        %v652 = vpop.permute.xlu0 %651
        %653 = vrot.lane.b32.xlu0 %v386, 67
        %v654 = vpop.permute.xlu0 %653
        %655 = vrot.lane.b32.xlu0 %v387, 67
        %v656 = vpop.permute.xlu0 %655
        %657 = vrot.lane.b32.xlu0 %v388, 67
        %v658 = vpop.permute.xlu0 %657
        %659 = vrot.lane.b32.xlu0 %v389, 67
        %v660 = vpop.permute.xlu0 %659
        %661 = vrot.lane.b32.xlu0 %v390, 67
        %v662 = vpop.permute.xlu0 %661
        %663 = vrot.lane.b32.xlu0 %v391, 67
        %v664 = vpop.permute.xlu0 %663
        %vm665 = vcmask 547840
        %v666 = vsel %vm665, %v650, %v652
        %v667 = vsel %vm665, %v652, %v654
        %v668 = vsel %vm665, %v654, %v656
        %v669 = vsel %vm665, %v656, %v658
        %v670 = vsel %vm665, %v658, %v660
        %v671 = vsel %vm665, %v660, %v662
        %v672 = vsel %vm665, %v662, %v664
        %681 = vst [vmem:[#allocation2 + $0x1c0] sm:$0xff] %v666
        %682 = vst [vmem:[#allocation2 + $0x1c8] sm:$0xff] %v667
        %683 = vst [vmem:[#allocation2 + $0x1d0] sm:$0xff] %v668
        %684 = vst [vmem:[#allocation2 + $0x1d8] sm:$0xff] %v669
        %685 = vst [vmem:[#allocation2 + $0x1e0] sm:$0xff] %v670
        %686 = vst [vmem:[#allocation2 + $0x1e8] sm:$0xff] %v671
        %687 = vst [vmem:[#allocation2 + $0x1f0] sm:$0xff] %v672
        %688 = vst.msk [vmem:[#allocation2 + $0x1f8] sm:$0xff] %vm399, %v664
        %689 = vrot.lane.b32.xlu0 %v384, 66
        %v690 = vpop.permute.xlu0 %689
        %691 = vrot.lane.b32.xlu0 %v385, 66
        %v692 = vpop.permute.xlu0 %691
        %693 = vrot.lane.b32.xlu0 %v386, 66
        %v694 = vpop.permute.xlu0 %693
        %695 = vrot.lane.b32.xlu0 %v387, 66
        %v696 = vpop.permute.xlu0 %695
        %697 = vrot.lane.b32.xlu0 %v388, 66
        %v698 = vpop.permute.xlu0 %697
        %699 = vrot.lane.b32.xlu0 %v389, 66
        %v700 = vpop.permute.xlu0 %699
        %701 = vrot.lane.b32.xlu0 %v390, 66
        %v702 = vpop.permute.xlu0 %701
        %703 = vrot.lane.b32.xlu0 %v391, 66
        %v704 = vpop.permute.xlu0 %703
        %vm705 = vcmask 539648
        %v706 = vsel %vm705, %v690, %v692
        %v707 = vsel %vm705, %v692, %v694
        %v708 = vsel %vm705, %v694, %v696
        %v709 = vsel %vm705, %v696, %v698
        %v710 = vsel %vm705, %v698, %v700
        %v711 = vsel %vm705, %v700, %v702
        %v712 = vsel %vm705, %v702, %v704
        %721 = vst [vmem:[#allocation2 + $0x200] sm:$0xff] %v706
        %722 = vst [vmem:[#allocation2 + $0x208] sm:$0xff] %v707
        %723 = vst [vmem:[#allocation2 + $0x210] sm:$0xff] %v708
        %724 = vst [vmem:[#allocation2 + $0x218] sm:$0xff] %v709
        %725 = vst [vmem:[#allocation2 + $0x220] sm:$0xff] %v710
        %726 = vst [vmem:[#allocation2 + $0x228] sm:$0xff] %v711
        %727 = vst [vmem:[#allocation2 + $0x230] sm:$0xff] %v712
        %728 = vst.msk [vmem:[#allocation2 + $0x238] sm:$0xff] %vm399, %v704
        %v729 = vld [vmem:[#allocation2] sm:$0xff]
        %v730 = vld [vmem:[#allocation2 + $0x8] sm:$0xff]
        %v731 = vld [vmem:[#allocation2 + $0x10] sm:$0xff]
        %v732 = vld [vmem:[#allocation2 + $0x18] sm:$0xff]
        %v733 = vld [vmem:[#allocation2 + $0x20] sm:$0xff]
        %v734 = vld [vmem:[#allocation2 + $0x28] sm:$0xff]
        %v735 = vld [vmem:[#allocation2 + $0x30] sm:$0xff]
        %v736 = vld [vmem:[#allocation2 + $0x38] sm:$0xff]
        %v737 = vld [vmem:[#allocation2 + $0x40] sm:$0xff]
        %v738 = vld [vmem:[#allocation2 + $0x48] sm:$0xff]
        %v739 = vld [vmem:[#allocation2 + $0x50] sm:$0xff]
        %v740 = vld [vmem:[#allocation2 + $0x58] sm:$0xff]
        %v741 = vld [vmem:[#allocation2 + $0x60] sm:$0xff]
        %v742 = vld [vmem:[#allocation2 + $0x68] sm:$0xff]
        %v743 = vld [vmem:[#allocation2 + $0x70] sm:$0xff]
        %v744 = vld [vmem:[#allocation2 + $0x78] sm:$0xff]
        %v745 = vld [vmem:[#allocation2 + $0x80] sm:$0xff]
        %v746 = vld [vmem:[#allocation2 + $0x88] sm:$0xff]
        %v747 = vld [vmem:[#allocation2 + $0x90] sm:$0xff]
        %v748 = vld [vmem:[#allocation2 + $0x98] sm:$0xff]
        %v749 = vld [vmem:[#allocation2 + $0xa0] sm:$0xff]
        %v750 = vld [vmem:[#allocation2 + $0xa8] sm:$0xff]
        %v751 = vld [vmem:[#allocation2 + $0xb0] sm:$0xff]
        %v752 = vld [vmem:[#allocation2 + $0xb8] sm:$0xff]
        %v753 = vld [vmem:[#allocation2 + $0xc0] sm:$0xff]
        %v754 = vld [vmem:[#allocation2 + $0xc8] sm:$0xff]
        %v755 = vld [vmem:[#allocation2 + $0xd0] sm:$0xff]
        %v756 = vld [vmem:[#allocation2 + $0xd8] sm:$0xff]
        %v757 = vld [vmem:[#allocation2 + $0xe0] sm:$0xff]
        %v758 = vld [vmem:[#allocation2 + $0xe8] sm:$0xff]
        %v759 = vld [vmem:[#allocation2 + $0xf0] sm:$0xff]
        %v760 = vld [vmem:[#allocation2 + $0xf8] sm:$0xff]
        %v761 = vld [vmem:[#allocation2 + $0x100] sm:$0xff]
        %v762 = vld [vmem:[#allocation2 + $0x108] sm:$0xff]
        %v763 = vld [vmem:[#allocation2 + $0x110] sm:$0xff]
        %v764 = vld [vmem:[#allocation2 + $0x118] sm:$0xff]
        %v765 = vld [vmem:[#allocation2 + $0x120] sm:$0xff]
        %v766 = vld [vmem:[#allocation2 + $0x128] sm:$0xff]
        %v767 = vld [vmem:[#allocation2 + $0x130] sm:$0xff]
        %v768 = vld [vmem:[#allocation2 + $0x138] sm:$0xff]
        %v769 = vld [vmem:[#allocation2 + $0x140] sm:$0xff]
        %v770 = vld [vmem:[#allocation2 + $0x148] sm:$0xff]
        %v771 = vld [vmem:[#allocation2 + $0x150] sm:$0xff]
        %v772 = vld [vmem:[#allocation2 + $0x158] sm:$0xff]
        %v773 = vld [vmem:[#allocation2 + $0x160] sm:$0xff]
        %v774 = vld [vmem:[#allocation2 + $0x168] sm:$0xff]
        %v775 = vld [vmem:[#allocation2 + $0x170] sm:$0xff]
        %v776 = vld [vmem:[#allocation2 + $0x178] sm:$0xff]
        %v777 = vld [vmem:[#allocation2 + $0x180] sm:$0xff]
        %v778 = vld [vmem:[#allocation2 + $0x188] sm:$0xff]
        %v779 = vld [vmem:[#allocation2 + $0x190] sm:$0xff]
        %v780 = vld [vmem:[#allocation2 + $0x198] sm:$0xff]
        %v781 = vld [vmem:[#allocation2 + $0x1a0] sm:$0xff]
        %v782 = vld [vmem:[#allocation2 + $0x1a8] sm:$0xff]
        %v783 = vld [vmem:[#allocation2 + $0x1b0] sm:$0xff]
        %v784 = vld [vmem:[#allocation2 + $0x1b8] sm:$0xff]
        %v785 = vld [vmem:[#allocation2 + $0x1c0] sm:$0xff]
        %v786 = vld [vmem:[#allocation2 + $0x1c8] sm:$0xff]
        %v787 = vld [vmem:[#allocation2 + $0x1d0] sm:$0xff]
        %v788 = vld [vmem:[#allocation2 + $0x1d8] sm:$0xff]
        %v789 = vld [vmem:[#allocation2 + $0x1e0] sm:$0xff]
        %v790 = vld [vmem:[#allocation2 + $0x1e8] sm:$0xff]
        %v791 = vld [vmem:[#allocation2 + $0x1f0] sm:$0xff]
        %v792 = vld [vmem:[#allocation2 + $0x1f8] sm:$0xff]
        %v793 = vld [vmem:[#allocation2 + $0x200] sm:$0xff]
        %v794 = vld [vmem:[#allocation2 + $0x208] sm:$0xff]
        %v795 = vld [vmem:[#allocation2 + $0x210] sm:$0xff]
        %v796 = vld [vmem:[#allocation2 + $0x218] sm:$0xff]
        %v797 = vld [vmem:[#allocation2 + $0x220] sm:$0xff]
        %v798 = vld [vmem:[#allocation2 + $0x228] sm:$0xff]
        %v799 = vld [vmem:[#allocation2 + $0x230] sm:$0xff]
        %v800 = vld [vmem:[#allocation2 + $0x238] sm:$0xff]
        %v801 = vld [vmem:[%s3] sm:$0xff]
        %v802 = vld [vmem:[%s4] sm:$0xff]
        %804 = vset.pattern.permute.xlu0 0
        %805 = vperm.xlu0 %804, %v802
        %v806 = vpop.permute.xlu0 %805
        %vm808 = vcmask 588800
        %v810 = vsel %vm808, %v801, 0
        %812 = vmatprep.subr.mxu0 %v730
        %813 = vmatpush1.msra.mxu0 %v729
        %814 = vmatprep.subr.mxu0 %v738
        %815 = vmatpush1.msra.mxu0 %v737
        %816 = vmatprep.subr.mxu0 %v746
        %817 = vmatpush1.msra.mxu0 %v745
        %818 = vmatprep.subr.mxu0 %v754
        %819 = vmatpush1.msra.mxu0 %v753
        %820 = vmatprep.subr.mxu0 %v762
        %821 = vmatpush1.msra.mxu0 %v761
        %822 = vmatprep.subr.mxu0 %v770
        %823 = vmatpush1.msra.mxu0 %v769
        %824 = vmatprep.subr.mxu0 %v778
        %825 = vmatpush1.msra.mxu0 %v777
        %826 = vmatprep.subr.mxu0 %v786
        %827 = vmatpush1.msra.mxu0 %v785
        %828 = vmatprep.subr.mxu0 %v794
        %829 = vmatpush1.msra.mxu0 %v793
        %830 = vmatprep.subr.mxu0 0.0
        %831 = vmatpush1.msra.mxu0 0.0
        %832 = vmatprep.subr.mxu0 0.0
        %833 = vmatpush1.msra.mxu0 0.0
        %834 = vmatprep.subr.mxu0 0.0
        %835 = vmatpush1.msra.mxu0 0.0
        %836 = vmatprep.subr.mxu0 0.0
        %837 = vmatpush1.msra.mxu0 0.0
        %838 = vmatprep.subr.mxu0 0.0
        %839 = vmatpush1.msra.mxu0 0.0
        %840 = vmatprep.subr.mxu0 0.0
        %841 = vmatpush1.msra.mxu0 0.0
        %842 = vmatprep.subr.mxu0 0.0
        %843 = vmatpush1.msra.mxu0 0.0
        %844 = vmatprep.subr.mxu0 0.0
        %845 = vmatpush1.msra.mxu0 0.0
        %846 = vmatprep.subr.mxu0 0.0
        %847 = vmatpush1.msra.mxu0 0.0
        %848 = vmatprep.subr.mxu0 0.0
        %849 = vmatpush1.msra.mxu0 0.0
        %850 = vmatprep.subr.mxu0 0.0
        %851 = vmatpush1.msra.mxu0 0.0
        %852 = vmatprep.subr.mxu0 0.0
        %853 = vmatpush1.msra.mxu0 0.0
        %854 = vmatprep.subr.mxu0 0.0
        %855 = vmatpush1.msra.mxu0 0.0
        %856 = vmatprep.subr.mxu0 0.0
        %857 = vmatpush1.msra.mxu0 0.0
        %858 = vmatprep.subr.mxu0 0.0
        %859 = vmatpush1.msra.mxu0 0.0
        %860 = vmatprep.subr.mxu0 0.0
        %861 = vmatpush1.msra.mxu0 0.0
        %862 = vmatprep.subr.mxu0 0.0
        %863 = vmatpush1.msra.mxu0 0.0
        %864 = vmatprep.subr.mxu0 0.0
        %865 = vmatpush1.msra.mxu0 0.0
        %866 = vmatprep.subr.mxu0 0.0
        %867 = vmatpush1.msra.mxu0 0.0
        %868 = vmatprep.subr.mxu0 0.0
        %869 = vmatpush1.msra.mxu0 0.0
        %870 = vmatprep.subr.mxu0 0.0
        %871 = vmatpush1.msra.mxu0 0.0
        %872 = vmatprep.subr.mxu0 0.0
        %873 = vmatpush1.msra.mxu0 0.0
        %874 = vmatprep.subr.mxu0 0.0
        %875 = vmatpush1.msra.mxu0 0.0
        %876 = vmatprep.mubr.f32.mxu0 0.0
        %877 = vmatmul.mubr.f32.gmra.mrb[0].mxu0 %v810
        %v878 = vpop.f32.mrb[0].mxu0
        %v879 = vadd.f32 %v806, %v878
        %v880 = vpop.f32.mrb[0].mxu0
        %v881 = vadd.f32 %v806, %v880
        %882 = vdwg.mxu0
        %883 = vmatprep.subr.mxu0 %v732
        %884 = vmatpush1.msra.mxu0 %v731
        %885 = vmatprep.subr.mxu0 %v740
        %886 = vmatpush1.msra.mxu0 %v739
        %887 = vmatprep.subr.mxu0 %v748
        %888 = vmatpush1.msra.mxu0 %v747
        %889 = vmatprep.subr.mxu0 %v756
        %890 = vmatpush1.msra.mxu0 %v755
        %891 = vmatprep.subr.mxu0 %v764
        %892 = vmatpush1.msra.mxu0 %v763
        %893 = vmatprep.subr.mxu0 %v772
        %894 = vmatpush1.msra.mxu0 %v771
        %895 = vmatprep.subr.mxu0 %v780
        %896 = vmatpush1.msra.mxu0 %v779
        %897 = vmatprep.subr.mxu0 %v788
        %898 = vmatpush1.msra.mxu0 %v787
        %899 = vmatprep.subr.mxu0 %v796
        %900 = vmatpush1.msra.mxu0 %v795
        %901 = vmatprep.subr.mxu0 0.0
        %902 = vmatpush1.msra.mxu0 0.0
        %903 = vmatprep.subr.mxu0 0.0
        %904 = vmatpush1.msra.mxu0 0.0
        %905 = vmatprep.subr.mxu0 0.0
        %906 = vmatpush1.msra.mxu0 0.0
        %907 = vmatprep.subr.mxu0 0.0
        %908 = vmatpush1.msra.mxu0 0.0
        %909 = vmatprep.subr.mxu0 0.0
        %910 = vmatpush1.msra.mxu0 0.0
        %911 = vmatprep.subr.mxu0 0.0
        %912 = vmatpush1.msra.mxu0 0.0
        %913 = vmatprep.subr.mxu0 0.0
        %914 = vmatpush1.msra.mxu0 0.0
        %915 = vmatprep.subr.mxu0 0.0
        %916 = vmatpush1.msra.mxu0 0.0
        %917 = vmatprep.subr.mxu0 0.0
        %918 = vmatpush1.msra.mxu0 0.0
        %919 = vmatprep.subr.mxu0 0.0
        %920 = vmatpush1.msra.mxu0 0.0
        %921 = vmatprep.subr.mxu0 0.0
        %922 = vmatpush1.msra.mxu0 0.0
        %923 = vmatprep.subr.mxu0 0.0
        %924 = vmatpush1.msra.mxu0 0.0
        %925 = vmatprep.subr.mxu0 0.0
        %926 = vmatpush1.msra.mxu0 0.0
        %927 = vmatprep.subr.mxu0 0.0
        %928 = vmatpush1.msra.mxu0 0.0
        %929 = vmatprep.subr.mxu0 0.0
        %930 = vmatpush1.msra.mxu0 0.0
        %931 = vmatprep.subr.mxu0 0.0
        %932 = vmatpush1.msra.mxu0 0.0
        %933 = vmatprep.subr.mxu0 0.0
        %934 = vmatpush1.msra.mxu0 0.0
        %935 = vmatprep.subr.mxu0 0.0
        %936 = vmatpush1.msra.mxu0 0.0
        %937 = vmatprep.subr.mxu0 0.0
        %938 = vmatpush1.msra.mxu0 0.0
        %939 = vmatprep.subr.mxu0 0.0
        %940 = vmatpush1.msra.mxu0 0.0
        %941 = vmatprep.subr.mxu0 0.0
        %942 = vmatpush1.msra.mxu0 0.0
        %943 = vmatprep.subr.mxu0 0.0
        %944 = vmatpush1.msra.mxu0 0.0
        %945 = vmatprep.subr.mxu0 0.0
        %946 = vmatpush1.msra.mxu0 0.0
        %947 = vmatprep.mubr.f32.mxu0 0.0
        %948 = vmatmul.mubr.f32.gmra.mrb[0].mxu0 %v810
        %v949 = vpop.f32.mrb[0].mxu0
        %v950 = vadd.f32 %v806, %v949
        %v951 = vpop.f32.mrb[0].mxu0
        %v952 = vadd.f32 %v806, %v951
        %953 = vdwg.mxu0
        %954 = vmatprep.subr.mxu0 %v734
        %955 = vmatpush1.msra.mxu0 %v733
        %956 = vmatprep.subr.mxu0 %v742
        %957 = vmatpush1.msra.mxu0 %v741
        %958 = vmatprep.subr.mxu0 %v750
        %959 = vmatpush1.msra.mxu0 %v749
        %960 = vmatprep.subr.mxu0 %v758
        %961 = vmatpush1.msra.mxu0 %v757
        %962 = vmatprep.subr.mxu0 %v766
        %963 = vmatpush1.msra.mxu0 %v765
        %964 = vmatprep.subr.mxu0 %v774
        %965 = vmatpush1.msra.mxu0 %v773
        %966 = vmatprep.subr.mxu0 %v782
        %967 = vmatpush1.msra.mxu0 %v781
        %968 = vmatprep.subr.mxu0 %v790
        %969 = vmatpush1.msra.mxu0 %v789
        %970 = vmatprep.subr.mxu0 %v798
        %971 = vmatpush1.msra.mxu0 %v797
        %972 = vmatprep.subr.mxu0 0.0
        %973 = vmatpush1.msra.mxu0 0.0
        %974 = vmatprep.subr.mxu0 0.0
        %975 = vmatpush1.msra.mxu0 0.0
        %976 = vmatprep.subr.mxu0 0.0
        %977 = vmatpush1.msra.mxu0 0.0
        %978 = vmatprep.subr.mxu0 0.0
        %979 = vmatpush1.msra.mxu0 0.0
        %980 = vmatprep.subr.mxu0 0.0
        %981 = vmatpush1.msra.mxu0 0.0
        %982 = vmatprep.subr.mxu0 0.0
        %983 = vmatpush1.msra.mxu0 0.0
        %984 = vmatprep.subr.mxu0 0.0
        %985 = vmatpush1.msra.mxu0 0.0
        %986 = vmatprep.subr.mxu0 0.0
        %987 = vmatpush1.msra.mxu0 0.0
        %988 = vmatprep.subr.mxu0 0.0
        %989 = vmatpush1.msra.mxu0 0.0
        %990 = vmatprep.subr.mxu0 0.0
        %991 = vmatpush1.msra.mxu0 0.0
        %992 = vmatprep.subr.mxu0 0.0
        %993 = vmatpush1.msra.mxu0 0.0
        %994 = vmatprep.subr.mxu0 0.0
        %995 = vmatpush1.msra.mxu0 0.0
        %996 = vmatprep.subr.mxu0 0.0
        %997 = vmatpush1.msra.mxu0 0.0
        %998 = vmatprep.subr.mxu0 0.0
        %999 = vmatpush1.msra.mxu0 0.0
        %1000 = vmatprep.subr.mxu0 0.0
        %1001 = vmatpush1.msra.mxu0 0.0
        %1002 = vmatprep.subr.mxu0 0.0
        %1003 = vmatpush1.msra.mxu0 0.0
        %1004 = vmatprep.subr.mxu0 0.0
        %1005 = vmatpush1.msra.mxu0 0.0
        %1006 = vmatprep.subr.mxu0 0.0
        %1007 = vmatpush1.msra.mxu0 0.0
        %1008 = vmatprep.subr.mxu0 0.0
        %1009 = vmatpush1.msra.mxu0 0.0
        %1010 = vmatprep.subr.mxu0 0.0
        %1011 = vmatpush1.msra.mxu0 0.0
        %1012 = vmatprep.subr.mxu0 0.0
        %1013 = vmatpush1.msra.mxu0 0.0
        %1014 = vmatprep.subr.mxu0 0.0
        %1015 = vmatpush1.msra.mxu0 0.0
        %1016 = vmatprep.subr.mxu0 0.0
        %1017 = vmatpush1.msra.mxu0 0.0
        %1018 = vmatprep.mubr.f32.mxu0 0.0
        %1019 = vmatmul.mubr.f32.gmra.mrb[0].mxu0 %v810
        %v1020 = vpop.f32.mrb[0].mxu0
        %v1021 = vadd.f32 %v806, %v1020
        %v1022 = vpop.f32.mrb[0].mxu0
        %v1023 = vadd.f32 %v806, %v1022
        %1024 = vdwg.mxu0
        %1025 = vmatprep.subr.mxu0 %v736
        %1026 = vmatpush1.msra.mxu0 %v735
        %1027 = vmatprep.subr.mxu0 %v744
        %1028 = vmatpush1.msra.mxu0 %v743
        %1029 = vmatprep.subr.mxu0 %v752
        %1030 = vmatpush1.msra.mxu0 %v751
        %1031 = vmatprep.subr.mxu0 %v760
        %1032 = vmatpush1.msra.mxu0 %v759
        %1033 = vmatprep.subr.mxu0 %v768
        %1034 = vmatpush1.msra.mxu0 %v767
        %1035 = vmatprep.subr.mxu0 %v776
        %1036 = vmatpush1.msra.mxu0 %v775
        %1037 = vmatprep.subr.mxu0 %v784
        %1038 = vmatpush1.msra.mxu0 %v783
        %1039 = vmatprep.subr.mxu0 %v792
        %1040 = vmatpush1.msra.mxu0 %v791
        %1041 = vmatprep.subr.mxu0 %v800
        %1042 = vmatpush1.msra.mxu0 %v799
        %1043 = vmatprep.subr.mxu0 0.0
        %1044 = vmatpush1.msra.mxu0 0.0
        %1045 = vmatprep.subr.mxu0 0.0
        %1046 = vmatpush1.msra.mxu0 0.0
        %1047 = vmatprep.subr.mxu0 0.0
        %1048 = vmatpush1.msra.mxu0 0.0
        %1049 = vmatprep.subr.mxu0 0.0
        %1050 = vmatpush1.msra.mxu0 0.0
        %1051 = vmatprep.subr.mxu0 0.0
        %1052 = vmatpush1.msra.mxu0 0.0
        %1053 = vmatprep.subr.mxu0 0.0
        %1054 = vmatpush1.msra.mxu0 0.0
        %1055 = vmatprep.subr.mxu0 0.0
        %1056 = vmatpush1.msra.mxu0 0.0
        %1057 = vmatprep.subr.mxu0 0.0
        %1058 = vmatpush1.msra.mxu0 0.0
        %1059 = vmatprep.subr.mxu0 0.0
        %1060 = vmatpush1.msra.mxu0 0.0
        %1061 = vmatprep.subr.mxu0 0.0
        %1062 = vmatpush1.msra.mxu0 0.0
        %1063 = vmatprep.subr.mxu0 0.0
        %1064 = vmatpush1.msra.mxu0 0.0
        %1065 = vmatprep.subr.mxu0 0.0
        %1066 = vmatpush1.msra.mxu0 0.0
        %1067 = vmatprep.subr.mxu0 0.0
        %1068 = vmatpush1.msra.mxu0 0.0
        %1069 = vmatprep.subr.mxu0 0.0
        %1070 = vmatpush1.msra.mxu0 0.0
        %1071 = vmatprep.subr.mxu0 0.0
        %1072 = vmatpush1.msra.mxu0 0.0
        %1073 = vmatprep.subr.mxu0 0.0
        %1074 = vmatpush1.msra.mxu0 0.0
        %1075 = vmatprep.subr.mxu0 0.0
        %1076 = vmatpush1.msra.mxu0 0.0
        %1077 = vmatprep.subr.mxu0 0.0
        %1078 = vmatpush1.msra.mxu0 0.0
        %1079 = vmatprep.subr.mxu0 0.0
        %1080 = vmatpush1.msra.mxu0 0.0
        %1081 = vmatprep.subr.mxu0 0.0
        %1082 = vmatpush1.msra.mxu0 0.0
        %1083 = vmatprep.subr.mxu0 0.0
        %1084 = vmatpush1.msra.mxu0 0.0
        %1085 = vmatprep.subr.mxu0 0.0
        %1086 = vmatpush1.msra.mxu0 0.0
        %1087 = vmatprep.subr.mxu0 0.0
        %1088 = vmatpush1.msra.mxu0 0.0
        %1089 = vmatprep.mubr.f32.mxu0 0.0
        %1090 = vmatmul.mubr.f32.gmra.mrb[0].mxu0 %v810
        %v1091 = vpop.f32.mrb[0].mxu0
        %v1092 = vadd.f32 %v806, %v1091
        %v1093 = vpop.f32.mrb[0].mxu0
        %v1094 = vadd.f32 %v806, %v1093
        %1095 = vdwg.mxu0
        %v1096 = vmax.f32 %v879, 0.0
        %v1097 = vmax.f32 %v881, 0.0
        %v1098 = vmax.f32 %v950, 0.0
        %v1099 = vmax.f32 %v952, 0.0
        %v1100 = vmax.f32 %v1021, 0.0
        %v1101 = vmax.f32 %v1023, 0.0
        %v1102 = vmax.f32 %v1092, 0.0
        %v1103 = vmax.f32 %v1094, 0.0
        %1104 = vst [vmem:[#allocation3] sm:$0xff] 0.0
        %1105 = vst [vmem:[#allocation3 + $0x8] sm:$0xff] 0.0
        %1106 = vst [vmem:[#allocation3 + $0x10] sm:$0xff] 0.0
        %1107 = vst [vmem:[#allocation3 + $0x18] sm:$0xff] 0.0
        %1108 = vst [vmem:[#allocation3 + $0x20] sm:$0xff] 0.0
        %1109 = vst [vmem:[#allocation3 + $0x28] sm:$0xff] 0.0
        %1110 = vst [vmem:[#allocation3 + $0x30] sm:$0xff] 0.0
        %1111 = vst.msk [vmem:[#allocation3 + $0x38] sm:$0xff] %vm545, 0.0
        %1120 = vrot.lane.b32.xlu0 %v1096, 31
        %v1121 = vpop.permute.xlu0 %1120
        %1122 = vrot.lane.b32.xlu0 %v1097, 31
        %v1123 = vpop.permute.xlu0 %1122
        %1124 = vrot.lane.b32.xlu0 %v1098, 31
        %v1125 = vpop.permute.xlu0 %1124
        %1126 = vrot.lane.b32.xlu0 %v1099, 31
        %v1127 = vpop.permute.xlu0 %1126
        %1128 = vrot.lane.b32.xlu0 %v1100, 31
        %v1129 = vpop.permute.xlu0 %1128
        %1130 = vrot.lane.b32.xlu0 %v1101, 31
        %v1131 = vpop.permute.xlu0 %1130
        %1132 = vrot.lane.b32.xlu0 %v1102, 31
        %v1133 = vpop.permute.xlu0 %1132
        %1134 = vrot.lane.b32.xlu0 %v1103, 31
        %v1135 = vpop.permute.xlu0 %1134
        %vm1136 = vcmask 252928
        %v1137 = vsel %vm1136, %v1121, %v1123
        %v1138 = vsel %vm1136, %v1123, %v1125
        %v1139 = vsel %vm1136, %v1125, %v1127
        %v1140 = vsel %vm1136, %v1127, %v1129
        %v1141 = vsel %vm1136, %v1129, %v1131
        %v1142 = vsel %vm1136, %v1131, %v1133
        %v1143 = vsel %vm1136, %v1133, %v1135
        %vm1152 = vcmask 1047800
        %1153 = vst.msk [vmem:[#allocation3] sm:$0xff] %vm1152, %v1121
        %1154 = vst [vmem:[#allocation3 + $0x8] sm:$0xff] %v1137
        %1155 = vst [vmem:[#allocation3 + $0x10] sm:$0xff] %v1138
        %1156 = vst [vmem:[#allocation3 + $0x18] sm:$0xff] %v1139
        %1157 = vst [vmem:[#allocation3 + $0x20] sm:$0xff] %v1140
        %1158 = vst [vmem:[#allocation3 + $0x28] sm:$0xff] %v1141
        %1159 = vst [vmem:[#allocation3 + $0x30] sm:$0xff] %v1142
        %vm1160 = vcmask 285696
        %1161 = vst.msk [vmem:[#allocation3 + $0x38] sm:$0xff] %vm1160, %v1143
        %v1162 = vld [vmem:[#allocation3] sm:$0xff]
        %v1163 = vld [vmem:[#allocation3 + $0x8] sm:$0xff]
        %v1164 = vld [vmem:[#allocation3 + $0x10] sm:$0xff]
        %v1165 = vld [vmem:[#allocation3 + $0x18] sm:$0xff]
        %v1166 = vld [vmem:[#allocation3 + $0x20] sm:$0xff]
        %v1167 = vld [vmem:[#allocation3 + $0x28] sm:$0xff]
        %v1168 = vld [vmem:[#allocation3 + $0x30] sm:$0xff]
        %v1169 = vld [vmem:[#allocation3 + $0x38] sm:$0xff]
        %v1170 = vld [vmem:[%s1] sm:$0xff]
        %v1172 = vlaneseq
        %v1173 = vshrl.u32 %v1172, 7
        %v1174 = vsub.s32 0, %v1173
        %v1175 = vrot.slane %v1170, %v1174
        %v1176 = vlaneseq
        %v1177 = vshrl.u32 %v1176, 7
        %v1178 = vsub.s32 1, %v1177
        %v1179 = vrot.slane %v1170, %v1178
        %v1180 = vlaneseq
        %v1181 = vshrl.u32 %v1180, 7
        %v1182 = vsub.s32 2, %v1181
        %v1183 = vrot.slane %v1170, %v1182
        %v1184 = vlaneseq
        %v1185 = vshrl.u32 %v1184, 7
        %v1186 = vsub.s32 3, %v1185
        %v1187 = vrot.slane %v1170, %v1186
        %v1188 = vlaneseq
        %v1189 = vshrl.u32 %v1188, 7
        %v1190 = vsub.s32 4, %v1189
        %v1191 = vrot.slane %v1170, %v1190
        %v1192 = vlaneseq
        %v1193 = vshrl.u32 %v1192, 7
        %v1194 = vsub.s32 5, %v1193
        %v1195 = vrot.slane %v1170, %v1194
        %v1196 = vlaneseq
        %v1197 = vshrl.u32 %v1196, 7
        %v1198 = vsub.s32 6, %v1197
        %v1199 = vrot.slane %v1170, %v1198
        %v1200 = vlaneseq
        %v1201 = vshrl.u32 %v1200, 7
        %v1202 = vsub.s32 7, %v1201
        %v1203 = vrot.slane %v1170, %v1202
        %v1212 = vmul.f32 %v1162, %v1175
        %v1213 = vmul.f32 %v1163, %v1179
        %v1214 = vmul.f32 %v1164, %v1183
        %v1215 = vmul.f32 %v1165, %v1187
        %v1216 = vmul.f32 %v1166, %v1191
        %v1217 = vmul.f32 %v1167, %v1195
        %v1218 = vmul.f32 %v1168, %v1199
        %v1219 = vmul.f32 %v1169, %v1203
        %1220 = vst [vmem:[#allocation3] sm:$0xff] %v1212
        %1221 = vst [vmem:[#allocation3 + $0x8] sm:$0xff] %v1213
        %1222 = vst [vmem:[#allocation3 + $0x10] sm:$0xff] %v1214
        %1223 = vst [vmem:[#allocation3 + $0x18] sm:$0xff] %v1215
        %1224 = vst [vmem:[#allocation3 + $0x20] sm:$0xff] %v1216
        %1225 = vst [vmem:[#allocation3 + $0x28] sm:$0xff] %v1217
        %1226 = vst [vmem:[#allocation3 + $0x30] sm:$0xff] %v1218
        %1227 = vst.msk [vmem:[#allocation3 + $0x38] sm:$0xff] %vm545, %v1219
        %v1228 = vld [vmem:[#allocation3] sm:$0xff]
        %v1229 = vld [vmem:[#allocation3 + $0x8] sm:$0xff]
        %v1230 = vld [vmem:[#allocation3 + $0x10] sm:$0xff]
        %v1231 = vld [vmem:[#allocation3 + $0x18] sm:$0xff]
        %v1232 = vld [vmem:[#allocation3 + $0x20] sm:$0xff]
        %v1233 = vld [vmem:[#allocation3 + $0x28] sm:$0xff]
        %v1234 = vld [vmem:[#allocation3 + $0x30] sm:$0xff]
        %v1235 = vld [vmem:[#allocation3 + $0x38] sm:$0xff]
        %1236 = vst [vmem:[#allocation2] sm:$0xff] %v1228
        %1237 = vst [vmem:[#allocation2 + $0x8] sm:$0xff] %v1229
        %1238 = vst [vmem:[#allocation2 + $0x10] sm:$0xff] %v1230
        %1239 = vst [vmem:[#allocation2 + $0x18] sm:$0xff] %v1231
        %1240 = vst [vmem:[#allocation2 + $0x20] sm:$0xff] %v1232
        %1241 = vst [vmem:[#allocation2 + $0x28] sm:$0xff] %v1233
        %1242 = vst [vmem:[#allocation2 + $0x30] sm:$0xff] %v1234
        %1243 = vst.msk [vmem:[#allocation2 + $0x38] sm:$0xff] %vm399, %v1235
        %1252 = vrot.lane.b32.xlu0 %v1228, 127
        %v1253 = vpop.permute.xlu0 %1252
        %1254 = vrot.lane.b32.xlu0 %v1229, 127
        %v1255 = vpop.permute.xlu0 %1254
        %1256 = vrot.lane.b32.xlu0 %v1230, 127
        %v1257 = vpop.permute.xlu0 %1256
        %1258 = vrot.lane.b32.xlu0 %v1231, 127
        %v1259 = vpop.permute.xlu0 %1258
        %1260 = vrot.lane.b32.xlu0 %v1232, 127
        %v1261 = vpop.permute.xlu0 %1260
        %1262 = vrot.lane.b32.xlu0 %v1233, 127
        %v1263 = vpop.permute.xlu0 %1262
        %1264 = vrot.lane.b32.xlu0 %v1234, 127
        %v1265 = vpop.permute.xlu0 %1264
        %1266 = vrot.lane.b32.xlu0 %v1235, 127
        %v1267 = vpop.permute.xlu0 %1266
        %v1268 = vsel %vm425, %v1253, %v1255
        %v1269 = vsel %vm425, %v1255, %v1257
        %v1270 = vsel %vm425, %v1257, %v1259
        %v1271 = vsel %vm425, %v1259, %v1261
        %v1272 = vsel %vm425, %v1261, %v1263
        %v1273 = vsel %vm425, %v1263, %v1265
        %v1274 = vsel %vm425, %v1265, %v1267
        %1283 = vst [vmem:[#allocation2 + $0x40] sm:$0xff] %v1268
        %1284 = vst [vmem:[#allocation2 + $0x48] sm:$0xff] %v1269
        %1285 = vst [vmem:[#allocation2 + $0x50] sm:$0xff] %v1270
        %1286 = vst [vmem:[#allocation2 + $0x58] sm:$0xff] %v1271
        %1287 = vst [vmem:[#allocation2 + $0x60] sm:$0xff] %v1272
        %1288 = vst [vmem:[#allocation2 + $0x68] sm:$0xff] %v1273
        %1289 = vst [vmem:[#allocation2 + $0x70] sm:$0xff] %v1274
        %1290 = vst.msk [vmem:[#allocation2 + $0x78] sm:$0xff] %vm399, %v1267
        %1291 = vrot.lane.b32.xlu0 %v1228, 126
        %v1292 = vpop.permute.xlu0 %1291
        %1293 = vrot.lane.b32.xlu0 %v1229, 126
        %v1294 = vpop.permute.xlu0 %1293
        %1295 = vrot.lane.b32.xlu0 %v1230, 126
        %v1296 = vpop.permute.xlu0 %1295
        %1297 = vrot.lane.b32.xlu0 %v1231, 126
        %v1298 = vpop.permute.xlu0 %1297
        %1299 = vrot.lane.b32.xlu0 %v1232, 126
        %v1300 = vpop.permute.xlu0 %1299
        %1301 = vrot.lane.b32.xlu0 %v1233, 126
        %v1302 = vpop.permute.xlu0 %1301
        %1303 = vrot.lane.b32.xlu0 %v1234, 126
        %v1304 = vpop.permute.xlu0 %1303
        %1305 = vrot.lane.b32.xlu0 %v1235, 126
        %v1306 = vpop.permute.xlu0 %1305
        %v1307 = vsel %vm465, %v1292, %v1294
        %v1308 = vsel %vm465, %v1294, %v1296
        %v1309 = vsel %vm465, %v1296, %v1298
        %v1310 = vsel %vm465, %v1298, %v1300
        %v1311 = vsel %vm465, %v1300, %v1302
        %v1312 = vsel %vm465, %v1302, %v1304
        %v1313 = vsel %vm465, %v1304, %v1306
        %1322 = vst [vmem:[#allocation2 + $0x80] sm:$0xff] %v1307
        %1323 = vst [vmem:[#allocation2 + $0x88] sm:$0xff] %v1308
        %1324 = vst [vmem:[#allocation2 + $0x90] sm:$0xff] %v1309
        %1325 = vst [vmem:[#allocation2 + $0x98] sm:$0xff] %v1310
        %1326 = vst [vmem:[#allocation2 + $0xa0] sm:$0xff] %v1311
        %1327 = vst [vmem:[#allocation2 + $0xa8] sm:$0xff] %v1312
        %1328 = vst [vmem:[#allocation2 + $0xb0] sm:$0xff] %v1313
        %1329 = vst.msk [vmem:[#allocation2 + $0xb8] sm:$0xff] %vm399, %v1306
        %1330 = vrot.lane.b32.xlu0 %v1228, 98
        %v1331 = vpop.permute.xlu0 %1330
        %1332 = vrot.lane.b32.xlu0 %v1229, 98
        %v1333 = vpop.permute.xlu0 %1332
        %1334 = vrot.lane.b32.xlu0 %v1230, 98
        %v1335 = vpop.permute.xlu0 %1334
        %1336 = vrot.lane.b32.xlu0 %v1231, 98
        %v1337 = vpop.permute.xlu0 %1336
        %1338 = vrot.lane.b32.xlu0 %v1232, 98
        %v1339 = vpop.permute.xlu0 %1338
        %1340 = vrot.lane.b32.xlu0 %v1233, 98
        %v1341 = vpop.permute.xlu0 %1340
        %1342 = vrot.lane.b32.xlu0 %v1234, 98
        %v1343 = vpop.permute.xlu0 %1342
        %1344 = vrot.lane.b32.xlu0 %v1235, 98
        %v1345 = vpop.permute.xlu0 %1344
        %v1346 = vsel %vm505, %v1331, %v1333
        %v1347 = vsel %vm505, %v1333, %v1335
        %v1348 = vsel %vm505, %v1335, %v1337
        %v1349 = vsel %vm505, %v1337, %v1339
        %v1350 = vsel %vm505, %v1339, %v1341
        %v1351 = vsel %vm505, %v1341, %v1343
        %v1352 = vsel %vm505, %v1343, %v1345
        %1361 = vst [vmem:[#allocation2 + $0xc0] sm:$0xff] %v1346
        %1362 = vst [vmem:[#allocation2 + $0xc8] sm:$0xff] %v1347
        %1363 = vst [vmem:[#allocation2 + $0xd0] sm:$0xff] %v1348
        %1364 = vst [vmem:[#allocation2 + $0xd8] sm:$0xff] %v1349
        %1365 = vst [vmem:[#allocation2 + $0xe0] sm:$0xff] %v1350
        %1366 = vst [vmem:[#allocation2 + $0xe8] sm:$0xff] %v1351
        %1367 = vst [vmem:[#allocation2 + $0xf0] sm:$0xff] %v1352
        %1368 = vst.msk [vmem:[#allocation2 + $0xf8] sm:$0xff] %vm399, %v1345
        %1369 = vrot.lane.b32.xlu0 %v1228, 97
        %v1370 = vpop.permute.xlu0 %1369
        %1371 = vrot.lane.b32.xlu0 %v1229, 97
        %v1372 = vpop.permute.xlu0 %1371
        %1373 = vrot.lane.b32.xlu0 %v1230, 97
        %v1374 = vpop.permute.xlu0 %1373
        %1375 = vrot.lane.b32.xlu0 %v1231, 97
        %v1376 = vpop.permute.xlu0 %1375
        %1377 = vrot.lane.b32.xlu0 %v1232, 97
        %v1378 = vpop.permute.xlu0 %1377
        %1379 = vrot.lane.b32.xlu0 %v1233, 97
        %v1380 = vpop.permute.xlu0 %1379
        %1381 = vrot.lane.b32.xlu0 %v1234, 97
        %v1382 = vpop.permute.xlu0 %1381
        %1383 = vrot.lane.b32.xlu0 %v1235, 97
        %v1384 = vpop.permute.xlu0 %1383
        %v1385 = vsel %vm545, %v1370, %v1372
        %v1386 = vsel %vm545, %v1372, %v1374
        %v1387 = vsel %vm545, %v1374, %v1376
        %v1388 = vsel %vm545, %v1376, %v1378
        %v1389 = vsel %vm545, %v1378, %v1380
        %v1390 = vsel %vm545, %v1380, %v1382
        %v1391 = vsel %vm545, %v1382, %v1384
        %1400 = vst [vmem:[#allocation2 + $0x100] sm:$0xff] %v1385
        %1401 = vst [vmem:[#allocation2 + $0x108] sm:$0xff] %v1386
        %1402 = vst [vmem:[#allocation2 + $0x110] sm:$0xff] %v1387
        %1403 = vst [vmem:[#allocation2 + $0x118] sm:$0xff] %v1388
        %1404 = vst [vmem:[#allocation2 + $0x120] sm:$0xff] %v1389
        %1405 = vst [vmem:[#allocation2 + $0x128] sm:$0xff] %v1390
        %1406 = vst [vmem:[#allocation2 + $0x130] sm:$0xff] %v1391
        %1407 = vst.msk [vmem:[#allocation2 + $0x138] sm:$0xff] %vm399, %v1384
        %1408 = vrot.lane.b32.xlu0 %v1228, 96
        %v1409 = vpop.permute.xlu0 %1408
        %1410 = vrot.lane.b32.xlu0 %v1229, 96
        %v1411 = vpop.permute.xlu0 %1410
        %1412 = vrot.lane.b32.xlu0 %v1230, 96
        %v1413 = vpop.permute.xlu0 %1412
        %1414 = vrot.lane.b32.xlu0 %v1231, 96
        %v1415 = vpop.permute.xlu0 %1414
        %1416 = vrot.lane.b32.xlu0 %v1232, 96
        %v1417 = vpop.permute.xlu0 %1416
        %1418 = vrot.lane.b32.xlu0 %v1233, 96
        %v1419 = vpop.permute.xlu0 %1418
        %1420 = vrot.lane.b32.xlu0 %v1234, 96
        %v1421 = vpop.permute.xlu0 %1420
        %1422 = vrot.lane.b32.xlu0 %v1235, 96
        %v1423 = vpop.permute.xlu0 %1422
        %v1424 = vsel %vm585, %v1409, %v1411
        %v1425 = vsel %vm585, %v1411, %v1413
        %v1426 = vsel %vm585, %v1413, %v1415
        %v1427 = vsel %vm585, %v1415, %v1417
        %v1428 = vsel %vm585, %v1417, %v1419
        %v1429 = vsel %vm585, %v1419, %v1421
        %v1430 = vsel %vm585, %v1421, %v1423
        %1439 = vst [vmem:[#allocation2 + $0x140] sm:$0xff] %v1424
        %1440 = vst [vmem:[#allocation2 + $0x148] sm:$0xff] %v1425
        %1441 = vst [vmem:[#allocation2 + $0x150] sm:$0xff] %v1426
        %1442 = vst [vmem:[#allocation2 + $0x158] sm:$0xff] %v1427
        %1443 = vst [vmem:[#allocation2 + $0x160] sm:$0xff] %v1428
        %1444 = vst [vmem:[#allocation2 + $0x168] sm:$0xff] %v1429
        %1445 = vst [vmem:[#allocation2 + $0x170] sm:$0xff] %v1430
        %1446 = vst.msk [vmem:[#allocation2 + $0x178] sm:$0xff] %vm399, %v1423
        %1447 = vrot.lane.b32.xlu0 %v1228, 68
        %v1448 = vpop.permute.xlu0 %1447
        %1449 = vrot.lane.b32.xlu0 %v1229, 68
        %v1450 = vpop.permute.xlu0 %1449
        %1451 = vrot.lane.b32.xlu0 %v1230, 68
        %v1452 = vpop.permute.xlu0 %1451
        %1453 = vrot.lane.b32.xlu0 %v1231, 68
        %v1454 = vpop.permute.xlu0 %1453
        %1455 = vrot.lane.b32.xlu0 %v1232, 68
        %v1456 = vpop.permute.xlu0 %1455
        %1457 = vrot.lane.b32.xlu0 %v1233, 68
        %v1458 = vpop.permute.xlu0 %1457
        %1459 = vrot.lane.b32.xlu0 %v1234, 68
        %v1460 = vpop.permute.xlu0 %1459
        %1461 = vrot.lane.b32.xlu0 %v1235, 68
        %v1462 = vpop.permute.xlu0 %1461
        %v1463 = vsel %vm625, %v1448, %v1450
        %v1464 = vsel %vm625, %v1450, %v1452
        %v1465 = vsel %vm625, %v1452, %v1454
        %v1466 = vsel %vm625, %v1454, %v1456
        %v1467 = vsel %vm625, %v1456, %v1458
        %v1468 = vsel %vm625, %v1458, %v1460
        %v1469 = vsel %vm625, %v1460, %v1462
        %1478 = vst [vmem:[#allocation2 + $0x180] sm:$0xff] %v1463
        %1479 = vst [vmem:[#allocation2 + $0x188] sm:$0xff] %v1464
        %1480 = vst [vmem:[#allocation2 + $0x190] sm:$0xff] %v1465
        %1481 = vst [vmem:[#allocation2 + $0x198] sm:$0xff] %v1466
        %1482 = vst [vmem:[#allocation2 + $0x1a0] sm:$0xff] %v1467
        %1483 = vst [vmem:[#allocation2 + $0x1a8] sm:$0xff] %v1468
        %1484 = vst [vmem:[#allocation2 + $0x1b0] sm:$0xff] %v1469
        %1485 = vst.msk [vmem:[#allocation2 + $0x1b8] sm:$0xff] %vm399, %v1462
        %1486 = vrot.lane.b32.xlu0 %v1228, 67
        %v1487 = vpop.permute.xlu0 %1486
        %1488 = vrot.lane.b32.xlu0 %v1229, 67
        %v1489 = vpop.permute.xlu0 %1488
        %1490 = vrot.lane.b32.xlu0 %v1230, 67
        %v1491 = vpop.permute.xlu0 %1490
        %1492 = vrot.lane.b32.xlu0 %v1231, 67
        %v1493 = vpop.permute.xlu0 %1492
        %1494 = vrot.lane.b32.xlu0 %v1232, 67
        %v1495 = vpop.permute.xlu0 %1494
        %1496 = vrot.lane.b32.xlu0 %v1233, 67
        %v1497 = vpop.permute.xlu0 %1496
        %1498 = vrot.lane.b32.xlu0 %v1234, 67
        %v1499 = vpop.permute.xlu0 %1498
        %1500 = vrot.lane.b32.xlu0 %v1235, 67
        %v1501 = vpop.permute.xlu0 %1500
        %v1502 = vsel %vm665, %v1487, %v1489
        %v1503 = vsel %vm665, %v1489, %v1491
        %v1504 = vsel %vm665, %v1491, %v1493
        %v1505 = vsel %vm665, %v1493, %v1495
        %v1506 = vsel %vm665, %v1495, %v1497
        %v1507 = vsel %vm665, %v1497, %v1499
        %v1508 = vsel %vm665, %v1499, %v1501
        %1517 = vst [vmem:[#allocation2 + $0x1c0] sm:$0xff] %v1502
        %1518 = vst [vmem:[#allocation2 + $0x1c8] sm:$0xff] %v1503
        %1519 = vst [vmem:[#allocation2 + $0x1d0] sm:$0xff] %v1504
        %1520 = vst [vmem:[#allocation2 + $0x1d8] sm:$0xff] %v1505
        %1521 = vst [vmem:[#allocation2 + $0x1e0] sm:$0xff] %v1506
        %1522 = vst [vmem:[#allocation2 + $0x1e8] sm:$0xff] %v1507
        %1523 = vst [vmem:[#allocation2 + $0x1f0] sm:$0xff] %v1508
        %1524 = vst.msk [vmem:[#allocation2 + $0x1f8] sm:$0xff] %vm399, %v1501
        %1525 = vrot.lane.b32.xlu0 %v1228, 66
        %v1526 = vpop.permute.xlu0 %1525
        %1527 = vrot.lane.b32.xlu0 %v1229, 66
        %v1528 = vpop.permute.xlu0 %1527
        %1529 = vrot.lane.b32.xlu0 %v1230, 66
        %v1530 = vpop.permute.xlu0 %1529
        %1531 = vrot.lane.b32.xlu0 %v1231, 66
        %v1532 = vpop.permute.xlu0 %1531
        %1533 = vrot.lane.b32.xlu0 %v1232, 66
        %v1534 = vpop.permute.xlu0 %1533
        %1535 = vrot.lane.b32.xlu0 %v1233, 66
        %v1536 = vpop.permute.xlu0 %1535
        %1537 = vrot.lane.b32.xlu0 %v1234, 66
        %v1538 = vpop.permute.xlu0 %1537
        %1539 = vrot.lane.b32.xlu0 %v1235, 66
        %v1540 = vpop.permute.xlu0 %1539
        %v1541 = vsel %vm705, %v1526, %v1528
        %v1542 = vsel %vm705, %v1528, %v1530
        %v1543 = vsel %vm705, %v1530, %v1532
        %v1544 = vsel %vm705, %v1532, %v1534
        %v1545 = vsel %vm705, %v1534, %v1536
        %v1546 = vsel %vm705, %v1536, %v1538
        %v1547 = vsel %vm705, %v1538, %v1540
        %1556 = vst [vmem:[#allocation2 + $0x200] sm:$0xff] %v1541
        %1557 = vst [vmem:[#allocation2 + $0x208] sm:$0xff] %v1542
        %1558 = vst [vmem:[#allocation2 + $0x210] sm:$0xff] %v1543
        %1559 = vst [vmem:[#allocation2 + $0x218] sm:$0xff] %v1544
        %1560 = vst [vmem:[#allocation2 + $0x220] sm:$0xff] %v1545
        %1561 = vst [vmem:[#allocation2 + $0x228] sm:$0xff] %v1546
        %1562 = vst [vmem:[#allocation2 + $0x230] sm:$0xff] %v1547
        %1563 = vst.msk [vmem:[#allocation2 + $0x238] sm:$0xff] %vm399, %v1540
        %v1564 = vld [vmem:[#allocation2] sm:$0xff]
        %v1565 = vld [vmem:[#allocation2 + $0x8] sm:$0xff]
        %v1566 = vld [vmem:[#allocation2 + $0x10] sm:$0xff]
        %v1567 = vld [vmem:[#allocation2 + $0x18] sm:$0xff]
        %v1568 = vld [vmem:[#allocation2 + $0x20] sm:$0xff]
        %v1569 = vld [vmem:[#allocation2 + $0x28] sm:$0xff]
        %v1570 = vld [vmem:[#allocation2 + $0x30] sm:$0xff]
        %v1571 = vld [vmem:[#allocation2 + $0x38] sm:$0xff]
        %v1572 = vld [vmem:[#allocation2 + $0x40] sm:$0xff]
        %v1573 = vld [vmem:[#allocation2 + $0x48] sm:$0xff]
        %v1574 = vld [vmem:[#allocation2 + $0x50] sm:$0xff]
        %v1575 = vld [vmem:[#allocation2 + $0x58] sm:$0xff]
        %v1576 = vld [vmem:[#allocation2 + $0x60] sm:$0xff]
        %v1577 = vld [vmem:[#allocation2 + $0x68] sm:$0xff]
        %v1578 = vld [vmem:[#allocation2 + $0x70] sm:$0xff]
        %v1579 = vld [vmem:[#allocation2 + $0x78] sm:$0xff]
        %v1580 = vld [vmem:[#allocation2 + $0x80] sm:$0xff]
        %v1581 = vld [vmem:[#allocation2 + $0x88] sm:$0xff]
        %v1582 = vld [vmem:[#allocation2 + $0x90] sm:$0xff]
        %v1583 = vld [vmem:[#allocation2 + $0x98] sm:$0xff]
        %v1584 = vld [vmem:[#allocation2 + $0xa0] sm:$0xff]
        %v1585 = vld [vmem:[#allocation2 + $0xa8] sm:$0xff]
        %v1586 = vld [vmem:[#allocation2 + $0xb0] sm:$0xff]
        %v1587 = vld [vmem:[#allocation2 + $0xb8] sm:$0xff]
        %v1588 = vld [vmem:[#allocation2 + $0xc0] sm:$0xff]
        %v1589 = vld [vmem:[#allocation2 + $0xc8] sm:$0xff]
        %v1590 = vld [vmem:[#allocation2 + $0xd0] sm:$0xff]
        %v1591 = vld [vmem:[#allocation2 + $0xd8] sm:$0xff]
        %v1592 = vld [vmem:[#allocation2 + $0xe0] sm:$0xff]
        %v1593 = vld [vmem:[#allocation2 + $0xe8] sm:$0xff]
        %v1594 = vld [vmem:[#allocation2 + $0xf0] sm:$0xff]
        %v1595 = vld [vmem:[#allocation2 + $0xf8] sm:$0xff]
        %v1596 = vld [vmem:[#allocation2 + $0x100] sm:$0xff]
        %v1597 = vld [vmem:[#allocation2 + $0x108] sm:$0xff]
        %v1598 = vld [vmem:[#allocation2 + $0x110] sm:$0xff]
        %v1599 = vld [vmem:[#allocation2 + $0x118] sm:$0xff]
        %v1600 = vld [vmem:[#allocation2 + $0x120] sm:$0xff]
        %v1601 = vld [vmem:[#allocation2 + $0x128] sm:$0xff]
        %v1602 = vld [vmem:[#allocation2 + $0x130] sm:$0xff]
        %v1603 = vld [vmem:[#allocation2 + $0x138] sm:$0xff]
        %v1604 = vld [vmem:[#allocation2 + $0x140] sm:$0xff]
        %v1605 = vld [vmem:[#allocation2 + $0x148] sm:$0xff]
        %v1606 = vld [vmem:[#allocation2 + $0x150] sm:$0xff]
        %v1607 = vld [vmem:[#allocation2 + $0x158] sm:$0xff]
        %v1608 = vld [vmem:[#allocation2 + $0x160] sm:$0xff]
        %v1609 = vld [vmem:[#allocation2 + $0x168] sm:$0xff]
        %v1610 = vld [vmem:[#allocation2 + $0x170] sm:$0xff]
        %v1611 = vld [vmem:[#allocation2 + $0x178] sm:$0xff]
        %v1612 = vld [vmem:[#allocation2 + $0x180] sm:$0xff]
        %v1613 = vld [vmem:[#allocation2 + $0x188] sm:$0xff]
        %v1614 = vld [vmem:[#allocation2 + $0x190] sm:$0xff]
        %v1615 = vld [vmem:[#allocation2 + $0x198] sm:$0xff]
        %v1616 = vld [vmem:[#allocation2 + $0x1a0] sm:$0xff]
        %v1617 = vld [vmem:[#allocation2 + $0x1a8] sm:$0xff]
        %v1618 = vld [vmem:[#allocation2 + $0x1b0] sm:$0xff]
        %v1619 = vld [vmem:[#allocation2 + $0x1b8] sm:$0xff]
        %v1620 = vld [vmem:[#allocation2 + $0x1c0] sm:$0xff]
        %v1621 = vld [vmem:[#allocation2 + $0x1c8] sm:$0xff]
        %v1622 = vld [vmem:[#allocation2 + $0x1d0] sm:$0xff]
        %v1623 = vld [vmem:[#allocation2 + $0x1d8] sm:$0xff]
        %v1624 = vld [vmem:[#allocation2 + $0x1e0] sm:$0xff]
        %v1625 = vld [vmem:[#allocation2 + $0x1e8] sm:$0xff]
        %v1626 = vld [vmem:[#allocation2 + $0x1f0] sm:$0xff]
        %v1627 = vld [vmem:[#allocation2 + $0x1f8] sm:$0xff]
        %v1628 = vld [vmem:[#allocation2 + $0x200] sm:$0xff]
        %v1629 = vld [vmem:[#allocation2 + $0x208] sm:$0xff]
        %v1630 = vld [vmem:[#allocation2 + $0x210] sm:$0xff]
        %v1631 = vld [vmem:[#allocation2 + $0x218] sm:$0xff]
        %v1632 = vld [vmem:[#allocation2 + $0x220] sm:$0xff]
        %v1633 = vld [vmem:[#allocation2 + $0x228] sm:$0xff]
        %v1634 = vld [vmem:[#allocation2 + $0x230] sm:$0xff]
        %v1635 = vld [vmem:[#allocation2 + $0x238] sm:$0xff]
        %v1636 = vld [vmem:[%s5] sm:$0xff]
        %v1637 = vld [vmem:[%s6] sm:$0xff]
        %1639 = vset.pattern.permute.xlu0 0
        %1640 = vperm.xlu0 %1639, %v1637
        %v1641 = vpop.permute.xlu0 %1640
        %v1644 = vsel %vm808, %v1636, 0
        %1646 = vmatprep.subr.mxu0 %v1565
        %1647 = vmatpush1.msra.mxu0 %v1564
        %1648 = vmatprep.subr.mxu0 %v1573
        %1649 = vmatpush1.msra.mxu0 %v1572
        %1650 = vmatprep.subr.mxu0 %v1581
        %1651 = vmatpush1.msra.mxu0 %v1580
        %1652 = vmatprep.subr.mxu0 %v1589
        %1653 = vmatpush1.msra.mxu0 %v1588
        %1654 = vmatprep.subr.mxu0 %v1597
        %1655 = vmatpush1.msra.mxu0 %v1596
        %1656 = vmatprep.subr.mxu0 %v1605
        %1657 = vmatpush1.msra.mxu0 %v1604
        %1658 = vmatprep.subr.mxu0 %v1613
        %1659 = vmatpush1.msra.mxu0 %v1612
        %1660 = vmatprep.subr.mxu0 %v1621
        %1661 = vmatpush1.msra.mxu0 %v1620
        %1662 = vmatprep.subr.mxu0 %v1629
        %1663 = vmatpush1.msra.mxu0 %v1628
        %1664 = vmatprep.subr.mxu0 0.0
        %1665 = vmatpush1.msra.mxu0 0.0
        %1666 = vmatprep.subr.mxu0 0.0
        %1667 = vmatpush1.msra.mxu0 0.0
        %1668 = vmatprep.subr.mxu0 0.0
        %1669 = vmatpush1.msra.mxu0 0.0
        %1670 = vmatprep.subr.mxu0 0.0
        %1671 = vmatpush1.msra.mxu0 0.0
        %1672 = vmatprep.subr.mxu0 0.0
        %1673 = vmatpush1.msra.mxu0 0.0
        %1674 = vmatprep.subr.mxu0 0.0
        %1675 = vmatpush1.msra.mxu0 0.0
        %1676 = vmatprep.subr.mxu0 0.0
        %1677 = vmatpush1.msra.mxu0 0.0
        %1678 = vmatprep.subr.mxu0 0.0
        %1679 = vmatpush1.msra.mxu0 0.0
        %1680 = vmatprep.subr.mxu0 0.0
        %1681 = vmatpush1.msra.mxu0 0.0
        %1682 = vmatprep.subr.mxu0 0.0
        %1683 = vmatpush1.msra.mxu0 0.0
        %1684 = vmatprep.subr.mxu0 0.0
        %1685 = vmatpush1.msra.mxu0 0.0
        %1686 = vmatprep.subr.mxu0 0.0
        %1687 = vmatpush1.msra.mxu0 0.0
        %1688 = vmatprep.subr.mxu0 0.0
        %1689 = vmatpush1.msra.mxu0 0.0
        %1690 = vmatprep.subr.mxu0 0.0
        %1691 = vmatpush1.msra.mxu0 0.0
        %1692 = vmatprep.subr.mxu0 0.0
        %1693 = vmatpush1.msra.mxu0 0.0
        %1694 = vmatprep.subr.mxu0 0.0
        %1695 = vmatpush1.msra.mxu0 0.0
        %1696 = vmatprep.subr.mxu0 0.0
        %1697 = vmatpush1.msra.mxu0 0.0
        %1698 = vmatprep.subr.mxu0 0.0
        %1699 = vmatpush1.msra.mxu0 0.0
        %1700 = vmatprep.subr.mxu0 0.0
        %1701 = vmatpush1.msra.mxu0 0.0
        %1702 = vmatprep.subr.mxu0 0.0
        %1703 = vmatpush1.msra.mxu0 0.0
        %1704 = vmatprep.subr.mxu0 0.0
        %1705 = vmatpush1.msra.mxu0 0.0
        %1706 = vmatprep.subr.mxu0 0.0
        %1707 = vmatpush1.msra.mxu0 0.0
        %1708 = vmatprep.subr.mxu0 0.0
        %1709 = vmatpush1.msra.mxu0 0.0
        %1710 = vmatprep.mubr.f32.mxu0 0.0
        %1711 = vmatmul.mubr.f32.gmra.mrb[0].mxu0 %v1644
        %v1712 = vpop.f32.mrb[0].mxu0
        %v1713 = vadd.f32 %v1641, %v1712
        %v1714 = vpop.f32.mrb[0].mxu0
        %v1715 = vadd.f32 %v1641, %v1714
        %1716 = vdwg.mxu0
        %1717 = vmatprep.subr.mxu0 %v1567
        %1718 = vmatpush1.msra.mxu0 %v1566
        %1719 = vmatprep.subr.mxu0 %v1575
        %1720 = vmatpush1.msra.mxu0 %v1574
        %1721 = vmatprep.subr.mxu0 %v1583
        %1722 = vmatpush1.msra.mxu0 %v1582
        %1723 = vmatprep.subr.mxu0 %v1591
        %1724 = vmatpush1.msra.mxu0 %v1590
        %1725 = vmatprep.subr.mxu0 %v1599
        %1726 = vmatpush1.msra.mxu0 %v1598
        %1727 = vmatprep.subr.mxu0 %v1607
        %1728 = vmatpush1.msra.mxu0 %v1606
        %1729 = vmatprep.subr.mxu0 %v1615
        %1730 = vmatpush1.msra.mxu0 %v1614
        %1731 = vmatprep.subr.mxu0 %v1623
        %1732 = vmatpush1.msra.mxu0 %v1622
        %1733 = vmatprep.subr.mxu0 %v1631
        %1734 = vmatpush1.msra.mxu0 %v1630
        %1735 = vmatprep.subr.mxu0 0.0
        %1736 = vmatpush1.msra.mxu0 0.0
        %1737 = vmatprep.subr.mxu0 0.0
        %1738 = vmatpush1.msra.mxu0 0.0
        %1739 = vmatprep.subr.mxu0 0.0
        %1740 = vmatpush1.msra.mxu0 0.0
        %1741 = vmatprep.subr.mxu0 0.0
        %1742 = vmatpush1.msra.mxu0 0.0
        %1743 = vmatprep.subr.mxu0 0.0
        %1744 = vmatpush1.msra.mxu0 0.0
        %1745 = vmatprep.subr.mxu0 0.0
        %1746 = vmatpush1.msra.mxu0 0.0
        %1747 = vmatprep.subr.mxu0 0.0
        %1748 = vmatpush1.msra.mxu0 0.0
        %1749 = vmatprep.subr.mxu0 0.0
        %1750 = vmatpush1.msra.mxu0 0.0
        %1751 = vmatprep.subr.mxu0 0.0
        %1752 = vmatpush1.msra.mxu0 0.0
        %1753 = vmatprep.subr.mxu0 0.0
        %1754 = vmatpush1.msra.mxu0 0.0
        %1755 = vmatprep.subr.mxu0 0.0
        %1756 = vmatpush1.msra.mxu0 0.0
        %1757 = vmatprep.subr.mxu0 0.0
        %1758 = vmatpush1.msra.mxu0 0.0
        %1759 = vmatprep.subr.mxu0 0.0
        %1760 = vmatpush1.msra.mxu0 0.0
        %1761 = vmatprep.subr.mxu0 0.0
        %1762 = vmatpush1.msra.mxu0 0.0
        %1763 = vmatprep.subr.mxu0 0.0
        %1764 = vmatpush1.msra.mxu0 0.0
        %1765 = vmatprep.subr.mxu0 0.0
        %1766 = vmatpush1.msra.mxu0 0.0
        %1767 = vmatprep.subr.mxu0 0.0
        %1768 = vmatpush1.msra.mxu0 0.0
        %1769 = vmatprep.subr.mxu0 0.0
        %1770 = vmatpush1.msra.mxu0 0.0
        %1771 = vmatprep.subr.mxu0 0.0
        %1772 = vmatpush1.msra.mxu0 0.0
        %1773 = vmatprep.subr.mxu0 0.0
        %1774 = vmatpush1.msra.mxu0 0.0
        %1775 = vmatprep.subr.mxu0 0.0
        %1776 = vmatpush1.msra.mxu0 0.0
        %1777 = vmatprep.subr.mxu0 0.0
        %1778 = vmatpush1.msra.mxu0 0.0
        %1779 = vmatprep.subr.mxu0 0.0
        %1780 = vmatpush1.msra.mxu0 0.0
        %1781 = vmatprep.mubr.f32.mxu0 0.0
        %1782 = vmatmul.mubr.f32.gmra.mrb[0].mxu0 %v1644
        %v1783 = vpop.f32.mrb[0].mxu0
        %v1784 = vadd.f32 %v1641, %v1783
        %v1785 = vpop.f32.mrb[0].mxu0
        %v1786 = vadd.f32 %v1641, %v1785
        %1787 = vdwg.mxu0
        %1788 = vmatprep.subr.mxu0 %v1569
        %1789 = vmatpush1.msra.mxu0 %v1568
        %1790 = vmatprep.subr.mxu0 %v1577
        %1791 = vmatpush1.msra.mxu0 %v1576
        %1792 = vmatprep.subr.mxu0 %v1585
        %1793 = vmatpush1.msra.mxu0 %v1584
        %1794 = vmatprep.subr.mxu0 %v1593
        %1795 = vmatpush1.msra.mxu0 %v1592
        %1796 = vmatprep.subr.mxu0 %v1601
        %1797 = vmatpush1.msra.mxu0 %v1600
        %1798 = vmatprep.subr.mxu0 %v1609
        %1799 = vmatpush1.msra.mxu0 %v1608
        %1800 = vmatprep.subr.mxu0 %v1617
        %1801 = vmatpush1.msra.mxu0 %v1616
        %1802 = vmatprep.subr.mxu0 %v1625
        %1803 = vmatpush1.msra.mxu0 %v1624
        %1804 = vmatprep.subr.mxu0 %v1633
        %1805 = vmatpush1.msra.mxu0 %v1632
        %1806 = vmatprep.subr.mxu0 0.0
        %1807 = vmatpush1.msra.mxu0 0.0
        %1808 = vmatprep.subr.mxu0 0.0
        %1809 = vmatpush1.msra.mxu0 0.0
        %1810 = vmatprep.subr.mxu0 0.0
        %1811 = vmatpush1.msra.mxu0 0.0
        %1812 = vmatprep.subr.mxu0 0.0
        %1813 = vmatpush1.msra.mxu0 0.0
        %1814 = vmatprep.subr.mxu0 0.0
        %1815 = vmatpush1.msra.mxu0 0.0
        %1816 = vmatprep.subr.mxu0 0.0
        %1817 = vmatpush1.msra.mxu0 0.0
        %1818 = vmatprep.subr.mxu0 0.0
        %1819 = vmatpush1.msra.mxu0 0.0
        %1820 = vmatprep.subr.mxu0 0.0
        %1821 = vmatpush1.msra.mxu0 0.0
        %1822 = vmatprep.subr.mxu0 0.0
        %1823 = vmatpush1.msra.mxu0 0.0
        %1824 = vmatprep.subr.mxu0 0.0
        %1825 = vmatpush1.msra.mxu0 0.0
        %1826 = vmatprep.subr.mxu0 0.0
        %1827 = vmatpush1.msra.mxu0 0.0
        %1828 = vmatprep.subr.mxu0 0.0
        %1829 = vmatpush1.msra.mxu0 0.0
        %1830 = vmatprep.subr.mxu0 0.0
        %1831 = vmatpush1.msra.mxu0 0.0
        %1832 = vmatprep.subr.mxu0 0.0
        %1833 = vmatpush1.msra.mxu0 0.0
        %1834 = vmatprep.subr.mxu0 0.0
        %1835 = vmatpush1.msra.mxu0 0.0
        %1836 = vmatprep.subr.mxu0 0.0
        %1837 = vmatpush1.msra.mxu0 0.0
        %1838 = vmatprep.subr.mxu0 0.0
        %1839 = vmatpush1.msra.mxu0 0.0
        %1840 = vmatprep.subr.mxu0 0.0
        %1841 = vmatpush1.msra.mxu0 0.0
        %1842 = vmatprep.subr.mxu0 0.0
        %1843 = vmatpush1.msra.mxu0 0.0
        %1844 = vmatprep.subr.mxu0 0.0
        %1845 = vmatpush1.msra.mxu0 0.0
        %1846 = vmatprep.subr.mxu0 0.0
        %1847 = vmatpush1.msra.mxu0 0.0
        %1848 = vmatprep.subr.mxu0 0.0
        %1849 = vmatpush1.msra.mxu0 0.0
        %1850 = vmatprep.subr.mxu0 0.0
        %1851 = vmatpush1.msra.mxu0 0.0
        %1852 = vmatprep.mubr.f32.mxu0 0.0
        %1853 = vmatmul.mubr.f32.gmra.mrb[0].mxu0 %v1644
        %v1854 = vpop.f32.mrb[0].mxu0
        %v1855 = vadd.f32 %v1641, %v1854
        %v1856 = vpop.f32.mrb[0].mxu0
        %v1857 = vadd.f32 %v1641, %v1856
        %1858 = vdwg.mxu0
        %1859 = vmatprep.subr.mxu0 %v1571
        %1860 = vmatpush1.msra.mxu0 %v1570
        %1861 = vmatprep.subr.mxu0 %v1579
        %1862 = vmatpush1.msra.mxu0 %v1578
        %1863 = vmatprep.subr.mxu0 %v1587
        %1864 = vmatpush1.msra.mxu0 %v1586
        %1865 = vmatprep.subr.mxu0 %v1595
        %1866 = vmatpush1.msra.mxu0 %v1594
        %1867 = vmatprep.subr.mxu0 %v1603
        %1868 = vmatpush1.msra.mxu0 %v1602
        %1869 = vmatprep.subr.mxu0 %v1611
        %1870 = vmatpush1.msra.mxu0 %v1610
        %1871 = vmatprep.subr.mxu0 %v1619
        %1872 = vmatpush1.msra.mxu0 %v1618
        %1873 = vmatprep.subr.mxu0 %v1627
        %1874 = vmatpush1.msra.mxu0 %v1626
        %1875 = vmatprep.subr.mxu0 %v1635
        %1876 = vmatpush1.msra.mxu0 %v1634
        %1877 = vmatprep.subr.mxu0 0.0
        %1878 = vmatpush1.msra.mxu0 0.0
        %1879 = vmatprep.subr.mxu0 0.0
        %1880 = vmatpush1.msra.mxu0 0.0
        %1881 = vmatprep.subr.mxu0 0.0
        %1882 = vmatpush1.msra.mxu0 0.0
        %1883 = vmatprep.subr.mxu0 0.0
        %1884 = vmatpush1.msra.mxu0 0.0
        %1885 = vmatprep.subr.mxu0 0.0
        %1886 = vmatpush1.msra.mxu0 0.0
        %1887 = vmatprep.subr.mxu0 0.0
        %1888 = vmatpush1.msra.mxu0 0.0
        %1889 = vmatprep.subr.mxu0 0.0
        %1890 = vmatpush1.msra.mxu0 0.0
        %1891 = vmatprep.subr.mxu0 0.0
        %1892 = vmatpush1.msra.mxu0 0.0
        %1893 = vmatprep.subr.mxu0 0.0
        %1894 = vmatpush1.msra.mxu0 0.0
        %1895 = vmatprep.subr.mxu0 0.0
        %1896 = vmatpush1.msra.mxu0 0.0
        %1897 = vmatprep.subr.mxu0 0.0
        %1898 = vmatpush1.msra.mxu0 0.0
        %1899 = vmatprep.subr.mxu0 0.0
        %1900 = vmatpush1.msra.mxu0 0.0
        %1901 = vmatprep.subr.mxu0 0.0
        %1902 = vmatpush1.msra.mxu0 0.0
        %1903 = vmatprep.subr.mxu0 0.0
        %1904 = vmatpush1.msra.mxu0 0.0
        %1905 = vmatprep.subr.mxu0 0.0
        %1906 = vmatpush1.msra.mxu0 0.0
        %1907 = vmatprep.subr.mxu0 0.0
        %1908 = vmatpush1.msra.mxu0 0.0
        %1909 = vmatprep.subr.mxu0 0.0
        %1910 = vmatpush1.msra.mxu0 0.0
        %1911 = vmatprep.subr.mxu0 0.0
        %1912 = vmatpush1.msra.mxu0 0.0
        %1913 = vmatprep.subr.mxu0 0.0
        %1914 = vmatpush1.msra.mxu0 0.0
        %1915 = vmatprep.subr.mxu0 0.0
        %1916 = vmatpush1.msra.mxu0 0.0
        %1917 = vmatprep.subr.mxu0 0.0
        %1918 = vmatpush1.msra.mxu0 0.0
        %1919 = vmatprep.subr.mxu0 0.0
        %1920 = vmatpush1.msra.mxu0 0.0
        %1921 = vmatprep.subr.mxu0 0.0
        %1922 = vmatpush1.msra.mxu0 0.0
        %1923 = vmatprep.mubr.f32.mxu0 0.0
        %1924 = vmatmul.mubr.f32.gmra.mrb[0].mxu0 %v1644
        %v1925 = vpop.f32.mrb[0].mxu0
        %v1926 = vadd.f32 %v1641, %v1925
        %v1927 = vpop.f32.mrb[0].mxu0
        %v1928 = vadd.f32 %v1641, %v1927
        %1929 = vdwg.mxu0
        %v1930 = vmax.f32 %v1713, 0.0
        %v1931 = vmax.f32 %v1715, 0.0
        %v1932 = vmax.f32 %v1784, 0.0
        %v1933 = vmax.f32 %v1786, 0.0
        %v1934 = vmax.f32 %v1855, 0.0
        %v1935 = vmax.f32 %v1857, 0.0
        %v1936 = vmax.f32 %v1926, 0.0
        %v1937 = vmax.f32 %v1928, 0.0
        %1938 = vst [vmem:[#allocation3] sm:$0xff] 0.0
        %1939 = vst [vmem:[#allocation3 + $0x8] sm:$0xff] 0.0
        %1940 = vst [vmem:[#allocation3 + $0x10] sm:$0xff] 0.0
        %1941 = vst [vmem:[#allocation3 + $0x18] sm:$0xff] 0.0
        %1942 = vst [vmem:[#allocation3 + $0x20] sm:$0xff] 0.0
        %1943 = vst [vmem:[#allocation3 + $0x28] sm:$0xff] 0.0
        %1944 = vst [vmem:[#allocation3 + $0x30] sm:$0xff] 0.0
        %1945 = vst.msk [vmem:[#allocation3 + $0x38] sm:$0xff] %vm545, 0.0
        %1946 = vst [vmem:[#allocation3] sm:$0xff] %v1930
        %1947 = vst [vmem:[#allocation3 + $0x8] sm:$0xff] %v1931
        %1948 = vst [vmem:[#allocation3 + $0x10] sm:$0xff] %v1932
        %1949 = vst [vmem:[#allocation3 + $0x18] sm:$0xff] %v1933
        %1950 = vst [vmem:[#allocation3 + $0x20] sm:$0xff] %v1934
        %1951 = vst [vmem:[#allocation3 + $0x28] sm:$0xff] %v1935
        %1952 = vst [vmem:[#allocation3 + $0x30] sm:$0xff] %v1936
        %1953 = vst.msk [vmem:[#allocation3 + $0x38] sm:$0xff] %vm399, %v1937
        %v1954 = vld [vmem:[#allocation3] sm:$0xff]
        %v1955 = vld [vmem:[#allocation3 + $0x8] sm:$0xff]
        %v1956 = vld [vmem:[#allocation3 + $0x10] sm:$0xff]
        %v1957 = vld [vmem:[#allocation3 + $0x18] sm:$0xff]
        %v1958 = vld [vmem:[#allocation3 + $0x20] sm:$0xff]
        %v1959 = vld [vmem:[#allocation3 + $0x28] sm:$0xff]
        %v1960 = vld [vmem:[#allocation3 + $0x30] sm:$0xff]
        %v1961 = vld [vmem:[#allocation3 + $0x38] sm:$0xff]
        %1962 = vst [vmem:[#allocation2] sm:$0xff] %v1954
        %1963 = vst [vmem:[#allocation2 + $0x8] sm:$0xff] %v1955
        %1964 = vst [vmem:[#allocation2 + $0x10] sm:$0xff] %v1956
        %1965 = vst [vmem:[#allocation2 + $0x18] sm:$0xff] %v1957
        %1966 = vst [vmem:[#allocation2 + $0x20] sm:$0xff] %v1958
        %1967 = vst [vmem:[#allocation2 + $0x28] sm:$0xff] %v1959
        %1968 = vst [vmem:[#allocation2 + $0x30] sm:$0xff] %v1960
        %1969 = vst.msk [vmem:[#allocation2 + $0x38] sm:$0xff] %vm399, %v1961
        %1978 = vrot.lane.b32.xlu0 %v1954, 127
        %v1979 = vpop.permute.xlu0 %1978
        %1980 = vrot.lane.b32.xlu0 %v1955, 127
        %v1981 = vpop.permute.xlu0 %1980
        %1982 = vrot.lane.b32.xlu0 %v1956, 127
        %v1983 = vpop.permute.xlu0 %1982
        %1984 = vrot.lane.b32.xlu0 %v1957, 127
        %v1985 = vpop.permute.xlu0 %1984
        %1986 = vrot.lane.b32.xlu0 %v1958, 127
        %v1987 = vpop.permute.xlu0 %1986
        %1988 = vrot.lane.b32.xlu0 %v1959, 127
        %v1989 = vpop.permute.xlu0 %1988
        %1990 = vrot.lane.b32.xlu0 %v1960, 127
        %v1991 = vpop.permute.xlu0 %1990
        %1992 = vrot.lane.b32.xlu0 %v1961, 127
        %v1993 = vpop.permute.xlu0 %1992
        %v1994 = vsel %vm425, %v1979, %v1981
        %v1995 = vsel %vm425, %v1981, %v1983
        %v1996 = vsel %vm425, %v1983, %v1985
        %v1997 = vsel %vm425, %v1985, %v1987
        %v1998 = vsel %vm425, %v1987, %v1989
        %v1999 = vsel %vm425, %v1989, %v1991
        %v2000 = vsel %vm425, %v1991, %v1993
        %2009 = vst [vmem:[#allocation2 + $0x40] sm:$0xff] %v1994
        %2010 = vst [vmem:[#allocation2 + $0x48] sm:$0xff] %v1995
        %2011 = vst [vmem:[#allocation2 + $0x50] sm:$0xff] %v1996
        %2012 = vst [vmem:[#allocation2 + $0x58] sm:$0xff] %v1997
        %2013 = vst [vmem:[#allocation2 + $0x60] sm:$0xff] %v1998
        %2014 = vst [vmem:[#allocation2 + $0x68] sm:$0xff] %v1999
        %2015 = vst [vmem:[#allocation2 + $0x70] sm:$0xff] %v2000
        %2016 = vst.msk [vmem:[#allocation2 + $0x78] sm:$0xff] %vm399, %v1993
        %2017 = vrot.lane.b32.xlu0 %v1954, 126
        %v2018 = vpop.permute.xlu0 %2017
        %2019 = vrot.lane.b32.xlu0 %v1955, 126
        %v2020 = vpop.permute.xlu0 %2019
        %2021 = vrot.lane.b32.xlu0 %v1956, 126
        %v2022 = vpop.permute.xlu0 %2021
        %2023 = vrot.lane.b32.xlu0 %v1957, 126
        %v2024 = vpop.permute.xlu0 %2023
        %2025 = vrot.lane.b32.xlu0 %v1958, 126
        %v2026 = vpop.permute.xlu0 %2025
        %2027 = vrot.lane.b32.xlu0 %v1959, 126
        %v2028 = vpop.permute.xlu0 %2027
        %2029 = vrot.lane.b32.xlu0 %v1960, 126
        %v2030 = vpop.permute.xlu0 %2029
        %2031 = vrot.lane.b32.xlu0 %v1961, 126
        %v2032 = vpop.permute.xlu0 %2031
        %v2033 = vsel %vm465, %v2018, %v2020
        %v2034 = vsel %vm465, %v2020, %v2022
        %v2035 = vsel %vm465, %v2022, %v2024
        %v2036 = vsel %vm465, %v2024, %v2026
        %v2037 = vsel %vm465, %v2026, %v2028
        %v2038 = vsel %vm465, %v2028, %v2030
        %v2039 = vsel %vm465, %v2030, %v2032
        %2048 = vst [vmem:[#allocation2 + $0x80] sm:$0xff] %v2033
        %2049 = vst [vmem:[#allocation2 + $0x88] sm:$0xff] %v2034
        %2050 = vst [vmem:[#allocation2 + $0x90] sm:$0xff] %v2035
        %2051 = vst [vmem:[#allocation2 + $0x98] sm:$0xff] %v2036
        %2052 = vst [vmem:[#allocation2 + $0xa0] sm:$0xff] %v2037
        %2053 = vst [vmem:[#allocation2 + $0xa8] sm:$0xff] %v2038
        %2054 = vst [vmem:[#allocation2 + $0xb0] sm:$0xff] %v2039
        %2055 = vst.msk [vmem:[#allocation2 + $0xb8] sm:$0xff] %vm399, %v2032
        %2056 = vrot.lane.b32.xlu0 %v1954, 125
        %v2057 = vpop.permute.xlu0 %2056
        %2058 = vrot.lane.b32.xlu0 %v1955, 125
        %v2059 = vpop.permute.xlu0 %2058
        %2060 = vrot.lane.b32.xlu0 %v1956, 125
        %v2061 = vpop.permute.xlu0 %2060
        %2062 = vrot.lane.b32.xlu0 %v1957, 125
        %v2063 = vpop.permute.xlu0 %2062
        %2064 = vrot.lane.b32.xlu0 %v1958, 125
        %v2065 = vpop.permute.xlu0 %2064
        %2066 = vrot.lane.b32.xlu0 %v1959, 125
        %v2067 = vpop.permute.xlu0 %2066
        %2068 = vrot.lane.b32.xlu0 %v1960, 125
        %v2069 = vpop.permute.xlu0 %2068
        %2070 = vrot.lane.b32.xlu0 %v1961, 125
        %v2071 = vpop.permute.xlu0 %2070
        %vm2072 = vcmask 1022976
        %v2073 = vsel %vm2072, %v2057, %v2059
        %v2074 = vsel %vm2072, %v2059, %v2061
        %v2075 = vsel %vm2072, %v2061, %v2063
        %v2076 = vsel %vm2072, %v2063, %v2065
        %v2077 = vsel %vm2072, %v2065, %v2067
        %v2078 = vsel %vm2072, %v2067, %v2069
        %v2079 = vsel %vm2072, %v2069, %v2071
        %2088 = vst [vmem:[#allocation2 + $0xc0] sm:$0xff] %v2073
        %2089 = vst [vmem:[#allocation2 + $0xc8] sm:$0xff] %v2074
        %2090 = vst [vmem:[#allocation2 + $0xd0] sm:$0xff] %v2075
        %2091 = vst [vmem:[#allocation2 + $0xd8] sm:$0xff] %v2076
        %2092 = vst [vmem:[#allocation2 + $0xe0] sm:$0xff] %v2077
        %2093 = vst [vmem:[#allocation2 + $0xe8] sm:$0xff] %v2078
        %2094 = vst [vmem:[#allocation2 + $0xf0] sm:$0xff] %v2079
        %2095 = vst.msk [vmem:[#allocation2 + $0xf8] sm:$0xff] %vm399, %v2071
        %2096 = vrot.lane.b32.xlu0 %v1954, 98
        %v2097 = vpop.permute.xlu0 %2096
        %2098 = vrot.lane.b32.xlu0 %v1955, 98
        %v2099 = vpop.permute.xlu0 %2098
        %2100 = vrot.lane.b32.xlu0 %v1956, 98
        %v2101 = vpop.permute.xlu0 %2100
        %2102 = vrot.lane.b32.xlu0 %v1957, 98
        %v2103 = vpop.permute.xlu0 %2102
        %2104 = vrot.lane.b32.xlu0 %v1958, 98
        %v2105 = vpop.permute.xlu0 %2104
        %2106 = vrot.lane.b32.xlu0 %v1959, 98
        %v2107 = vpop.permute.xlu0 %2106
        %2108 = vrot.lane.b32.xlu0 %v1960, 98
        %v2109 = vpop.permute.xlu0 %2108
        %2110 = vrot.lane.b32.xlu0 %v1961, 98
        %v2111 = vpop.permute.xlu0 %2110
        %v2112 = vsel %vm505, %v2097, %v2099
        %v2113 = vsel %vm505, %v2099, %v2101
        %v2114 = vsel %vm505, %v2101, %v2103
        %v2115 = vsel %vm505, %v2103, %v2105
        %v2116 = vsel %vm505, %v2105, %v2107
        %v2117 = vsel %vm505, %v2107, %v2109
        %v2118 = vsel %vm505, %v2109, %v2111
        %2127 = vst [vmem:[#allocation2 + $0x100] sm:$0xff] %v2112
        %2128 = vst [vmem:[#allocation2 + $0x108] sm:$0xff] %v2113
        %2129 = vst [vmem:[#allocation2 + $0x110] sm:$0xff] %v2114
        %2130 = vst [vmem:[#allocation2 + $0x118] sm:$0xff] %v2115
        %2131 = vst [vmem:[#allocation2 + $0x120] sm:$0xff] %v2116
        %2132 = vst [vmem:[#allocation2 + $0x128] sm:$0xff] %v2117
        %2133 = vst [vmem:[#allocation2 + $0x130] sm:$0xff] %v2118
        %2134 = vst.msk [vmem:[#allocation2 + $0x138] sm:$0xff] %vm399, %v2111
        %2135 = vrot.lane.b32.xlu0 %v1954, 97
        %v2136 = vpop.permute.xlu0 %2135
        %2137 = vrot.lane.b32.xlu0 %v1955, 97
        %v2138 = vpop.permute.xlu0 %2137
        %2139 = vrot.lane.b32.xlu0 %v1956, 97
        %v2140 = vpop.permute.xlu0 %2139
        %2141 = vrot.lane.b32.xlu0 %v1957, 97
        %v2142 = vpop.permute.xlu0 %2141
        %2143 = vrot.lane.b32.xlu0 %v1958, 97
        %v2144 = vpop.permute.xlu0 %2143
        %2145 = vrot.lane.b32.xlu0 %v1959, 97
        %v2146 = vpop.permute.xlu0 %2145
        %2147 = vrot.lane.b32.xlu0 %v1960, 97
        %v2148 = vpop.permute.xlu0 %2147
        %2149 = vrot.lane.b32.xlu0 %v1961, 97
        %v2150 = vpop.permute.xlu0 %2149
        %v2151 = vsel %vm545, %v2136, %v2138
        %v2152 = vsel %vm545, %v2138, %v2140
        %v2153 = vsel %vm545, %v2140, %v2142
        %v2154 = vsel %vm545, %v2142, %v2144
        %v2155 = vsel %vm545, %v2144, %v2146
        %v2156 = vsel %vm545, %v2146, %v2148
        %v2157 = vsel %vm545, %v2148, %v2150
        %2166 = vst [vmem:[#allocation2 + $0x140] sm:$0xff] %v2151
        %2167 = vst [vmem:[#allocation2 + $0x148] sm:$0xff] %v2152
        %2168 = vst [vmem:[#allocation2 + $0x150] sm:$0xff] %v2153
        %2169 = vst [vmem:[#allocation2 + $0x158] sm:$0xff] %v2154
        %2170 = vst [vmem:[#allocation2 + $0x160] sm:$0xff] %v2155
        %2171 = vst [vmem:[#allocation2 + $0x168] sm:$0xff] %v2156
        %2172 = vst [vmem:[#allocation2 + $0x170] sm:$0xff] %v2157
        %2173 = vst.msk [vmem:[#allocation2 + $0x178] sm:$0xff] %vm399, %v2150
        %2174 = vrot.lane.b32.xlu0 %v1954, 96
        %v2175 = vpop.permute.xlu0 %2174
        %2176 = vrot.lane.b32.xlu0 %v1955, 96
        %v2177 = vpop.permute.xlu0 %2176
        %2178 = vrot.lane.b32.xlu0 %v1956, 96
        %v2179 = vpop.permute.xlu0 %2178
        %2180 = vrot.lane.b32.xlu0 %v1957, 96
        %v2181 = vpop.permute.xlu0 %2180
        %2182 = vrot.lane.b32.xlu0 %v1958, 96
        %v2183 = vpop.permute.xlu0 %2182
        %2184 = vrot.lane.b32.xlu0 %v1959, 96
        %v2185 = vpop.permute.xlu0 %2184
        %2186 = vrot.lane.b32.xlu0 %v1960, 96
        %v2187 = vpop.permute.xlu0 %2186
        %2188 = vrot.lane.b32.xlu0 %v1961, 96
        %v2189 = vpop.permute.xlu0 %2188
        %v2190 = vsel %vm585, %v2175, %v2177
        %v2191 = vsel %vm585, %v2177, %v2179
        %v2192 = vsel %vm585, %v2179, %v2181
        %v2193 = vsel %vm585, %v2181, %v2183
        %v2194 = vsel %vm585, %v2183, %v2185
        %v2195 = vsel %vm585, %v2185, %v2187
        %v2196 = vsel %vm585, %v2187, %v2189
        %2205 = vst [vmem:[#allocation2 + $0x180] sm:$0xff] %v2190
        %2206 = vst [vmem:[#allocation2 + $0x188] sm:$0xff] %v2191
        %2207 = vst [vmem:[#allocation2 + $0x190] sm:$0xff] %v2192
        %2208 = vst [vmem:[#allocation2 + $0x198] sm:$0xff] %v2193
        %2209 = vst [vmem:[#allocation2 + $0x1a0] sm:$0xff] %v2194
        %2210 = vst [vmem:[#allocation2 + $0x1a8] sm:$0xff] %v2195
        %2211 = vst [vmem:[#allocation2 + $0x1b0] sm:$0xff] %v2196
        %2212 = vst.msk [vmem:[#allocation2 + $0x1b8] sm:$0xff] %vm399, %v2189
        %2213 = vrot.lane.b32.xlu0 %v1954, 95
        %v2214 = vpop.permute.xlu0 %2213
        %2215 = vrot.lane.b32.xlu0 %v1955, 95
        %v2216 = vpop.permute.xlu0 %2215
        %2217 = vrot.lane.b32.xlu0 %v1956, 95
        %v2218 = vpop.permute.xlu0 %2217
        %2219 = vrot.lane.b32.xlu0 %v1957, 95
        %v2220 = vpop.permute.xlu0 %2219
        %2221 = vrot.lane.b32.xlu0 %v1958, 95
        %v2222 = vpop.permute.xlu0 %2221
        %2223 = vrot.lane.b32.xlu0 %v1959, 95
        %v2224 = vpop.permute.xlu0 %2223
        %2225 = vrot.lane.b32.xlu0 %v1960, 95
        %v2226 = vpop.permute.xlu0 %2225
        %2227 = vrot.lane.b32.xlu0 %v1961, 95
        %v2228 = vpop.permute.xlu0 %2227
        %vm2229 = vcmask 777216
        %v2230 = vsel %vm2229, %v2214, %v2216
        %v2231 = vsel %vm2229, %v2216, %v2218
        %v2232 = vsel %vm2229, %v2218, %v2220
        %v2233 = vsel %vm2229, %v2220, %v2222
        %v2234 = vsel %vm2229, %v2222, %v2224
        %v2235 = vsel %vm2229, %v2224, %v2226
        %v2236 = vsel %vm2229, %v2226, %v2228
        %2245 = vst [vmem:[#allocation2 + $0x1c0] sm:$0xff] %v2230
        %2246 = vst [vmem:[#allocation2 + $0x1c8] sm:$0xff] %v2231
        %2247 = vst [vmem:[#allocation2 + $0x1d0] sm:$0xff] %v2232
        %2248 = vst [vmem:[#allocation2 + $0x1d8] sm:$0xff] %v2233
        %2249 = vst [vmem:[#allocation2 + $0x1e0] sm:$0xff] %v2234
        %2250 = vst [vmem:[#allocation2 + $0x1e8] sm:$0xff] %v2235
        %2251 = vst [vmem:[#allocation2 + $0x1f0] sm:$0xff] %v2236
        %2252 = vst.msk [vmem:[#allocation2 + $0x1f8] sm:$0xff] %vm399, %v2228
        %2253 = vrot.lane.b32.xlu0 %v1954, 68
        %v2254 = vpop.permute.xlu0 %2253
        %2255 = vrot.lane.b32.xlu0 %v1955, 68
        %v2256 = vpop.permute.xlu0 %2255
        %2257 = vrot.lane.b32.xlu0 %v1956, 68
        %v2258 = vpop.permute.xlu0 %2257
        %2259 = vrot.lane.b32.xlu0 %v1957, 68
        %v2260 = vpop.permute.xlu0 %2259
        %2261 = vrot.lane.b32.xlu0 %v1958, 68
        %v2262 = vpop.permute.xlu0 %2261
        %2263 = vrot.lane.b32.xlu0 %v1959, 68
        %v2264 = vpop.permute.xlu0 %2263
        %2265 = vrot.lane.b32.xlu0 %v1960, 68
        %v2266 = vpop.permute.xlu0 %2265
        %2267 = vrot.lane.b32.xlu0 %v1961, 68
        %v2268 = vpop.permute.xlu0 %2267
        %v2269 = vsel %vm625, %v2254, %v2256
        %v2270 = vsel %vm625, %v2256, %v2258
        %v2271 = vsel %vm625, %v2258, %v2260
        %v2272 = vsel %vm625, %v2260, %v2262
        %v2273 = vsel %vm625, %v2262, %v2264
        %v2274 = vsel %vm625, %v2264, %v2266
        %v2275 = vsel %vm625, %v2266, %v2268
        %2284 = vst [vmem:[#allocation2 + $0x200] sm:$0xff] %v2269
        %2285 = vst [vmem:[#allocation2 + $0x208] sm:$0xff] %v2270
        %2286 = vst [vmem:[#allocation2 + $0x210] sm:$0xff] %v2271
        %2287 = vst [vmem:[#allocation2 + $0x218] sm:$0xff] %v2272
        %2288 = vst [vmem:[#allocation2 + $0x220] sm:$0xff] %v2273
        %2289 = vst [vmem:[#allocation2 + $0x228] sm:$0xff] %v2274
        %2290 = vst [vmem:[#allocation2 + $0x230] sm:$0xff] %v2275
        %2291 = vst.msk [vmem:[#allocation2 + $0x238] sm:$0xff] %vm399, %v2268
        %2292 = vrot.lane.b32.xlu0 %v1954, 67
        %v2293 = vpop.permute.xlu0 %2292
        %2294 = vrot.lane.b32.xlu0 %v1955, 67
        %v2295 = vpop.permute.xlu0 %2294
        %2296 = vrot.lane.b32.xlu0 %v1956, 67
        %v2297 = vpop.permute.xlu0 %2296
        %2298 = vrot.lane.b32.xlu0 %v1957, 67
        %v2299 = vpop.permute.xlu0 %2298
        %2300 = vrot.lane.b32.xlu0 %v1958, 67
        %v2301 = vpop.permute.xlu0 %2300
        %2302 = vrot.lane.b32.xlu0 %v1959, 67
        %v2303 = vpop.permute.xlu0 %2302
        %2304 = vrot.lane.b32.xlu0 %v1960, 67
        %v2305 = vpop.permute.xlu0 %2304
        %2306 = vrot.lane.b32.xlu0 %v1961, 67
        %v2307 = vpop.permute.xlu0 %2306
        %v2308 = vsel %vm665, %v2293, %v2295
        %v2309 = vsel %vm665, %v2295, %v2297
        %v2310 = vsel %vm665, %v2297, %v2299
        %v2311 = vsel %vm665, %v2299, %v2301
        %v2312 = vsel %vm665, %v2301, %v2303
        %v2313 = vsel %vm665, %v2303, %v2305
        %v2314 = vsel %vm665, %v2305, %v2307
        %2323 = vst [vmem:[#allocation2 + $0x240] sm:$0xff] %v2308
        %2324 = vst [vmem:[#allocation2 + $0x248] sm:$0xff] %v2309
        %2325 = vst [vmem:[#allocation2 + $0x250] sm:$0xff] %v2310
        %2326 = vst [vmem:[#allocation2 + $0x258] sm:$0xff] %v2311
        %2327 = vst [vmem:[#allocation2 + $0x260] sm:$0xff] %v2312
        %2328 = vst [vmem:[#allocation2 + $0x268] sm:$0xff] %v2313
        %2329 = vst [vmem:[#allocation2 + $0x270] sm:$0xff] %v2314
        %2330 = vst.msk [vmem:[#allocation2 + $0x278] sm:$0xff] %vm399, %v2307
        %2331 = vrot.lane.b32.xlu0 %v1954, 66
        %v2332 = vpop.permute.xlu0 %2331
        %2333 = vrot.lane.b32.xlu0 %v1955, 66
        %v2334 = vpop.permute.xlu0 %2333
        %2335 = vrot.lane.b32.xlu0 %v1956, 66
        %v2336 = vpop.permute.xlu0 %2335
        %2337 = vrot.lane.b32.xlu0 %v1957, 66
        %v2338 = vpop.permute.xlu0 %2337
        %2339 = vrot.lane.b32.xlu0 %v1958, 66
        %v2340 = vpop.permute.xlu0 %2339
        %2341 = vrot.lane.b32.xlu0 %v1959, 66
        %v2342 = vpop.permute.xlu0 %2341
        %2343 = vrot.lane.b32.xlu0 %v1960, 66
        %v2344 = vpop.permute.xlu0 %2343
        %2345 = vrot.lane.b32.xlu0 %v1961, 66
        %v2346 = vpop.permute.xlu0 %2345
        %v2347 = vsel %vm705, %v2332, %v2334
        %v2348 = vsel %vm705, %v2334, %v2336
        %v2349 = vsel %vm705, %v2336, %v2338
        %v2350 = vsel %vm705, %v2338, %v2340
        %v2351 = vsel %vm705, %v2340, %v2342
        %v2352 = vsel %vm705, %v2342, %v2344
        %v2353 = vsel %vm705, %v2344, %v2346
        %2362 = vst [vmem:[#allocation2 + $0x280] sm:$0xff] %v2347
        %2363 = vst [vmem:[#allocation2 + $0x288] sm:$0xff] %v2348
        %2364 = vst [vmem:[#allocation2 + $0x290] sm:$0xff] %v2349
        %2365 = vst [vmem:[#allocation2 + $0x298] sm:$0xff] %v2350
        %2366 = vst [vmem:[#allocation2 + $0x2a0] sm:$0xff] %v2351
        %2367 = vst [vmem:[#allocation2 + $0x2a8] sm:$0xff] %v2352
        %2368 = vst [vmem:[#allocation2 + $0x2b0] sm:$0xff] %v2353
        %2369 = vst.msk [vmem:[#allocation2 + $0x2b8] sm:$0xff] %vm399, %v2346
        %2370 = vrot.lane.b32.xlu0 %v1954, 65
        %v2371 = vpop.permute.xlu0 %2370
        %2372 = vrot.lane.b32.xlu0 %v1955, 65
        %v2373 = vpop.permute.xlu0 %2372
        %2374 = vrot.lane.b32.xlu0 %v1956, 65
        %v2375 = vpop.permute.xlu0 %2374
        %2376 = vrot.lane.b32.xlu0 %v1957, 65
        %v2377 = vpop.permute.xlu0 %2376
        %2378 = vrot.lane.b32.xlu0 %v1958, 65
        %v2379 = vpop.permute.xlu0 %2378
        %2380 = vrot.lane.b32.xlu0 %v1959, 65
        %v2381 = vpop.permute.xlu0 %2380
        %2382 = vrot.lane.b32.xlu0 %v1960, 65
        %v2383 = vpop.permute.xlu0 %2382
        %2384 = vrot.lane.b32.xlu0 %v1961, 65
        %v2385 = vpop.permute.xlu0 %2384
        %vm2386 = vcmask 531456
        %v2387 = vsel %vm2386, %v2371, %v2373
        %v2388 = vsel %vm2386, %v2373, %v2375
        %v2389 = vsel %vm2386, %v2375, %v2377
        %v2390 = vsel %vm2386, %v2377, %v2379
        %v2391 = vsel %vm2386, %v2379, %v2381
        %v2392 = vsel %vm2386, %v2381, %v2383
        %v2393 = vsel %vm2386, %v2383, %v2385
        %2402 = vst [vmem:[#allocation2 + $0x2c0] sm:$0xff] %v2387
        %2403 = vst [vmem:[#allocation2 + $0x2c8] sm:$0xff] %v2388
        %2404 = vst [vmem:[#allocation2 + $0x2d0] sm:$0xff] %v2389
        %2405 = vst [vmem:[#allocation2 + $0x2d8] sm:$0xff] %v2390
        %2406 = vst [vmem:[#allocation2 + $0x2e0] sm:$0xff] %v2391
        %2407 = vst [vmem:[#allocation2 + $0x2e8] sm:$0xff] %v2392
        %2408 = vst [vmem:[#allocation2 + $0x2f0] sm:$0xff] %v2393
        %2409 = vst.msk [vmem:[#allocation2 + $0x2f8] sm:$0xff] %vm399, %v2385
        %2410 = vrot.lane.b32.xlu0 %v1954, 38
        %v2411 = vpop.permute.xlu0 %2410
        %2412 = vrot.lane.b32.xlu0 %v1955, 38
        %v2413 = vpop.permute.xlu0 %2412
        %2414 = vrot.lane.b32.xlu0 %v1956, 38
        %v2415 = vpop.permute.xlu0 %2414
        %2416 = vrot.lane.b32.xlu0 %v1957, 38
        %v2417 = vpop.permute.xlu0 %2416
        %2418 = vrot.lane.b32.xlu0 %v1958, 38
        %v2419 = vpop.permute.xlu0 %2418
        %2420 = vrot.lane.b32.xlu0 %v1959, 38
        %v2421 = vpop.permute.xlu0 %2420
        %2422 = vrot.lane.b32.xlu0 %v1960, 38
        %v2423 = vpop.permute.xlu0 %2422
        %2424 = vrot.lane.b32.xlu0 %v1961, 38
        %v2425 = vpop.permute.xlu0 %2424
        %vm2426 = vcmask 310272
        %v2427 = vsel %vm2426, %v2411, %v2413
        %v2428 = vsel %vm2426, %v2413, %v2415
        %v2429 = vsel %vm2426, %v2415, %v2417
        %v2430 = vsel %vm2426, %v2417, %v2419
        %v2431 = vsel %vm2426, %v2419, %v2421
        %v2432 = vsel %vm2426, %v2421, %v2423
        %v2433 = vsel %vm2426, %v2423, %v2425
        %2442 = vst [vmem:[#allocation2 + $0x300] sm:$0xff] %v2427
        %2443 = vst [vmem:[#allocation2 + $0x308] sm:$0xff] %v2428
        %2444 = vst [vmem:[#allocation2 + $0x310] sm:$0xff] %v2429
        %2445 = vst [vmem:[#allocation2 + $0x318] sm:$0xff] %v2430
        %2446 = vst [vmem:[#allocation2 + $0x320] sm:$0xff] %v2431
        %2447 = vst [vmem:[#allocation2 + $0x328] sm:$0xff] %v2432
        %2448 = vst [vmem:[#allocation2 + $0x330] sm:$0xff] %v2433
        %2449 = vst.msk [vmem:[#allocation2 + $0x338] sm:$0xff] %vm399, %v2425
        %2450 = vrot.lane.b32.xlu0 %v1954, 37
        %v2451 = vpop.permute.xlu0 %2450
        %2452 = vrot.lane.b32.xlu0 %v1955, 37
        %v2453 = vpop.permute.xlu0 %2452
        %2454 = vrot.lane.b32.xlu0 %v1956, 37
        %v2455 = vpop.permute.xlu0 %2454
        %2456 = vrot.lane.b32.xlu0 %v1957, 37
        %v2457 = vpop.permute.xlu0 %2456
        %2458 = vrot.lane.b32.xlu0 %v1958, 37
        %v2459 = vpop.permute.xlu0 %2458
        %2460 = vrot.lane.b32.xlu0 %v1959, 37
        %v2461 = vpop.permute.xlu0 %2460
        %2462 = vrot.lane.b32.xlu0 %v1960, 37
        %v2463 = vpop.permute.xlu0 %2462
        %2464 = vrot.lane.b32.xlu0 %v1961, 37
        %v2465 = vpop.permute.xlu0 %2464
        %vm2466 = vcmask 302080
        %v2467 = vsel %vm2466, %v2451, %v2453
        %v2468 = vsel %vm2466, %v2453, %v2455
        %v2469 = vsel %vm2466, %v2455, %v2457
        %v2470 = vsel %vm2466, %v2457, %v2459
        %v2471 = vsel %vm2466, %v2459, %v2461
        %v2472 = vsel %vm2466, %v2461, %v2463
        %v2473 = vsel %vm2466, %v2463, %v2465
        %2482 = vst [vmem:[#allocation2 + $0x340] sm:$0xff] %v2467
        %2483 = vst [vmem:[#allocation2 + $0x348] sm:$0xff] %v2468
        %2484 = vst [vmem:[#allocation2 + $0x350] sm:$0xff] %v2469
        %2485 = vst [vmem:[#allocation2 + $0x358] sm:$0xff] %v2470
        %2486 = vst [vmem:[#allocation2 + $0x360] sm:$0xff] %v2471
        %2487 = vst [vmem:[#allocation2 + $0x368] sm:$0xff] %v2472
        %2488 = vst [vmem:[#allocation2 + $0x370] sm:$0xff] %v2473
        %2489 = vst.msk [vmem:[#allocation2 + $0x378] sm:$0xff] %vm399, %v2465
        %2490 = vrot.lane.b32.xlu0 %v1954, 36
        %v2491 = vpop.permute.xlu0 %2490
        %2492 = vrot.lane.b32.xlu0 %v1955, 36
        %v2493 = vpop.permute.xlu0 %2492
        %2494 = vrot.lane.b32.xlu0 %v1956, 36
        %v2495 = vpop.permute.xlu0 %2494
        %2496 = vrot.lane.b32.xlu0 %v1957, 36
        %v2497 = vpop.permute.xlu0 %2496
        %2498 = vrot.lane.b32.xlu0 %v1958, 36
        %v2499 = vpop.permute.xlu0 %2498
        %2500 = vrot.lane.b32.xlu0 %v1959, 36
        %v2501 = vpop.permute.xlu0 %2500
        %2502 = vrot.lane.b32.xlu0 %v1960, 36
        %v2503 = vpop.permute.xlu0 %2502
        %2504 = vrot.lane.b32.xlu0 %v1961, 36
        %v2505 = vpop.permute.xlu0 %2504
        %vm2506 = vcmask 293888
        %v2507 = vsel %vm2506, %v2491, %v2493
        %v2508 = vsel %vm2506, %v2493, %v2495
        %v2509 = vsel %vm2506, %v2495, %v2497
        %v2510 = vsel %vm2506, %v2497, %v2499
        %v2511 = vsel %vm2506, %v2499, %v2501
        %v2512 = vsel %vm2506, %v2501, %v2503
        %v2513 = vsel %vm2506, %v2503, %v2505
        %2522 = vst [vmem:[#allocation2 + $0x380] sm:$0xff] %v2507
        %2523 = vst [vmem:[#allocation2 + $0x388] sm:$0xff] %v2508
        %2524 = vst [vmem:[#allocation2 + $0x390] sm:$0xff] %v2509
        %2525 = vst [vmem:[#allocation2 + $0x398] sm:$0xff] %v2510
        %2526 = vst [vmem:[#allocation2 + $0x3a0] sm:$0xff] %v2511
        %2527 = vst [vmem:[#allocation2 + $0x3a8] sm:$0xff] %v2512
        %2528 = vst [vmem:[#allocation2 + $0x3b0] sm:$0xff] %v2513
        %2529 = vst.msk [vmem:[#allocation2 + $0x3b8] sm:$0xff] %vm399, %v2505
        %2530 = vrot.lane.b32.xlu0 %v1954, 35
        %v2531 = vpop.permute.xlu0 %2530
        %2532 = vrot.lane.b32.xlu0 %v1955, 35
        %v2533 = vpop.permute.xlu0 %2532
        %2534 = vrot.lane.b32.xlu0 %v1956, 35
        %v2535 = vpop.permute.xlu0 %2534
        %2536 = vrot.lane.b32.xlu0 %v1957, 35
        %v2537 = vpop.permute.xlu0 %2536
        %2538 = vrot.lane.b32.xlu0 %v1958, 35
        %v2539 = vpop.permute.xlu0 %2538
        %2540 = vrot.lane.b32.xlu0 %v1959, 35
        %v2541 = vpop.permute.xlu0 %2540
        %2542 = vrot.lane.b32.xlu0 %v1960, 35
        %v2543 = vpop.permute.xlu0 %2542
        %2544 = vrot.lane.b32.xlu0 %v1961, 35
        %v2545 = vpop.permute.xlu0 %2544
        %v2546 = vsel %vm1160, %v2531, %v2533
        %v2547 = vsel %vm1160, %v2533, %v2535
        %v2548 = vsel %vm1160, %v2535, %v2537
        %v2549 = vsel %vm1160, %v2537, %v2539
        %v2550 = vsel %vm1160, %v2539, %v2541
        %v2551 = vsel %vm1160, %v2541, %v2543
        %v2552 = vsel %vm1160, %v2543, %v2545
        %2561 = vst [vmem:[#allocation2 + $0x3c0] sm:$0xff] %v2546
        %2562 = vst [vmem:[#allocation2 + $0x3c8] sm:$0xff] %v2547
        %2563 = vst [vmem:[#allocation2 + $0x3d0] sm:$0xff] %v2548
        %2564 = vst [vmem:[#allocation2 + $0x3d8] sm:$0xff] %v2549
        %2565 = vst [vmem:[#allocation2 + $0x3e0] sm:$0xff] %v2550
        %2566 = vst [vmem:[#allocation2 + $0x3e8] sm:$0xff] %v2551
        %2567 = vst [vmem:[#allocation2 + $0x3f0] sm:$0xff] %v2552
        %2568 = vst.msk [vmem:[#allocation2 + $0x3f8] sm:$0xff] %vm399, %v2545
        %v2569 = vld [vmem:[#allocation2] sm:$0xff]
        %v2570 = vld [vmem:[#allocation2 + $0x8] sm:$0xff]
        %v2571 = vld [vmem:[#allocation2 + $0x10] sm:$0xff]
        %v2572 = vld [vmem:[#allocation2 + $0x18] sm:$0xff]
        %v2573 = vld [vmem:[#allocation2 + $0x20] sm:$0xff]
        %v2574 = vld [vmem:[#allocation2 + $0x28] sm:$0xff]
        %v2575 = vld [vmem:[#allocation2 + $0x30] sm:$0xff]
        %v2576 = vld [vmem:[#allocation2 + $0x38] sm:$0xff]
        %v2577 = vld [vmem:[#allocation2 + $0x40] sm:$0xff]
        %v2578 = vld [vmem:[#allocation2 + $0x48] sm:$0xff]
        %v2579 = vld [vmem:[#allocation2 + $0x50] sm:$0xff]
        %v2580 = vld [vmem:[#allocation2 + $0x58] sm:$0xff]
        %v2581 = vld [vmem:[#allocation2 + $0x60] sm:$0xff]
        %v2582 = vld [vmem:[#allocation2 + $0x68] sm:$0xff]
        %v2583 = vld [vmem:[#allocation2 + $0x70] sm:$0xff]
        %v2584 = vld [vmem:[#allocation2 + $0x78] sm:$0xff]
        %v2585 = vld [vmem:[#allocation2 + $0x80] sm:$0xff]
        %v2586 = vld [vmem:[#allocation2 + $0x88] sm:$0xff]
        %v2587 = vld [vmem:[#allocation2 + $0x90] sm:$0xff]
        %v2588 = vld [vmem:[#allocation2 + $0x98] sm:$0xff]
        %v2589 = vld [vmem:[#allocation2 + $0xa0] sm:$0xff]
        %v2590 = vld [vmem:[#allocation2 + $0xa8] sm:$0xff]
        %v2591 = vld [vmem:[#allocation2 + $0xb0] sm:$0xff]
        %v2592 = vld [vmem:[#allocation2 + $0xb8] sm:$0xff]
        %v2593 = vld [vmem:[#allocation2 + $0xc0] sm:$0xff]
        %v2594 = vld [vmem:[#allocation2 + $0xc8] sm:$0xff]
        %v2595 = vld [vmem:[#allocation2 + $0xd0] sm:$0xff]
        %v2596 = vld [vmem:[#allocation2 + $0xd8] sm:$0xff]
        %v2597 = vld [vmem:[#allocation2 + $0xe0] sm:$0xff]
        %v2598 = vld [vmem:[#allocation2 + $0xe8] sm:$0xff]
        %v2599 = vld [vmem:[#allocation2 + $0xf0] sm:$0xff]
        %v2600 = vld [vmem:[#allocation2 + $0xf8] sm:$0xff]
        %v2601 = vld [vmem:[#allocation2 + $0x100] sm:$0xff]
        %v2602 = vld [vmem:[#allocation2 + $0x108] sm:$0xff]
        %v2603 = vld [vmem:[#allocation2 + $0x110] sm:$0xff]
        %v2604 = vld [vmem:[#allocation2 + $0x118] sm:$0xff]
        %v2605 = vld [vmem:[#allocation2 + $0x120] sm:$0xff]
        %v2606 = vld [vmem:[#allocation2 + $0x128] sm:$0xff]
        %v2607 = vld [vmem:[#allocation2 + $0x130] sm:$0xff]
        %v2608 = vld [vmem:[#allocation2 + $0x138] sm:$0xff]
        %v2609 = vld [vmem:[#allocation2 + $0x140] sm:$0xff]
        %v2610 = vld [vmem:[#allocation2 + $0x148] sm:$0xff]
        %v2611 = vld [vmem:[#allocation2 + $0x150] sm:$0xff]
        %v2612 = vld [vmem:[#allocation2 + $0x158] sm:$0xff]
        %v2613 = vld [vmem:[#allocation2 + $0x160] sm:$0xff]
        %v2614 = vld [vmem:[#allocation2 + $0x168] sm:$0xff]
        %v2615 = vld [vmem:[#allocation2 + $0x170] sm:$0xff]
        %v2616 = vld [vmem:[#allocation2 + $0x178] sm:$0xff]
        %v2617 = vld [vmem:[#allocation2 + $0x180] sm:$0xff]
        %v2618 = vld [vmem:[#allocation2 + $0x188] sm:$0xff]
        %v2619 = vld [vmem:[#allocation2 + $0x190] sm:$0xff]
        %v2620 = vld [vmem:[#allocation2 + $0x198] sm:$0xff]
        %v2621 = vld [vmem:[#allocation2 + $0x1a0] sm:$0xff]
        %v2622 = vld [vmem:[#allocation2 + $0x1a8] sm:$0xff]
        %v2623 = vld [vmem:[#allocation2 + $0x1b0] sm:$0xff]
        %v2624 = vld [vmem:[#allocation2 + $0x1b8] sm:$0xff]
        %v2625 = vld [vmem:[#allocation2 + $0x1c0] sm:$0xff]
        %v2626 = vld [vmem:[#allocation2 + $0x1c8] sm:$0xff]
        %v2627 = vld [vmem:[#allocation2 + $0x1d0] sm:$0xff]
        %v2628 = vld [vmem:[#allocation2 + $0x1d8] sm:$0xff]
        %v2629 = vld [vmem:[#allocation2 + $0x1e0] sm:$0xff]
        %v2630 = vld [vmem:[#allocation2 + $0x1e8] sm:$0xff]
        %v2631 = vld [vmem:[#allocation2 + $0x1f0] sm:$0xff]
        %v2632 = vld [vmem:[#allocation2 + $0x1f8] sm:$0xff]
        %v2633 = vld [vmem:[#allocation2 + $0x200] sm:$0xff]
        %v2634 = vld [vmem:[#allocation2 + $0x208] sm:$0xff]
        %v2635 = vld [vmem:[#allocation2 + $0x210] sm:$0xff]
        %v2636 = vld [vmem:[#allocation2 + $0x218] sm:$0xff]
        %v2637 = vld [vmem:[#allocation2 + $0x220] sm:$0xff]
        %v2638 = vld [vmem:[#allocation2 + $0x228] sm:$0xff]
        %v2639 = vld [vmem:[#allocation2 + $0x230] sm:$0xff]
        %v2640 = vld [vmem:[#allocation2 + $0x238] sm:$0xff]
        %v2641 = vld [vmem:[#allocation2 + $0x240] sm:$0xff]
        %v2642 = vld [vmem:[#allocation2 + $0x248] sm:$0xff]
        %v2643 = vld [vmem:[#allocation2 + $0x250] sm:$0xff]
        %v2644 = vld [vmem:[#allocation2 + $0x258] sm:$0xff]
        %v2645 = vld [vmem:[#allocation2 + $0x260] sm:$0xff]
        %v2646 = vld [vmem:[#allocation2 + $0x268] sm:$0xff]
        %v2647 = vld [vmem:[#allocation2 + $0x270] sm:$0xff]
        %v2648 = vld [vmem:[#allocation2 + $0x278] sm:$0xff]
        %v2649 = vld [vmem:[#allocation2 + $0x280] sm:$0xff]
        %v2650 = vld [vmem:[#allocation2 + $0x288] sm:$0xff]
        %v2651 = vld [vmem:[#allocation2 + $0x290] sm:$0xff]
        %v2652 = vld [vmem:[#allocation2 + $0x298] sm:$0xff]
        %v2653 = vld [vmem:[#allocation2 + $0x2a0] sm:$0xff]
        %v2654 = vld [vmem:[#allocation2 + $0x2a8] sm:$0xff]
        %v2655 = vld [vmem:[#allocation2 + $0x2b0] sm:$0xff]
        %v2656 = vld [vmem:[#allocation2 + $0x2b8] sm:$0xff]
        %v2657 = vld [vmem:[#allocation2 + $0x2c0] sm:$0xff]
        %v2658 = vld [vmem:[#allocation2 + $0x2c8] sm:$0xff]
        %v2659 = vld [vmem:[#allocation2 + $0x2d0] sm:$0xff]
        %v2660 = vld [vmem:[#allocation2 + $0x2d8] sm:$0xff]
        %v2661 = vld [vmem:[#allocation2 + $0x2e0] sm:$0xff]
        %v2662 = vld [vmem:[#allocation2 + $0x2e8] sm:$0xff]
        %v2663 = vld [vmem:[#allocation2 + $0x2f0] sm:$0xff]
        %v2664 = vld [vmem:[#allocation2 + $0x2f8] sm:$0xff]
        %v2665 = vld [vmem:[#allocation2 + $0x300] sm:$0xff]
        %v2666 = vld [vmem:[#allocation2 + $0x308] sm:$0xff]
        %v2667 = vld [vmem:[#allocation2 + $0x310] sm:$0xff]
        %v2668 = vld [vmem:[#allocation2 + $0x318] sm:$0xff]
        %v2669 = vld [vmem:[#allocation2 + $0x320] sm:$0xff]
        %v2670 = vld [vmem:[#allocation2 + $0x328] sm:$0xff]
        %v2671 = vld [vmem:[#allocation2 + $0x330] sm:$0xff]
        %v2672 = vld [vmem:[#allocation2 + $0x338] sm:$0xff]
        %v2673 = vld [vmem:[#allocation2 + $0x340] sm:$0xff]
        %v2674 = vld [vmem:[#allocation2 + $0x348] sm:$0xff]
        %v2675 = vld [vmem:[#allocation2 + $0x350] sm:$0xff]
        %v2676 = vld [vmem:[#allocation2 + $0x358] sm:$0xff]
        %v2677 = vld [vmem:[#allocation2 + $0x360] sm:$0xff]
        %v2678 = vld [vmem:[#allocation2 + $0x368] sm:$0xff]
        %v2679 = vld [vmem:[#allocation2 + $0x370] sm:$0xff]
        %v2680 = vld [vmem:[#allocation2 + $0x378] sm:$0xff]
        %v2681 = vld [vmem:[#allocation2 + $0x380] sm:$0xff]
        %v2682 = vld [vmem:[#allocation2 + $0x388] sm:$0xff]
        %v2683 = vld [vmem:[#allocation2 + $0x390] sm:$0xff]
        %v2684 = vld [vmem:[#allocation2 + $0x398] sm:$0xff]
        %v2685 = vld [vmem:[#allocation2 + $0x3a0] sm:$0xff]
        %v2686 = vld [vmem:[#allocation2 + $0x3a8] sm:$0xff]
        %v2687 = vld [vmem:[#allocation2 + $0x3b0] sm:$0xff]
        %v2688 = vld [vmem:[#allocation2 + $0x3b8] sm:$0xff]
        %v2689 = vld [vmem:[#allocation2 + $0x3c0] sm:$0xff]
        %v2690 = vld [vmem:[#allocation2 + $0x3c8] sm:$0xff]
        %v2691 = vld [vmem:[#allocation2 + $0x3d0] sm:$0xff]
        %v2692 = vld [vmem:[#allocation2 + $0x3d8] sm:$0xff]
        %v2693 = vld [vmem:[#allocation2 + $0x3e0] sm:$0xff]
        %v2694 = vld [vmem:[#allocation2 + $0x3e8] sm:$0xff]
        %v2695 = vld [vmem:[#allocation2 + $0x3f0] sm:$0xff]
        %v2696 = vld [vmem:[#allocation2 + $0x3f8] sm:$0xff]
        %v2697 = vld [vmem:[%s7] sm:$0xff]
        %2698 = vmatprep.subr.mxu0 %v2570
        %2699 = vmatpush1.msra.mxu0 %v2569
        %2700 = vmatprep.subr.mxu0 %v2578
        %2701 = vmatpush1.msra.mxu0 %v2577
        %2702 = vmatprep.subr.mxu0 %v2586
        %2703 = vmatpush1.msra.mxu0 %v2585
        %2704 = vmatprep.subr.mxu0 %v2594
        %2705 = vmatpush1.msra.mxu0 %v2593
        %2706 = vmatprep.subr.mxu0 %v2602
        %2707 = vmatpush1.msra.mxu0 %v2601
        %2708 = vmatprep.subr.mxu0 %v2610
        %2709 = vmatpush1.msra.mxu0 %v2609
        %2710 = vmatprep.subr.mxu0 %v2618
        %2711 = vmatpush1.msra.mxu0 %v2617
        %2712 = vmatprep.subr.mxu0 %v2626
        %2713 = vmatpush1.msra.mxu0 %v2625
        %2714 = vmatprep.subr.mxu0 %v2634
        %2715 = vmatpush1.msra.mxu0 %v2633
        %2716 = vmatprep.subr.mxu0 %v2642
        %2717 = vmatpush1.msra.mxu0 %v2641
        %2718 = vmatprep.subr.mxu0 %v2650
        %2719 = vmatpush1.msra.mxu0 %v2649
        %2720 = vmatprep.subr.mxu0 %v2658
        %2721 = vmatpush1.msra.mxu0 %v2657
        %2722 = vmatprep.subr.mxu0 %v2666
        %2723 = vmatpush1.msra.mxu0 %v2665
        %2724 = vmatprep.subr.mxu0 %v2674
        %2725 = vmatpush1.msra.mxu0 %v2673
        %2726 = vmatprep.subr.mxu0 %v2682
        %2727 = vmatpush1.msra.mxu0 %v2681
        %2728 = vmatprep.subr.mxu0 %v2690
        %2729 = vmatpush1.msra.mxu0 %v2689
        %2730 = vmatprep.subr.mxu0 0.0
        %2731 = vmatpush1.msra.mxu0 0.0
        %2732 = vmatprep.subr.mxu0 0.0
        %2733 = vmatpush1.msra.mxu0 0.0
        %2734 = vmatprep.subr.mxu0 0.0
        %2735 = vmatpush1.msra.mxu0 0.0
        %2736 = vmatprep.subr.mxu0 0.0
        %2737 = vmatpush1.msra.mxu0 0.0
        %2738 = vmatprep.subr.mxu0 0.0
        %2739 = vmatpush1.msra.mxu0 0.0
        %2740 = vmatprep.subr.mxu0 0.0
        %2741 = vmatpush1.msra.mxu0 0.0
        %2742 = vmatprep.subr.mxu0 0.0
        %2743 = vmatpush1.msra.mxu0 0.0
        %2744 = vmatprep.subr.mxu0 0.0
        %2745 = vmatpush1.msra.mxu0 0.0
        %2746 = vmatprep.subr.mxu0 0.0
        %2747 = vmatpush1.msra.mxu0 0.0
        %2748 = vmatprep.subr.mxu0 0.0
        %2749 = vmatpush1.msra.mxu0 0.0
        %2750 = vmatprep.subr.mxu0 0.0
        %2751 = vmatpush1.msra.mxu0 0.0
        %2752 = vmatprep.subr.mxu0 0.0
        %2753 = vmatpush1.msra.mxu0 0.0
        %2754 = vmatprep.subr.mxu0 0.0
        %2755 = vmatpush1.msra.mxu0 0.0
        %2756 = vmatprep.subr.mxu0 0.0
        %2757 = vmatpush1.msra.mxu0 0.0
        %2758 = vmatprep.subr.mxu0 0.0
        %2759 = vmatpush1.msra.mxu0 0.0
        %2760 = vmatprep.subr.mxu0 0.0
        %2761 = vmatpush1.msra.mxu0 0.0
        %2762 = vmatprep.mubr.f32.mxu0 0.0
        %2763 = vmatmul.mubr.f32.gmra.mrb[0].mxu0 %v2697
        %v2764 = vpop.f32.mrb[0].mxu0
        %v2765 = vadd.f32 0.0, %v2764
        %v2766 = vpop.f32.mrb[0].mxu0
        %v2767 = vadd.f32 0.0, %v2766
        %2768 = vdwg.mxu0
        %2769 = vmatprep.subr.mxu0 %v2572
        %2770 = vmatpush1.msra.mxu0 %v2571
        %2771 = vmatprep.subr.mxu0 %v2580
        %2772 = vmatpush1.msra.mxu0 %v2579
        %2773 = vmatprep.subr.mxu0 %v2588
        %2774 = vmatpush1.msra.mxu0 %v2587
        %2775 = vmatprep.subr.mxu0 %v2596
        %2776 = vmatpush1.msra.mxu0 %v2595
        %2777 = vmatprep.subr.mxu0 %v2604
        %2778 = vmatpush1.msra.mxu0 %v2603
        %2779 = vmatprep.subr.mxu0 %v2612
        %2780 = vmatpush1.msra.mxu0 %v2611
        %2781 = vmatprep.subr.mxu0 %v2620
        %2782 = vmatpush1.msra.mxu0 %v2619
        %2783 = vmatprep.subr.mxu0 %v2628
        %2784 = vmatpush1.msra.mxu0 %v2627
        %2785 = vmatprep.subr.mxu0 %v2636
        %2786 = vmatpush1.msra.mxu0 %v2635
        %2787 = vmatprep.subr.mxu0 %v2644
        %2788 = vmatpush1.msra.mxu0 %v2643
        %2789 = vmatprep.subr.mxu0 %v2652
        %2790 = vmatpush1.msra.mxu0 %v2651
        %2791 = vmatprep.subr.mxu0 %v2660
        %2792 = vmatpush1.msra.mxu0 %v2659
        %2793 = vmatprep.subr.mxu0 %v2668
        %2794 = vmatpush1.msra.mxu0 %v2667
        %2795 = vmatprep.subr.mxu0 %v2676
        %2796 = vmatpush1.msra.mxu0 %v2675
        %2797 = vmatprep.subr.mxu0 %v2684
        %2798 = vmatpush1.msra.mxu0 %v2683
        %2799 = vmatprep.subr.mxu0 %v2692
        %2800 = vmatpush1.msra.mxu0 %v2691
        %2801 = vmatprep.subr.mxu0 0.0
        %2802 = vmatpush1.msra.mxu0 0.0
        %2803 = vmatprep.subr.mxu0 0.0
        %2804 = vmatpush1.msra.mxu0 0.0
        %2805 = vmatprep.subr.mxu0 0.0
        %2806 = vmatpush1.msra.mxu0 0.0
        %2807 = vmatprep.subr.mxu0 0.0
        %2808 = vmatpush1.msra.mxu0 0.0
        %2809 = vmatprep.subr.mxu0 0.0
        %2810 = vmatpush1.msra.mxu0 0.0
        %2811 = vmatprep.subr.mxu0 0.0
        %2812 = vmatpush1.msra.mxu0 0.0
        %2813 = vmatprep.subr.mxu0 0.0
        %2814 = vmatpush1.msra.mxu0 0.0
        %2815 = vmatprep.subr.mxu0 0.0
        %2816 = vmatpush1.msra.mxu0 0.0
        %2817 = vmatprep.subr.mxu0 0.0
        %2818 = vmatpush1.msra.mxu0 0.0
        %2819 = vmatprep.subr.mxu0 0.0
        %2820 = vmatpush1.msra.mxu0 0.0
        %2821 = vmatprep.subr.mxu0 0.0
        %2822 = vmatpush1.msra.mxu0 0.0
        %2823 = vmatprep.subr.mxu0 0.0
        %2824 = vmatpush1.msra.mxu0 0.0
        %2825 = vmatprep.subr.mxu0 0.0
        %2826 = vmatpush1.msra.mxu0 0.0
        %2827 = vmatprep.subr.mxu0 0.0
        %2828 = vmatpush1.msra.mxu0 0.0
        %2829 = vmatprep.subr.mxu0 0.0
        %2830 = vmatpush1.msra.mxu0 0.0
        %2831 = vmatprep.subr.mxu0 0.0
        %2832 = vmatpush1.msra.mxu0 0.0
        %2833 = vmatprep.mubr.f32.mxu0 0.0
        %2834 = vmatmul.mubr.f32.gmra.mrb[0].mxu0 %v2697
        %v2835 = vpop.f32.mrb[0].mxu0
        %v2836 = vadd.f32 0.0, %v2835
        %v2837 = vpop.f32.mrb[0].mxu0
        %v2838 = vadd.f32 0.0, %v2837
        %2839 = vdwg.mxu0
        %2840 = vmatprep.subr.mxu0 %v2574
        %2841 = vmatpush1.msra.mxu0 %v2573
        %2842 = vmatprep.subr.mxu0 %v2582
        %2843 = vmatpush1.msra.mxu0 %v2581
        %2844 = vmatprep.subr.mxu0 %v2590
        %2845 = vmatpush1.msra.mxu0 %v2589
        %2846 = vmatprep.subr.mxu0 %v2598
        %2847 = vmatpush1.msra.mxu0 %v2597
        %2848 = vmatprep.subr.mxu0 %v2606
        %2849 = vmatpush1.msra.mxu0 %v2605
        %2850 = vmatprep.subr.mxu0 %v2614
        %2851 = vmatpush1.msra.mxu0 %v2613
        %2852 = vmatprep.subr.mxu0 %v2622
        %2853 = vmatpush1.msra.mxu0 %v2621
        %2854 = vmatprep.subr.mxu0 %v2630
        %2855 = vmatpush1.msra.mxu0 %v2629
        %2856 = vmatprep.subr.mxu0 %v2638
        %2857 = vmatpush1.msra.mxu0 %v2637
        %2858 = vmatprep.subr.mxu0 %v2646
        %2859 = vmatpush1.msra.mxu0 %v2645
        %2860 = vmatprep.subr.mxu0 %v2654
        %2861 = vmatpush1.msra.mxu0 %v2653
        %2862 = vmatprep.subr.mxu0 %v2662
        %2863 = vmatpush1.msra.mxu0 %v2661
        %2864 = vmatprep.subr.mxu0 %v2670
        %2865 = vmatpush1.msra.mxu0 %v2669
        %2866 = vmatprep.subr.mxu0 %v2678
        %2867 = vmatpush1.msra.mxu0 %v2677
        %2868 = vmatprep.subr.mxu0 %v2686
        %2869 = vmatpush1.msra.mxu0 %v2685
        %2870 = vmatprep.subr.mxu0 %v2694
        %2871 = vmatpush1.msra.mxu0 %v2693
        %2872 = vmatprep.subr.mxu0 0.0
        %2873 = vmatpush1.msra.mxu0 0.0
        %2874 = vmatprep.subr.mxu0 0.0
        %2875 = vmatpush1.msra.mxu0 0.0
        %2876 = vmatprep.subr.mxu0 0.0
        %2877 = vmatpush1.msra.mxu0 0.0
        %2878 = vmatprep.subr.mxu0 0.0
        %2879 = vmatpush1.msra.mxu0 0.0
        %2880 = vmatprep.subr.mxu0 0.0
        %2881 = vmatpush1.msra.mxu0 0.0
        %2882 = vmatprep.subr.mxu0 0.0
        %2883 = vmatpush1.msra.mxu0 0.0
        %2884 = vmatprep.subr.mxu0 0.0
        %2885 = vmatpush1.msra.mxu0 0.0
        %2886 = vmatprep.subr.mxu0 0.0
        %2887 = vmatpush1.msra.mxu0 0.0
        %2888 = vmatprep.subr.mxu0 0.0
        %2889 = vmatpush1.msra.mxu0 0.0
        %2890 = vmatprep.subr.mxu0 0.0
        %2891 = vmatpush1.msra.mxu0 0.0
        %2892 = vmatprep.subr.mxu0 0.0
        %2893 = vmatpush1.msra.mxu0 0.0
        %2894 = vmatprep.subr.mxu0 0.0
        %2895 = vmatpush1.msra.mxu0 0.0
        %2896 = vmatprep.subr.mxu0 0.0
        %2897 = vmatpush1.msra.mxu0 0.0
        %2898 = vmatprep.subr.mxu0 0.0
        %2899 = vmatpush1.msra.mxu0 0.0
        %2900 = vmatprep.subr.mxu0 0.0
        %2901 = vmatpush1.msra.mxu0 0.0
        %2902 = vmatprep.subr.mxu0 0.0
        %2903 = vmatpush1.msra.mxu0 0.0
        %2904 = vmatprep.mubr.f32.mxu0 0.0
        %2905 = vmatmul.mubr.f32.gmra.mrb[0].mxu0 %v2697
        %v2906 = vpop.f32.mrb[0].mxu0
        %v2907 = vadd.f32 0.0, %v2906
        %v2908 = vpop.f32.mrb[0].mxu0
        %v2909 = vadd.f32 0.0, %v2908
        %2910 = vdwg.mxu0
        %2911 = vmatprep.subr.mxu0 %v2576
        %2912 = vmatpush1.msra.mxu0 %v2575
        %2913 = vmatprep.subr.mxu0 %v2584
        %2914 = vmatpush1.msra.mxu0 %v2583
        %2915 = vmatprep.subr.mxu0 %v2592
        %2916 = vmatpush1.msra.mxu0 %v2591
        %2917 = vmatprep.subr.mxu0 %v2600
        %2918 = vmatpush1.msra.mxu0 %v2599
        %2919 = vmatprep.subr.mxu0 %v2608
        %2920 = vmatpush1.msra.mxu0 %v2607
        %2921 = vmatprep.subr.mxu0 %v2616
        %2922 = vmatpush1.msra.mxu0 %v2615
        %2923 = vmatprep.subr.mxu0 %v2624
        %2924 = vmatpush1.msra.mxu0 %v2623
        %2925 = vmatprep.subr.mxu0 %v2632
        %2926 = vmatpush1.msra.mxu0 %v2631
        %2927 = vmatprep.subr.mxu0 %v2640
        %2928 = vmatpush1.msra.mxu0 %v2639
        %2929 = vmatprep.subr.mxu0 %v2648
        %2930 = vmatpush1.msra.mxu0 %v2647
        %2931 = vmatprep.subr.mxu0 %v2656
        %2932 = vmatpush1.msra.mxu0 %v2655
        %2933 = vmatprep.subr.mxu0 %v2664
        %2934 = vmatpush1.msra.mxu0 %v2663
        %2935 = vmatprep.subr.mxu0 %v2672
        %2936 = vmatpush1.msra.mxu0 %v2671
        %2937 = vmatprep.subr.mxu0 %v2680
        %2938 = vmatpush1.msra.mxu0 %v2679
        %2939 = vmatprep.subr.mxu0 %v2688
        %2940 = vmatpush1.msra.mxu0 %v2687
        %2941 = vmatprep.subr.mxu0 %v2696
        %2942 = vmatpush1.msra.mxu0 %v2695
        %2943 = vmatprep.subr.mxu0 0.0
        %2944 = vmatpush1.msra.mxu0 0.0
        %2945 = vmatprep.subr.mxu0 0.0
        %2946 = vmatpush1.msra.mxu0 0.0
        %2947 = vmatprep.subr.mxu0 0.0
        %2948 = vmatpush1.msra.mxu0 0.0
        %2949 = vmatprep.subr.mxu0 0.0
        %2950 = vmatpush1.msra.mxu0 0.0
        %2951 = vmatprep.subr.mxu0 0.0
        %2952 = vmatpush1.msra.mxu0 0.0
        %2953 = vmatprep.subr.mxu0 0.0
        %2954 = vmatpush1.msra.mxu0 0.0
        %2955 = vmatprep.subr.mxu0 0.0
        %2956 = vmatpush1.msra.mxu0 0.0
        %2957 = vmatprep.subr.mxu0 0.0
        %2958 = vmatpush1.msra.mxu0 0.0
        %2959 = vmatprep.subr.mxu0 0.0
        %2960 = vmatpush1.msra.mxu0 0.0
        %2961 = vmatprep.subr.mxu0 0.0
        %2962 = vmatpush1.msra.mxu0 0.0
        %2963 = vmatprep.subr.mxu0 0.0
        %2964 = vmatpush1.msra.mxu0 0.0
        %2965 = vmatprep.subr.mxu0 0.0
        %2966 = vmatpush1.msra.mxu0 0.0
        %2967 = vmatprep.subr.mxu0 0.0
        %2968 = vmatpush1.msra.mxu0 0.0
        %2969 = vmatprep.subr.mxu0 0.0
        %2970 = vmatpush1.msra.mxu0 0.0
        %2971 = vmatprep.subr.mxu0 0.0
        %2972 = vmatpush1.msra.mxu0 0.0
        %2973 = vmatprep.subr.mxu0 0.0
        %2974 = vmatpush1.msra.mxu0 0.0
        %2975 = vmatprep.mubr.f32.mxu0 0.0
        %2976 = vmatmul.mubr.f32.gmra.mrb[0].mxu0 %v2697
        %v2977 = vpop.f32.mrb[0].mxu0
        %v2978 = vadd.f32 0.0, %v2977
        %v2979 = vpop.f32.mrb[0].mxu0
        %v2980 = vadd.f32 0.0, %v2979
        %2981 = vdwg.mxu0
        %v2982 = vlaneseq
        %v2983 = vshrl.u32 %v2982, 7
        %v2984 = vadd.s32 %v2983, 8
        %v2985 = vadd.s32 %v2983, 16
        %v2986 = vadd.s32 %v2983, 24
        %v2987 = vadd.s32 %v2983, 32
        %v2988 = vadd.s32 %v2983, 40
        %v2989 = vadd.s32 %v2983, 48
        %v2990 = vadd.s32 %v2983, 56
        %v2991 = vadd.s32 %v2983, 64
        %v2992 = vadd.s32 %v2983, 72
        %v2993 = vadd.s32 %v2983, 80
        %v2994 = vadd.s32 %v2983, 88
        %v2995 = vadd.s32 %v2983, 96
        %v2996 = vadd.s32 %v2983, 104
        %v2997 = vadd.s32 %v2983, 112
        %v2998 = vadd.s32 %v2983, 120
        %v2999 = vadd.s32 %v2983, 128
        %v3000 = vadd.s32 %v2983, 136
        %v3001 = vadd.s32 %v2983, 144
        %v3002 = vadd.s32 %v2983, 152
        %v3003 = vadd.s32 %v2983, 160
        %v3004 = vadd.s32 %v2983, 168
        %v3005 = vadd.s32 %v2983, 176
        %v3006 = vadd.s32 %v2983, 184
        %v3007 = vadd.s32 %v2983, 192
        %v3008 = vadd.s32 %v2983, 200
        %v3009 = vadd.s32 %v2983, 208
        %v3010 = vadd.s32 %v2983, 216
        %v3011 = vadd.s32 %v2983, 224
        %v3012 = vadd.s32 %v2983, 232
        %v3013 = vadd.s32 %v2983, 240
        %v3014 = vadd.s32 %v2983, 248
        %v3015 = vadd.s32 %v2983, 256
        %v3016 = vadd.s32 %v2983, 264
        %v3017 = vadd.s32 %v2983, 272
        %v3018 = vadd.s32 %v2983, 280
        %v3019 = vadd.s32 %v2983, 288
        %v3020 = vadd.s32 %v2983, 296
        %v3021 = vadd.s32 %v2983, 304
        %v3022 = vadd.s32 %v2983, 312
        %v3023 = vadd.s32 %v2983, 320
        %v3024 = vadd.s32 %v2983, 328
        %v3025 = vadd.s32 %v2983, 336
        %v3026 = vadd.s32 %v2983, 344
        %v3027 = vadd.s32 %v2983, 352
        %v3028 = vadd.s32 %v2983, 360
        %v3029 = vadd.s32 %v2983, 368
        %v3030 = vadd.s32 %v2983, 376
        %v3031 = vadd.s32 %v2983, 384
        %v3032 = vadd.s32 %v2983, 392
        %v3033 = vadd.s32 %v2983, 400
        %v3034 = vadd.s32 %v2983, 408
        %v3035 = vadd.s32 %v2983, 416
        %v3036 = vadd.s32 %v2983, 424
        %v3037 = vadd.s32 %v2983, 432
        %v3038 = vadd.s32 %v2983, 440
        %v3039 = vadd.s32 %v2983, 448
        %v3040 = vadd.s32 %v2983, 456
        %v3041 = vadd.s32 %v2983, 464
        %v3042 = vadd.s32 %v2983, 472
        %v3043 = vadd.s32 %v2983, 480
        %v3044 = vadd.s32 %v2983, 488
        %v3045 = vadd.s32 %v2983, 496
        %v3046 = vadd.s32 %v2983, 504
        %v3047 = vadd.s32 %v2983, 512
        %v3048 = vadd.s32 %v2983, 520
        %v3049 = vadd.s32 %v2983, 528
        %v3050 = vadd.s32 %v2983, 536
        %v3051 = vadd.s32 %v2983, 544
        %v3052 = vadd.s32 %v2983, 552
        %v3053 = vadd.s32 %v2983, 560
        %v3054 = vadd.s32 %v2983, 568
        %v3055 = vadd.s32 %v2983, 576
        %v3056 = vadd.s32 %v2983, 584
        %v3057 = vadd.s32 %v2983, 592
        %v3058 = vadd.s32 %v2983, 600
        %v3059 = vadd.s32 %v2983, 608
        %v3060 = vadd.s32 %v2983, 616
        %v3061 = vadd.s32 %v2983, 624
        %v3062 = vadd.s32 %v2983, 632
        %v3063 = vadd.s32 %v2983, 640
        %v3064 = vadd.s32 %v2983, 648
        %v3065 = vadd.s32 %v2983, 656
        %v3066 = vadd.s32 %v2983, 664
        %v3067 = vadd.s32 %v2983, 672
        %v3068 = vadd.s32 %v2983, 680
        %v3069 = vadd.s32 %v2983, 688
        %v3070 = vadd.s32 %v2983, 696
        %v3071 = vadd.s32 %v2983, 704
        %v3072 = vadd.s32 %v2983, 712
        %v3073 = vadd.s32 %v2983, 720
        %v3074 = vadd.s32 %v2983, 728
        %v3075 = vadd.s32 %v2983, 736
        %v3076 = vadd.s32 %v2983, 744
        %v3077 = vadd.s32 %v2983, 752
        %v3078 = vadd.s32 %v2983, 760
        %v3079 = vadd.s32 %v2983, 768
        %v3080 = vadd.s32 %v2983, 776
        %v3081 = vadd.s32 %v2983, 784
        %v3082 = vadd.s32 %v2983, 792
        %v3083 = vadd.s32 %v2983, 800
        %v3084 = vadd.s32 %v2983, 808
        %v3085 = vadd.s32 %v2983, 816
        %v3086 = vadd.s32 %v2983, 824
        %v3087 = vadd.s32 %v2983, 832
        %v3088 = vadd.s32 %v2983, 840
        %v3089 = vadd.s32 %v2983, 848
        %v3090 = vadd.s32 %v2983, 856
        %v3091 = vadd.s32 %v2983, 864
        %v3092 = vadd.s32 %v2983, 872
        %v3093 = vadd.s32 %v2983, 880
        %v3094 = vadd.s32 %v2983, 888
        %v3095 = vadd.s32 %v2983, 896
        %v3096 = vld [vmem:[%s2] sm:$0x1]
        %v3097 = vlaneseq
        %v3098 = vshrl.u32 %v3097, 7
        %v3099 = vsub.s32 0, %v3098
        %v3100 = vrot.slane %v3096, %v3099
        %vm3101 = vcmp.eq.s32.totalorder %v2983, %v3100
        %vm3102 = vcmp.eq.s32.totalorder %v2984, %v3100
        %vm3103 = vcmp.eq.s32.totalorder %v2985, %v3100
        %vm3104 = vcmp.eq.s32.totalorder %v2986, %v3100
        %vm3105 = vcmp.eq.s32.totalorder %v2987, %v3100
        %vm3106 = vcmp.eq.s32.totalorder %v2988, %v3100
        %vm3107 = vcmp.eq.s32.totalorder %v2989, %v3100
        %vm3108 = vcmp.eq.s32.totalorder %v2990, %v3100
        %vm3109 = vcmp.eq.s32.totalorder %v2991, %v3100
        %vm3110 = vcmp.eq.s32.totalorder %v2992, %v3100
        %vm3111 = vcmp.eq.s32.totalorder %v2993, %v3100
        %vm3112 = vcmp.eq.s32.totalorder %v2994, %v3100
        %vm3113 = vcmp.eq.s32.totalorder %v2995, %v3100
        %vm3114 = vcmp.eq.s32.totalorder %v2996, %v3100
        %vm3115 = vcmp.eq.s32.totalorder %v2997, %v3100
        %vm3116 = vcmp.eq.s32.totalorder %v2998, %v3100
        %vm3117 = vcmp.eq.s32.totalorder %v2999, %v3100
        %vm3118 = vcmp.eq.s32.totalorder %v3000, %v3100
        %vm3119 = vcmp.eq.s32.totalorder %v3001, %v3100
        %vm3120 = vcmp.eq.s32.totalorder %v3002, %v3100
        %vm3121 = vcmp.eq.s32.totalorder %v3003, %v3100
        %vm3122 = vcmp.eq.s32.totalorder %v3004, %v3100
        %vm3123 = vcmp.eq.s32.totalorder %v3005, %v3100
        %vm3124 = vcmp.eq.s32.totalorder %v3006, %v3100
        %vm3125 = vcmp.eq.s32.totalorder %v3007, %v3100
        %vm3126 = vcmp.eq.s32.totalorder %v3008, %v3100
        %vm3127 = vcmp.eq.s32.totalorder %v3009, %v3100
        %vm3128 = vcmp.eq.s32.totalorder %v3010, %v3100
        %vm3129 = vcmp.eq.s32.totalorder %v3011, %v3100
        %vm3130 = vcmp.eq.s32.totalorder %v3012, %v3100
        %vm3131 = vcmp.eq.s32.totalorder %v3013, %v3100
        %vm3132 = vcmp.eq.s32.totalorder %v3014, %v3100
        %vm3133 = vcmp.eq.s32.totalorder %v3015, %v3100
        %vm3134 = vcmp.eq.s32.totalorder %v3016, %v3100
        %vm3135 = vcmp.eq.s32.totalorder %v3017, %v3100
        %vm3136 = vcmp.eq.s32.totalorder %v3018, %v3100
        %vm3137 = vcmp.eq.s32.totalorder %v3019, %v3100
        %vm3138 = vcmp.eq.s32.totalorder %v3020, %v3100
        %vm3139 = vcmp.eq.s32.totalorder %v3021, %v3100
        %vm3140 = vcmp.eq.s32.totalorder %v3022, %v3100
        %vm3141 = vcmp.eq.s32.totalorder %v3023, %v3100
        %vm3142 = vcmp.eq.s32.totalorder %v3024, %v3100
        %vm3143 = vcmp.eq.s32.totalorder %v3025, %v3100
        %vm3144 = vcmp.eq.s32.totalorder %v3026, %v3100
        %vm3145 = vcmp.eq.s32.totalorder %v3027, %v3100
        %vm3146 = vcmp.eq.s32.totalorder %v3028, %v3100
        %vm3147 = vcmp.eq.s32.totalorder %v3029, %v3100
        %vm3148 = vcmp.eq.s32.totalorder %v3030, %v3100
        %vm3149 = vcmp.eq.s32.totalorder %v3031, %v3100
        %vm3150 = vcmp.eq.s32.totalorder %v3032, %v3100
        %vm3151 = vcmp.eq.s32.totalorder %v3033, %v3100
        %vm3152 = vcmp.eq.s32.totalorder %v3034, %v3100
        %vm3153 = vcmp.eq.s32.totalorder %v3035, %v3100
        %vm3154 = vcmp.eq.s32.totalorder %v3036, %v3100
        %vm3155 = vcmp.eq.s32.totalorder %v3037, %v3100
        %vm3156 = vcmp.eq.s32.totalorder %v3038, %v3100
        %vm3157 = vcmp.eq.s32.totalorder %v3039, %v3100
        %vm3158 = vcmp.eq.s32.totalorder %v3040, %v3100
        %vm3159 = vcmp.eq.s32.totalorder %v3041, %v3100
        %vm3160 = vcmp.eq.s32.totalorder %v3042, %v3100
        %vm3161 = vcmp.eq.s32.totalorder %v3043, %v3100
        %vm3162 = vcmp.eq.s32.totalorder %v3044, %v3100
        %vm3163 = vcmp.eq.s32.totalorder %v3045, %v3100
        %vm3164 = vcmp.eq.s32.totalorder %v3046, %v3100
        %vm3165 = vcmp.eq.s32.totalorder %v3047, %v3100
        %vm3166 = vcmp.eq.s32.totalorder %v3048, %v3100
        %vm3167 = vcmp.eq.s32.totalorder %v3049, %v3100
        %vm3168 = vcmp.eq.s32.totalorder %v3050, %v3100
        %vm3169 = vcmp.eq.s32.totalorder %v3051, %v3100
        %vm3170 = vcmp.eq.s32.totalorder %v3052, %v3100
        %vm3171 = vcmp.eq.s32.totalorder %v3053, %v3100
        %vm3172 = vcmp.eq.s32.totalorder %v3054, %v3100
        %vm3173 = vcmp.eq.s32.totalorder %v3055, %v3100
        %vm3174 = vcmp.eq.s32.totalorder %v3056, %v3100
        %vm3175 = vcmp.eq.s32.totalorder %v3057, %v3100
        %vm3176 = vcmp.eq.s32.totalorder %v3058, %v3100
        %vm3177 = vcmp.eq.s32.totalorder %v3059, %v3100
        %vm3178 = vcmp.eq.s32.totalorder %v3060, %v3100
        %vm3179 = vcmp.eq.s32.totalorder %v3061, %v3100
        %vm3180 = vcmp.eq.s32.totalorder %v3062, %v3100
        %vm3181 = vcmp.eq.s32.totalorder %v3063, %v3100
        %vm3182 = vcmp.eq.s32.totalorder %v3064, %v3100
        %vm3183 = vcmp.eq.s32.totalorder %v3065, %v3100
        %vm3184 = vcmp.eq.s32.totalorder %v3066, %v3100
        %vm3185 = vcmp.eq.s32.totalorder %v3067, %v3100
        %vm3186 = vcmp.eq.s32.totalorder %v3068, %v3100
        %vm3187 = vcmp.eq.s32.totalorder %v3069, %v3100
        %vm3188 = vcmp.eq.s32.totalorder %v3070, %v3100
        %vm3189 = vcmp.eq.s32.totalorder %v3071, %v3100
        %vm3190 = vcmp.eq.s32.totalorder %v3072, %v3100
        %vm3191 = vcmp.eq.s32.totalorder %v3073, %v3100
        %vm3192 = vcmp.eq.s32.totalorder %v3074, %v3100
        %vm3193 = vcmp.eq.s32.totalorder %v3075, %v3100
        %vm3194 = vcmp.eq.s32.totalorder %v3076, %v3100
        %vm3195 = vcmp.eq.s32.totalorder %v3077, %v3100
        %vm3196 = vcmp.eq.s32.totalorder %v3078, %v3100
        %vm3197 = vcmp.eq.s32.totalorder %v3079, %v3100
        %vm3198 = vcmp.eq.s32.totalorder %v3080, %v3100
        %vm3199 = vcmp.eq.s32.totalorder %v3081, %v3100
        %vm3200 = vcmp.eq.s32.totalorder %v3082, %v3100
        %vm3201 = vcmp.eq.s32.totalorder %v3083, %v3100
        %vm3202 = vcmp.eq.s32.totalorder %v3084, %v3100
        %vm3203 = vcmp.eq.s32.totalorder %v3085, %v3100
        %vm3204 = vcmp.eq.s32.totalorder %v3086, %v3100
        %vm3205 = vcmp.eq.s32.totalorder %v3087, %v3100
        %vm3206 = vcmp.eq.s32.totalorder %v3088, %v3100
        %vm3207 = vcmp.eq.s32.totalorder %v3089, %v3100
        %vm3208 = vcmp.eq.s32.totalorder %v3090, %v3100
        %vm3209 = vcmp.eq.s32.totalorder %v3091, %v3100
        %vm3210 = vcmp.eq.s32.totalorder %v3092, %v3100
        %vm3211 = vcmp.eq.s32.totalorder %v3093, %v3100
        %vm3212 = vcmp.eq.s32.totalorder %v3094, %v3100
        %vm3213 = vcmp.eq.s32.totalorder %v3095, %v3100
        %v3214 = vsel %vm3101, 1, 0
        %v3215 = vsel %vm3102, 1, 0
        %v3216 = vsel %vm3103, 1, 0
        %v3217 = vsel %vm3104, 1, 0
        %v3218 = vsel %vm3105, 1, 0
        %v3219 = vsel %vm3106, 1, 0
        %v3220 = vsel %vm3107, 1, 0
        %v3221 = vsel %vm3108, 1, 0
        %v3222 = vsel %vm3109, 1, 0
        %v3223 = vsel %vm3110, 1, 0
        %v3224 = vsel %vm3111, 1, 0
        %v3225 = vsel %vm3112, 1, 0
        %v3226 = vsel %vm3113, 1, 0
        %v3227 = vsel %vm3114, 1, 0
        %v3228 = vsel %vm3115, 1, 0
        %v3229 = vsel %vm3116, 1, 0
        %v3230 = vsel %vm3117, 1, 0
        %v3231 = vsel %vm3118, 1, 0
        %v3232 = vsel %vm3119, 1, 0
        %v3233 = vsel %vm3120, 1, 0
        %v3234 = vsel %vm3121, 1, 0
        %v3235 = vsel %vm3122, 1, 0
        %v3236 = vsel %vm3123, 1, 0
        %v3237 = vsel %vm3124, 1, 0
        %v3238 = vsel %vm3125, 1, 0
        %v3239 = vsel %vm3126, 1, 0
        %v3240 = vsel %vm3127, 1, 0
        %v3241 = vsel %vm3128, 1, 0
        %v3242 = vsel %vm3129, 1, 0
        %v3243 = vsel %vm3130, 1, 0
        %v3244 = vsel %vm3131, 1, 0
        %v3245 = vsel %vm3132, 1, 0
        %v3246 = vsel %vm3133, 1, 0
        %v3247 = vsel %vm3134, 1, 0
        %v3248 = vsel %vm3135, 1, 0
        %v3249 = vsel %vm3136, 1, 0
        %v3250 = vsel %vm3137, 1, 0
        %v3251 = vsel %vm3138, 1, 0
        %v3252 = vsel %vm3139, 1, 0
        %v3253 = vsel %vm3140, 1, 0
        %v3254 = vsel %vm3141, 1, 0
        %v3255 = vsel %vm3142, 1, 0
        %v3256 = vsel %vm3143, 1, 0
        %v3257 = vsel %vm3144, 1, 0
        %v3258 = vsel %vm3145, 1, 0
        %v3259 = vsel %vm3146, 1, 0
        %v3260 = vsel %vm3147, 1, 0
        %v3261 = vsel %vm3148, 1, 0
        %v3262 = vsel %vm3149, 1, 0
        %v3263 = vsel %vm3150, 1, 0
        %v3264 = vsel %vm3151, 1, 0
        %v3265 = vsel %vm3152, 1, 0
        %v3266 = vsel %vm3153, 1, 0
        %v3267 = vsel %vm3154, 1, 0
        %v3268 = vsel %vm3155, 1, 0
        %v3269 = vsel %vm3156, 1, 0
        %v3270 = vsel %vm3157, 1, 0
        %v3271 = vsel %vm3158, 1, 0
        %v3272 = vsel %vm3159, 1, 0
        %v3273 = vsel %vm3160, 1, 0
        %v3274 = vsel %vm3161, 1, 0
        %v3275 = vsel %vm3162, 1, 0
        %v3276 = vsel %vm3163, 1, 0
        %v3277 = vsel %vm3164, 1, 0
        %v3278 = vsel %vm3165, 1, 0
        %v3279 = vsel %vm3166, 1, 0
        %v3280 = vsel %vm3167, 1, 0
        %v3281 = vsel %vm3168, 1, 0
        %v3282 = vsel %vm3169, 1, 0
        %v3283 = vsel %vm3170, 1, 0
        %v3284 = vsel %vm3171, 1, 0
        %v3285 = vsel %vm3172, 1, 0
        %v3286 = vsel %vm3173, 1, 0
        %v3287 = vsel %vm3174, 1, 0
        %v3288 = vsel %vm3175, 1, 0
        %v3289 = vsel %vm3176, 1, 0
        %v3290 = vsel %vm3177, 1, 0
        %v3291 = vsel %vm3178, 1, 0
        %v3292 = vsel %vm3179, 1, 0
        %v3293 = vsel %vm3180, 1, 0
        %v3294 = vsel %vm3181, 1, 0
        %v3295 = vsel %vm3182, 1, 0
        %v3296 = vsel %vm3183, 1, 0
        %v3297 = vsel %vm3184, 1, 0
        %v3298 = vsel %vm3185, 1, 0
        %v3299 = vsel %vm3186, 1, 0
        %v3300 = vsel %vm3187, 1, 0
        %v3301 = vsel %vm3188, 1, 0
        %v3302 = vsel %vm3189, 1, 0
        %v3303 = vsel %vm3190, 1, 0
        %v3304 = vsel %vm3191, 1, 0
        %v3305 = vsel %vm3192, 1, 0
        %v3306 = vsel %vm3193, 1, 0
        %v3307 = vsel %vm3194, 1, 0
        %v3308 = vsel %vm3195, 1, 0
        %v3309 = vsel %vm3196, 1, 0
        %v3310 = vsel %vm3197, 1, 0
        %v3311 = vsel %vm3198, 1, 0
        %v3312 = vsel %vm3199, 1, 0
        %v3313 = vsel %vm3200, 1, 0
        %v3314 = vsel %vm3201, 1, 0
        %v3315 = vsel %vm3202, 1, 0
        %v3316 = vsel %vm3203, 1, 0
        %v3317 = vsel %vm3204, 1, 0
        %v3318 = vsel %vm3205, 1, 0
        %v3319 = vsel %vm3206, 1, 0
        %v3320 = vsel %vm3207, 1, 0
        %v3321 = vsel %vm3208, 1, 0
        %v3322 = vsel %vm3209, 1, 0
        %v3323 = vsel %vm3210, 1, 0
        %v3324 = vsel %vm3211, 1, 0
        %v3325 = vsel %vm3212, 1, 0
        %v3326 = vsel %vm3213, 1, 0
        %v3327 = vcvt.s32.f32 %v3214
        %v3328 = vcvt.s32.f32 %v3215
        %v3329 = vcvt.s32.f32 %v3216
        %v3330 = vcvt.s32.f32 %v3217
        %v3331 = vcvt.s32.f32 %v3218
        %v3332 = vcvt.s32.f32 %v3219
        %v3333 = vcvt.s32.f32 %v3220
        %v3334 = vcvt.s32.f32 %v3221
        %v3335 = vcvt.s32.f32 %v3222
        %v3336 = vcvt.s32.f32 %v3223
        %v3337 = vcvt.s32.f32 %v3224
        %v3338 = vcvt.s32.f32 %v3225
        %v3339 = vcvt.s32.f32 %v3226
        %v3340 = vcvt.s32.f32 %v3227
        %v3341 = vcvt.s32.f32 %v3228
        %v3342 = vcvt.s32.f32 %v3229
        %v3343 = vcvt.s32.f32 %v3230
        %v3344 = vcvt.s32.f32 %v3231
        %v3345 = vcvt.s32.f32 %v3232
        %v3346 = vcvt.s32.f32 %v3233
        %v3347 = vcvt.s32.f32 %v3234
        %v3348 = vcvt.s32.f32 %v3235
        %v3349 = vcvt.s32.f32 %v3236
        %v3350 = vcvt.s32.f32 %v3237
        %v3351 = vcvt.s32.f32 %v3238
        %v3352 = vcvt.s32.f32 %v3239
        %v3353 = vcvt.s32.f32 %v3240
        %v3354 = vcvt.s32.f32 %v3241
        %v3355 = vcvt.s32.f32 %v3242
        %v3356 = vcvt.s32.f32 %v3243
        %v3357 = vcvt.s32.f32 %v3244
        %v3358 = vcvt.s32.f32 %v3245
        %v3359 = vcvt.s32.f32 %v3246
        %v3360 = vcvt.s32.f32 %v3247
        %v3361 = vcvt.s32.f32 %v3248
        %v3362 = vcvt.s32.f32 %v3249
        %v3363 = vcvt.s32.f32 %v3250
        %v3364 = vcvt.s32.f32 %v3251
        %v3365 = vcvt.s32.f32 %v3252
        %v3366 = vcvt.s32.f32 %v3253
        %v3367 = vcvt.s32.f32 %v3254
        %v3368 = vcvt.s32.f32 %v3255
        %v3369 = vcvt.s32.f32 %v3256
        %v3370 = vcvt.s32.f32 %v3257
        %v3371 = vcvt.s32.f32 %v3258
        %v3372 = vcvt.s32.f32 %v3259
        %v3373 = vcvt.s32.f32 %v3260
        %v3374 = vcvt.s32.f32 %v3261
        %v3375 = vcvt.s32.f32 %v3262
        %v3376 = vcvt.s32.f32 %v3263
        %v3377 = vcvt.s32.f32 %v3264
        %v3378 = vcvt.s32.f32 %v3265
        %v3379 = vcvt.s32.f32 %v3266
        %v3380 = vcvt.s32.f32 %v3267
        %v3381 = vcvt.s32.f32 %v3268
        %v3382 = vcvt.s32.f32 %v3269
        %v3383 = vcvt.s32.f32 %v3270
        %v3384 = vcvt.s32.f32 %v3271
        %v3385 = vcvt.s32.f32 %v3272
        %v3386 = vcvt.s32.f32 %v3273
        %v3387 = vcvt.s32.f32 %v3274
        %v3388 = vcvt.s32.f32 %v3275
        %v3389 = vcvt.s32.f32 %v3276
        %v3390 = vcvt.s32.f32 %v3277
        %v3391 = vcvt.s32.f32 %v3278
        %v3392 = vcvt.s32.f32 %v3279
        %v3393 = vcvt.s32.f32 %v3280
        %v3394 = vcvt.s32.f32 %v3281
        %v3395 = vcvt.s32.f32 %v3282
        %v3396 = vcvt.s32.f32 %v3283
        %v3397 = vcvt.s32.f32 %v3284
        %v3398 = vcvt.s32.f32 %v3285
        %v3399 = vcvt.s32.f32 %v3286
        %v3400 = vcvt.s32.f32 %v3287
        %v3401 = vcvt.s32.f32 %v3288
        %v3402 = vcvt.s32.f32 %v3289
        %v3403 = vcvt.s32.f32 %v3290
        %v3404 = vcvt.s32.f32 %v3291
        %v3405 = vcvt.s32.f32 %v3292
        %v3406 = vcvt.s32.f32 %v3293
        %v3407 = vcvt.s32.f32 %v3294
        %v3408 = vcvt.s32.f32 %v3295
        %v3409 = vcvt.s32.f32 %v3296
        %v3410 = vcvt.s32.f32 %v3297
        %v3411 = vcvt.s32.f32 %v3298
        %v3412 = vcvt.s32.f32 %v3299
        %v3413 = vcvt.s32.f32 %v3300
        %v3414 = vcvt.s32.f32 %v3301
        %v3415 = vcvt.s32.f32 %v3302
        %v3416 = vcvt.s32.f32 %v3303
        %v3417 = vcvt.s32.f32 %v3304
        %v3418 = vcvt.s32.f32 %v3305
        %v3419 = vcvt.s32.f32 %v3306
        %v3420 = vcvt.s32.f32 %v3307
        %v3421 = vcvt.s32.f32 %v3308
        %v3422 = vcvt.s32.f32 %v3309
        %v3423 = vcvt.s32.f32 %v3310
        %v3424 = vcvt.s32.f32 %v3311
        %v3425 = vcvt.s32.f32 %v3312
        %v3426 = vcvt.s32.f32 %v3313
        %v3427 = vcvt.s32.f32 %v3314
        %v3428 = vcvt.s32.f32 %v3315
        %v3429 = vcvt.s32.f32 %v3316
        %v3430 = vcvt.s32.f32 %v3317
        %v3431 = vcvt.s32.f32 %v3318
        %v3432 = vcvt.s32.f32 %v3319
        %v3433 = vcvt.s32.f32 %v3320
        %v3434 = vcvt.s32.f32 %v3321
        %v3435 = vcvt.s32.f32 %v3322
        %v3436 = vcvt.s32.f32 %v3323
        %v3437 = vcvt.s32.f32 %v3324
        %v3438 = vcvt.s32.f32 %v3325
        %v3439 = vcvt.s32.f32 %v3326
        %v3440 = vld [vmem:[%s8] sm:$0xff]
        %3442 = vset.pattern.permute.xlu0 0
        %3443 = vperm.xlu0 %3442, %v3440
        %v3444 = vpop.permute.xlu0 %3443
        %v3447 = vsel %vm399, %v2980, 0
        %vm3449 = vcmask 1043456
        %v3451 = vsel %vm3449, %v3439, 0
        %3453 = vmatprep.subr.mxu0 0.0
        %3454 = vmatpush1.msra.mxu0 %v3327
        %3455 = vmatprep.subr.mxu0 0.0
        %3456 = vmatpush1.msra.mxu0 %v3328
        %3457 = vmatprep.subr.mxu0 0.0
        %3458 = vmatpush1.msra.mxu0 %v3329
        %3459 = vmatprep.subr.mxu0 0.0
        %3460 = vmatpush1.msra.mxu0 %v3330
        %3461 = vmatprep.subr.mxu0 0.0
        %3462 = vmatpush1.msra.mxu0 %v3331
        %3463 = vmatprep.subr.mxu0 0.0
        %3464 = vmatpush1.msra.mxu0 %v3332
        %3465 = vmatprep.subr.mxu0 0.0
        %3466 = vmatpush1.msra.mxu0 %v3333
        %3467 = vmatprep.subr.mxu0 0.0
        %3468 = vmatpush1.msra.mxu0 %v3334
        %3469 = vmatprep.subr.mxu0 0.0
        %3470 = vmatpush1.msra.mxu0 %v3335
        %3471 = vmatprep.subr.mxu0 0.0
        %3472 = vmatpush1.msra.mxu0 %v3336
        %3473 = vmatprep.subr.mxu0 0.0
        %3474 = vmatpush1.msra.mxu0 %v3337
        %3475 = vmatprep.subr.mxu0 0.0
        %3476 = vmatpush1.msra.mxu0 %v3338
        %3477 = vmatprep.subr.mxu0 0.0
        %3478 = vmatpush1.msra.mxu0 %v3339
        %3479 = vmatprep.subr.mxu0 0.0
        %3480 = vmatpush1.msra.mxu0 %v3340
        %3481 = vmatprep.subr.mxu0 0.0
        %3482 = vmatpush1.msra.mxu0 %v3341
        %3483 = vmatprep.subr.mxu0 0.0
        %3484 = vmatpush1.msra.mxu0 %v3342
        %3485 = vmatprep.subr.mxu0 0.0
        %3486 = vmatpush1.msra.mxu0 %v3343
        %3487 = vmatprep.subr.mxu0 0.0
        %3488 = vmatpush1.msra.mxu0 %v3344
        %3489 = vmatprep.subr.mxu0 0.0
        %3490 = vmatpush1.msra.mxu0 %v3345
        %3491 = vmatprep.subr.mxu0 0.0
        %3492 = vmatpush1.msra.mxu0 %v3346
        %3493 = vmatprep.subr.mxu0 0.0
        %3494 = vmatpush1.msra.mxu0 %v3347
        %3495 = vmatprep.subr.mxu0 0.0
        %3496 = vmatpush1.msra.mxu0 %v3348
        %3497 = vmatprep.subr.mxu0 0.0
        %3498 = vmatpush1.msra.mxu0 %v3349
        %3499 = vmatprep.subr.mxu0 0.0
        %3500 = vmatpush1.msra.mxu0 %v3350
        %3501 = vmatprep.subr.mxu0 0.0
        %3502 = vmatpush1.msra.mxu0 %v3351
        %3503 = vmatprep.subr.mxu0 0.0
        %3504 = vmatpush1.msra.mxu0 %v3352
        %3505 = vmatprep.subr.mxu0 0.0
        %3506 = vmatpush1.msra.mxu0 %v3353
        %3507 = vmatprep.subr.mxu0 0.0
        %3508 = vmatpush1.msra.mxu0 %v3354
        %3509 = vmatprep.subr.mxu0 0.0
        %3510 = vmatpush1.msra.mxu0 %v3355
        %3511 = vmatprep.subr.mxu0 0.0
        %3512 = vmatpush1.msra.mxu0 %v3356
        %3513 = vmatprep.subr.mxu0 0.0
        %3514 = vmatpush1.msra.mxu0 %v3357
        %3515 = vmatprep.subr.mxu0 0.0
        %3516 = vmatpush1.msra.mxu0 %v3358
        %3517 = vmatprep.mubr.f32.mxu0 %v2767
        %3518 = vmatmul.mubr.f32.gmra.mrb[0].mxu0 %v2765
        %v3519 = vpop.f32.mrb[0].mxu0
        %v3520 = vadd.f32 %v3444, %v3519
        %v3521 = vpop.f32.mrb[0].mxu0
        %3522 = vdwg.mxu0
        %3523 = vmatprep.subr.mxu0 0.0
        %3524 = vmatpush1.msra.mxu0 %v3359
        %3525 = vmatprep.subr.mxu0 0.0
        %3526 = vmatpush1.msra.mxu0 %v3360
        %3527 = vmatprep.subr.mxu0 0.0
        %3528 = vmatpush1.msra.mxu0 %v3361
        %3529 = vmatprep.subr.mxu0 0.0
        %3530 = vmatpush1.msra.mxu0 %v3362
        %3531 = vmatprep.subr.mxu0 0.0
        %3532 = vmatpush1.msra.mxu0 %v3363
        %3533 = vmatprep.subr.mxu0 0.0
        %3534 = vmatpush1.msra.mxu0 %v3364
        %3535 = vmatprep.subr.mxu0 0.0
        %3536 = vmatpush1.msra.mxu0 %v3365
        %3537 = vmatprep.subr.mxu0 0.0
        %3538 = vmatpush1.msra.mxu0 %v3366
        %3539 = vmatprep.subr.mxu0 0.0
        %3540 = vmatpush1.msra.mxu0 %v3367
        %3541 = vmatprep.subr.mxu0 0.0
        %3542 = vmatpush1.msra.mxu0 %v3368
        %3543 = vmatprep.subr.mxu0 0.0
        %3544 = vmatpush1.msra.mxu0 %v3369
        %3545 = vmatprep.subr.mxu0 0.0
        %3546 = vmatpush1.msra.mxu0 %v3370
        %3547 = vmatprep.subr.mxu0 0.0
        %3548 = vmatpush1.msra.mxu0 %v3371
        %3549 = vmatprep.subr.mxu0 0.0
        %3550 = vmatpush1.msra.mxu0 %v3372
        %3551 = vmatprep.subr.mxu0 0.0
        %3552 = vmatpush1.msra.mxu0 %v3373
        %3553 = vmatprep.subr.mxu0 0.0
        %3554 = vmatpush1.msra.mxu0 %v3374
        %3555 = vmatprep.subr.mxu0 0.0
        %3556 = vmatpush1.msra.mxu0 %v3375
        %3557 = vmatprep.subr.mxu0 0.0
        %3558 = vmatpush1.msra.mxu0 %v3376
        %3559 = vmatprep.subr.mxu0 0.0
        %3560 = vmatpush1.msra.mxu0 %v3377
        %3561 = vmatprep.subr.mxu0 0.0
        %3562 = vmatpush1.msra.mxu0 %v3378
        %3563 = vmatprep.subr.mxu0 0.0
        %3564 = vmatpush1.msra.mxu0 %v3379
        %3565 = vmatprep.subr.mxu0 0.0
        %3566 = vmatpush1.msra.mxu0 %v3380
        %3567 = vmatprep.subr.mxu0 0.0
        %3568 = vmatpush1.msra.mxu0 %v3381
        %3569 = vmatprep.subr.mxu0 0.0
        %3570 = vmatpush1.msra.mxu0 %v3382
        %3571 = vmatprep.subr.mxu0 0.0
        %3572 = vmatpush1.msra.mxu0 %v3383
        %3573 = vmatprep.subr.mxu0 0.0
        %3574 = vmatpush1.msra.mxu0 %v3384
        %3575 = vmatprep.subr.mxu0 0.0
        %3576 = vmatpush1.msra.mxu0 %v3385
        %3577 = vmatprep.subr.mxu0 0.0
        %3578 = vmatpush1.msra.mxu0 %v3386
        %3579 = vmatprep.subr.mxu0 0.0
        %3580 = vmatpush1.msra.mxu0 %v3387
        %3581 = vmatprep.subr.mxu0 0.0
        %3582 = vmatpush1.msra.mxu0 %v3388
        %3583 = vmatprep.subr.mxu0 0.0
        %3584 = vmatpush1.msra.mxu0 %v3389
        %3585 = vmatprep.subr.mxu0 0.0
        %3586 = vmatpush1.msra.mxu0 %v3390
        %3587 = vmatprep.mubr.f32.mxu0 %v2838
        %3588 = vmatmul.mubr.f32.gmra.mrb[0].mxu0 %v2836
        %v3589 = vpop.f32.mrb[0].mxu0
        %v3590 = vadd.f32 %v3520, %v3589
        %v3591 = vpop.f32.mrb[0].mxu0
        %3592 = vdwg.mxu0
        %3593 = vmatprep.subr.mxu0 0.0
        %3594 = vmatpush1.msra.mxu0 %v3391
        %3595 = vmatprep.subr.mxu0 0.0
        %3596 = vmatpush1.msra.mxu0 %v3392
        %3597 = vmatprep.subr.mxu0 0.0
        %3598 = vmatpush1.msra.mxu0 %v3393
        %3599 = vmatprep.subr.mxu0 0.0
        %3600 = vmatpush1.msra.mxu0 %v3394
        %3601 = vmatprep.subr.mxu0 0.0
        %3602 = vmatpush1.msra.mxu0 %v3395
        %3603 = vmatprep.subr.mxu0 0.0
        %3604 = vmatpush1.msra.mxu0 %v3396
        %3605 = vmatprep.subr.mxu0 0.0
        %3606 = vmatpush1.msra.mxu0 %v3397
        %3607 = vmatprep.subr.mxu0 0.0
        %3608 = vmatpush1.msra.mxu0 %v3398
        %3609 = vmatprep.subr.mxu0 0.0
        %3610 = vmatpush1.msra.mxu0 %v3399
        %3611 = vmatprep.subr.mxu0 0.0
        %3612 = vmatpush1.msra.mxu0 %v3400
        %3613 = vmatprep.subr.mxu0 0.0
        %3614 = vmatpush1.msra.mxu0 %v3401
        %3615 = vmatprep.subr.mxu0 0.0
        %3616 = vmatpush1.msra.mxu0 %v3402
        %3617 = vmatprep.subr.mxu0 0.0
        %3618 = vmatpush1.msra.mxu0 %v3403
        %3619 = vmatprep.subr.mxu0 0.0
        %3620 = vmatpush1.msra.mxu0 %v3404
        %3621 = vmatprep.subr.mxu0 0.0
        %3622 = vmatpush1.msra.mxu0 %v3405
        %3623 = vmatprep.subr.mxu0 0.0
        %3624 = vmatpush1.msra.mxu0 %v3406
        %3625 = vmatprep.subr.mxu0 0.0
        %3626 = vmatpush1.msra.mxu0 %v3407
        %3627 = vmatprep.subr.mxu0 0.0
        %3628 = vmatpush1.msra.mxu0 %v3408
        %3629 = vmatprep.subr.mxu0 0.0
        %3630 = vmatpush1.msra.mxu0 %v3409
        %3631 = vmatprep.subr.mxu0 0.0
        %3632 = vmatpush1.msra.mxu0 %v3410
        %3633 = vmatprep.subr.mxu0 0.0
        %3634 = vmatpush1.msra.mxu0 %v3411
        %3635 = vmatprep.subr.mxu0 0.0
        %3636 = vmatpush1.msra.mxu0 %v3412
        %3637 = vmatprep.subr.mxu0 0.0
        %3638 = vmatpush1.msra.mxu0 %v3413
        %3639 = vmatprep.subr.mxu0 0.0
        %3640 = vmatpush1.msra.mxu0 %v3414
        %3641 = vmatprep.subr.mxu0 0.0
        %3642 = vmatpush1.msra.mxu0 %v3415
        %3643 = vmatprep.subr.mxu0 0.0
        %3644 = vmatpush1.msra.mxu0 %v3416
        %3645 = vmatprep.subr.mxu0 0.0
        %3646 = vmatpush1.msra.mxu0 %v3417
        %3647 = vmatprep.subr.mxu0 0.0
        %3648 = vmatpush1.msra.mxu0 %v3418
        %3649 = vmatprep.subr.mxu0 0.0
        %3650 = vmatpush1.msra.mxu0 %v3419
        %3651 = vmatprep.subr.mxu0 0.0
        %3652 = vmatpush1.msra.mxu0 %v3420
        %3653 = vmatprep.subr.mxu0 0.0
        %3654 = vmatpush1.msra.mxu0 %v3421
        %3655 = vmatprep.subr.mxu0 0.0
        %3656 = vmatpush1.msra.mxu0 %v3422
        %3657 = vmatprep.mubr.f32.mxu0 %v2909
        %3658 = vmatmul.mubr.f32.gmra.mrb[0].mxu0 %v2907
        %v3659 = vpop.f32.mrb[0].mxu0
        %v3660 = vadd.f32 %v3590, %v3659
        %v3661 = vpop.f32.mrb[0].mxu0
        %3662 = vdwg.mxu0
        %3663 = vmatprep.subr.mxu0 0.0
        %3664 = vmatpush1.msra.mxu0 %v3423
        %3665 = vmatprep.subr.mxu0 0.0
        %3666 = vmatpush1.msra.mxu0 %v3424
        %3667 = vmatprep.subr.mxu0 0.0
        %3668 = vmatpush1.msra.mxu0 %v3425
        %3669 = vmatprep.subr.mxu0 0.0
        %3670 = vmatpush1.msra.mxu0 %v3426
        %3671 = vmatprep.subr.mxu0 0.0
        %3672 = vmatpush1.msra.mxu0 %v3427
        %3673 = vmatprep.subr.mxu0 0.0
        %3674 = vmatpush1.msra.mxu0 %v3428
        %3675 = vmatprep.subr.mxu0 0.0
        %3676 = vmatpush1.msra.mxu0 %v3429
        %3677 = vmatprep.subr.mxu0 0.0
        %3678 = vmatpush1.msra.mxu0 %v3430
        %3679 = vmatprep.subr.mxu0 0.0
        %3680 = vmatpush1.msra.mxu0 %v3431
        %3681 = vmatprep.subr.mxu0 0.0
        %3682 = vmatpush1.msra.mxu0 %v3432
        %3683 = vmatprep.subr.mxu0 0.0
        %3684 = vmatpush1.msra.mxu0 %v3433
        %3685 = vmatprep.subr.mxu0 0.0
        %3686 = vmatpush1.msra.mxu0 %v3434
        %3687 = vmatprep.subr.mxu0 0.0
        %3688 = vmatpush1.msra.mxu0 %v3435
        %3689 = vmatprep.subr.mxu0 0.0
        %3690 = vmatpush1.msra.mxu0 %v3436
        %3691 = vmatprep.subr.mxu0 0.0
        %3692 = vmatpush1.msra.mxu0 %v3437
        %3693 = vmatprep.subr.mxu0 0.0
        %3694 = vmatpush1.msra.mxu0 %v3438
        %3695 = vmatprep.subr.mxu0 0.0
        %3696 = vmatpush1.msra.mxu0 %v3451
        %3697 = vmatprep.subr.mxu0 0.0
        %3698 = vmatpush1.msra.mxu0 0.0
        %3699 = vmatprep.subr.mxu0 0.0
        %3700 = vmatpush1.msra.mxu0 0.0
        %3701 = vmatprep.subr.mxu0 0.0
        %3702 = vmatpush1.msra.mxu0 0.0
        %3703 = vmatprep.subr.mxu0 0.0
        %3704 = vmatpush1.msra.mxu0 0.0
        %3705 = vmatprep.subr.mxu0 0.0
        %3706 = vmatpush1.msra.mxu0 0.0
        %3707 = vmatprep.subr.mxu0 0.0
        %3708 = vmatpush1.msra.mxu0 0.0
        %3709 = vmatprep.subr.mxu0 0.0
        %3710 = vmatpush1.msra.mxu0 0.0
        %3711 = vmatprep.subr.mxu0 0.0
        %3712 = vmatpush1.msra.mxu0 0.0
        %3713 = vmatprep.subr.mxu0 0.0
        %3714 = vmatpush1.msra.mxu0 0.0
        %3715 = vmatprep.subr.mxu0 0.0
        %3716 = vmatpush1.msra.mxu0 0.0
        %3717 = vmatprep.subr.mxu0 0.0
        %3718 = vmatpush1.msra.mxu0 0.0
        %3719 = vmatprep.subr.mxu0 0.0
        %3720 = vmatpush1.msra.mxu0 0.0
        %3721 = vmatprep.subr.mxu0 0.0
        %3722 = vmatpush1.msra.mxu0 0.0
        %3723 = vmatprep.subr.mxu0 0.0
        %3724 = vmatpush1.msra.mxu0 0.0
        %3725 = vmatprep.subr.mxu0 0.0
        %3726 = vmatpush1.msra.mxu0 0.0
        %3727 = vmatprep.mubr.f32.mxu0 %v3447
        %3728 = vmatmul.mubr.f32.gmra.mrb[0].mxu0 %v2978
        %v3729 = vpop.f32.mrb[0].mxu0
        %v3730 = vadd.f32 %v3660, %v3729
        %v3731 = vpop.f32.mrb[0].mxu0
        %3732 = vdwg.mxu0
        %v3733 = vmax.f32 %v3730, 0.0
        %v3734 = vld [vmem:[%s10] sm:$0x1]
        %v3735 = vld [vmem:[%s9] sm:$0xff]
        %v3736 = vld [vmem:[%s9 + $0x8] sm:$0xff]
        %v3737 = vld [vmem:[%s9 + $0x10] sm:$0xff]
        %v3738 = vld [vmem:[%s9 + $0x18] sm:$0xff]
        %v3739 = vld [vmem:[%s9 + $0x20] sm:$0xff]
        %v3740 = vld [vmem:[%s9 + $0x28] sm:$0xff]
        %v3741 = vld [vmem:[%s9 + $0x30] sm:$0x1]
        %vm3742 = vcmask 400384
        %v3744 = vsel %vm3742, %v3733, 0
        %vm3746 = vcmask 1040384
        %v3748 = vsel %vm3746, %v3741, 0
        %3750 = vmatprep.subr.mxu0 0.0
        %3751 = vmatpush1.msra.mxu0 %v3735
        %3752 = vmatprep.subr.mxu0 0.0
        %3753 = vmatpush1.msra.mxu0 %v3736
        %3754 = vmatprep.subr.mxu0 0.0
        %3755 = vmatpush1.msra.mxu0 %v3737
        %3756 = vmatprep.subr.mxu0 0.0
        %3757 = vmatpush1.msra.mxu0 %v3738
        %3758 = vmatprep.subr.mxu0 0.0
        %3759 = vmatpush1.msra.mxu0 %v3739
        %3760 = vmatprep.subr.mxu0 0.0
        %3761 = vmatpush1.msra.mxu0 %v3740
        %3762 = vmatprep.subr.mxu0 0.0
        %3763 = vmatpush1.msra.mxu0 %v3748
        %3764 = vmatprep.subr.mxu0 0.0
        %3765 = vmatpush1.msra.mxu0 0.0
        %3766 = vmatprep.subr.mxu0 0.0
        %3767 = vmatpush1.msra.mxu0 0.0
        %3768 = vmatprep.subr.mxu0 0.0
        %3769 = vmatpush1.msra.mxu0 0.0
        %3770 = vmatprep.subr.mxu0 0.0
        %3771 = vmatpush1.msra.mxu0 0.0
        %3772 = vmatprep.subr.mxu0 0.0
        %3773 = vmatpush1.msra.mxu0 0.0
        %3774 = vmatprep.subr.mxu0 0.0
        %3775 = vmatpush1.msra.mxu0 0.0
        %3776 = vmatprep.subr.mxu0 0.0
        %3777 = vmatpush1.msra.mxu0 0.0
        %3778 = vmatprep.subr.mxu0 0.0
        %3779 = vmatpush1.msra.mxu0 0.0
        %3780 = vmatprep.subr.mxu0 0.0
        %3781 = vmatpush1.msra.mxu0 0.0
        %3782 = vmatprep.subr.mxu0 0.0
        %3783 = vmatpush1.msra.mxu0 0.0
        %3784 = vmatprep.subr.mxu0 0.0
        %3785 = vmatpush1.msra.mxu0 0.0
        %3786 = vmatprep.subr.mxu0 0.0
        %3787 = vmatpush1.msra.mxu0 0.0
        %3788 = vmatprep.subr.mxu0 0.0
        %3789 = vmatpush1.msra.mxu0 0.0
        %3790 = vmatprep.subr.mxu0 0.0
        %3791 = vmatpush1.msra.mxu0 0.0
        %3792 = vmatprep.subr.mxu0 0.0
        %3793 = vmatpush1.msra.mxu0 0.0
        %3794 = vmatprep.subr.mxu0 0.0
        %3795 = vmatpush1.msra.mxu0 0.0
        %3796 = vmatprep.subr.mxu0 0.0
        %3797 = vmatpush1.msra.mxu0 0.0
        %3798 = vmatprep.subr.mxu0 0.0
        %3799 = vmatpush1.msra.mxu0 0.0
        %3800 = vmatprep.subr.mxu0 0.0
        %3801 = vmatpush1.msra.mxu0 0.0
        %3802 = vmatprep.subr.mxu0 0.0
        %3803 = vmatpush1.msra.mxu0 0.0
        %3804 = vmatprep.subr.mxu0 0.0
        %3805 = vmatpush1.msra.mxu0 0.0
        %3806 = vmatprep.subr.mxu0 0.0
        %3807 = vmatpush1.msra.mxu0 0.0
        %3808 = vmatprep.subr.mxu0 0.0
        %3809 = vmatpush1.msra.mxu0 0.0
        %3810 = vmatprep.subr.mxu0 0.0
        %3811 = vmatpush1.msra.mxu0 0.0
        %3812 = vmatprep.subr.mxu0 0.0
        %3813 = vmatpush1.msra.mxu0 0.0
        %3814 = vmatprep.mubr.f32.mxu0 0.0
        %3815 = vmatmul.mubr.f32.gmra.mrb[0].mxu0 %v3744
        %v3816 = vpop.f32.mrb[0].mxu0
        %v3817 = vadd.f32 0.0, %v3816
        %v3818 = vpop.f32.mrb[0].mxu0
        %3819 = vdwg.mxu0
        %v3820 = vadd.f32 %v3734, %v3817
        %s3821 = scalar_lea.vmem %s9, 56
        %v3822 = vld [vmem:[%s3821] sm:$0xff]
        %v3823 = vld [vmem:[%s3821 + $0x8] sm:$0xff]
        %v3824 = vld [vmem:[%s3821 + $0x10] sm:$0xff]
        %v3825 = vld [vmem:[%s3821 + $0x18] sm:$0xff]
        %v3826 = vld [vmem:[%s3821 + $0x20] sm:$0xff]
        %v3827 = vld [vmem:[%s3821 + $0x28] sm:$0xff]
        %v3828 = vld [vmem:[%s3821 + $0x30] sm:$0x1]
        %v3829 = vrot.slane %v3733, 1
        %v3830 = vsel %vm3742, %v3829, 0
        %v3833 = vsel %vm3746, %v3828, 0
        %3835 = vmatprep.subr.mxu0 0.0
        %3836 = vmatpush1.msra.mxu0 %v3822
        %3837 = vmatprep.subr.mxu0 0.0
        %3838 = vmatpush1.msra.mxu0 %v3823
        %3839 = vmatprep.subr.mxu0 0.0
        %3840 = vmatpush1.msra.mxu0 %v3824
        %3841 = vmatprep.subr.mxu0 0.0
        %3842 = vmatpush1.msra.mxu0 %v3825
        %3843 = vmatprep.subr.mxu0 0.0
        %3844 = vmatpush1.msra.mxu0 %v3826
        %3845 = vmatprep.subr.mxu0 0.0
        %3846 = vmatpush1.msra.mxu0 %v3827
        %3847 = vmatprep.subr.mxu0 0.0
        %3848 = vmatpush1.msra.mxu0 %v3833
        %3849 = vmatprep.subr.mxu0 0.0
        %3850 = vmatpush1.msra.mxu0 0.0
        %3851 = vmatprep.subr.mxu0 0.0
        %3852 = vmatpush1.msra.mxu0 0.0
        %3853 = vmatprep.subr.mxu0 0.0
        %3854 = vmatpush1.msra.mxu0 0.0
        %3855 = vmatprep.subr.mxu0 0.0
        %3856 = vmatpush1.msra.mxu0 0.0
        %3857 = vmatprep.subr.mxu0 0.0
        %3858 = vmatpush1.msra.mxu0 0.0
        %3859 = vmatprep.subr.mxu0 0.0
        %3860 = vmatpush1.msra.mxu0 0.0
        %3861 = vmatprep.subr.mxu0 0.0
        %3862 = vmatpush1.msra.mxu0 0.0
        %3863 = vmatprep.subr.mxu0 0.0
        %3864 = vmatpush1.msra.mxu0 0.0
        %3865 = vmatprep.subr.mxu0 0.0
        %3866 = vmatpush1.msra.mxu0 0.0
        %3867 = vmatprep.subr.mxu0 0.0
        %3868 = vmatpush1.msra.mxu0 0.0
        %3869 = vmatprep.subr.mxu0 0.0
        %3870 = vmatpush1.msra.mxu0 0.0
        %3871 = vmatprep.subr.mxu0 0.0
        %3872 = vmatpush1.msra.mxu0 0.0
        %3873 = vmatprep.subr.mxu0 0.0
        %3874 = vmatpush1.msra.mxu0 0.0
        %3875 = vmatprep.subr.mxu0 0.0
        %3876 = vmatpush1.msra.mxu0 0.0
        %3877 = vmatprep.subr.mxu0 0.0
        %3878 = vmatpush1.msra.mxu0 0.0
        %3879 = vmatprep.subr.mxu0 0.0
        %3880 = vmatpush1.msra.mxu0 0.0
        %3881 = vmatprep.subr.mxu0 0.0
        %3882 = vmatpush1.msra.mxu0 0.0
        %3883 = vmatprep.subr.mxu0 0.0
        %3884 = vmatpush1.msra.mxu0 0.0
        %3885 = vmatprep.subr.mxu0 0.0
        %3886 = vmatpush1.msra.mxu0 0.0
        %3887 = vmatprep.subr.mxu0 0.0
        %3888 = vmatpush1.msra.mxu0 0.0
        %3889 = vmatprep.subr.mxu0 0.0
        %3890 = vmatpush1.msra.mxu0 0.0
        %3891 = vmatprep.subr.mxu0 0.0
        %3892 = vmatpush1.msra.mxu0 0.0
        %3893 = vmatprep.subr.mxu0 0.0
        %3894 = vmatpush1.msra.mxu0 0.0
        %3895 = vmatprep.subr.mxu0 0.0
        %3896 = vmatpush1.msra.mxu0 0.0
        %3897 = vmatprep.subr.mxu0 0.0
        %3898 = vmatpush1.msra.mxu0 0.0
        %3899 = vmatprep.mubr.f32.mxu0 0.0
        %3900 = vmatmul.mubr.f32.gmra.mrb[0].mxu0 %v3830
        %v3901 = vpop.f32.mrb[0].mxu0
        %v3902 = vadd.f32 0.0, %v3901
        %v3903 = vpop.f32.mrb[0].mxu0
        %3904 = vdwg.mxu0
        %v3905 = vadd.f32 %v3820, %v3902
        %s3906 = scalar_lea.vmem %s9, 112
        %v3907 = vld [vmem:[%s3906] sm:$0xff]
        %v3908 = vld [vmem:[%s3906 + $0x8] sm:$0xff]
        %v3909 = vld [vmem:[%s3906 + $0x10] sm:$0xff]
        %v3910 = vld [vmem:[%s3906 + $0x18] sm:$0xff]
        %v3911 = vld [vmem:[%s3906 + $0x20] sm:$0xff]
        %v3912 = vld [vmem:[%s3906 + $0x28] sm:$0xff]
        %v3913 = vld [vmem:[%s3906 + $0x30] sm:$0x1]
        %v3914 = vrot.slane %v3733, 2
        %v3915 = vsel %vm3742, %v3914, 0
        %v3918 = vsel %vm3746, %v3913, 0
        %3920 = vmatprep.subr.mxu0 0.0
        %3921 = vmatpush1.msra.mxu0 %v3907
        %3922 = vmatprep.subr.mxu0 0.0
        %3923 = vmatpush1.msra.mxu0 %v3908
        %3924 = vmatprep.subr.mxu0 0.0
        %3925 = vmatpush1.msra.mxu0 %v3909
        %3926 = vmatprep.subr.mxu0 0.0
        %3927 = vmatpush1.msra.mxu0 %v3910
        %3928 = vmatprep.subr.mxu0 0.0
        %3929 = vmatpush1.msra.mxu0 %v3911
        %3930 = vmatprep.subr.mxu0 0.0
        %3931 = vmatpush1.msra.mxu0 %v3912
        %3932 = vmatprep.subr.mxu0 0.0
        %3933 = vmatpush1.msra.mxu0 %v3918
        %3934 = vmatprep.subr.mxu0 0.0
        %3935 = vmatpush1.msra.mxu0 0.0
        %3936 = vmatprep.subr.mxu0 0.0
        %3937 = vmatpush1.msra.mxu0 0.0
        %3938 = vmatprep.subr.mxu0 0.0
        %3939 = vmatpush1.msra.mxu0 0.0
        %3940 = vmatprep.subr.mxu0 0.0
        %3941 = vmatpush1.msra.mxu0 0.0
        %3942 = vmatprep.subr.mxu0 0.0
        %3943 = vmatpush1.msra.mxu0 0.0
        %3944 = vmatprep.subr.mxu0 0.0
        %3945 = vmatpush1.msra.mxu0 0.0
        %3946 = vmatprep.subr.mxu0 0.0
        %3947 = vmatpush1.msra.mxu0 0.0
        %3948 = vmatprep.subr.mxu0 0.0
        %3949 = vmatpush1.msra.mxu0 0.0
        %3950 = vmatprep.subr.mxu0 0.0
        %3951 = vmatpush1.msra.mxu0 0.0
        %3952 = vmatprep.subr.mxu0 0.0
        %3953 = vmatpush1.msra.mxu0 0.0
        %3954 = vmatprep.subr.mxu0 0.0
        %3955 = vmatpush1.msra.mxu0 0.0
        %3956 = vmatprep.subr.mxu0 0.0
        %3957 = vmatpush1.msra.mxu0 0.0
        %3958 = vmatprep.subr.mxu0 0.0
        %3959 = vmatpush1.msra.mxu0 0.0
        %3960 = vmatprep.subr.mxu0 0.0
        %3961 = vmatpush1.msra.mxu0 0.0
        %3962 = vmatprep.subr.mxu0 0.0
        %3963 = vmatpush1.msra.mxu0 0.0
        %3964 = vmatprep.subr.mxu0 0.0
        %3965 = vmatpush1.msra.mxu0 0.0
        %3966 = vmatprep.subr.mxu0 0.0
        %3967 = vmatpush1.msra.mxu0 0.0
        %3968 = vmatprep.subr.mxu0 0.0
        %3969 = vmatpush1.msra.mxu0 0.0
        %3970 = vmatprep.subr.mxu0 0.0
        %3971 = vmatpush1.msra.mxu0 0.0
        %3972 = vmatprep.subr.mxu0 0.0
        %3973 = vmatpush1.msra.mxu0 0.0
        %3974 = vmatprep.subr.mxu0 0.0
        %3975 = vmatpush1.msra.mxu0 0.0
        %3976 = vmatprep.subr.mxu0 0.0
        %3977 = vmatpush1.msra.mxu0 0.0
        %3978 = vmatprep.subr.mxu0 0.0
        %3979 = vmatpush1.msra.mxu0 0.0
        %3980 = vmatprep.subr.mxu0 0.0
        %3981 = vmatpush1.msra.mxu0 0.0
        %3982 = vmatprep.subr.mxu0 0.0
        %3983 = vmatpush1.msra.mxu0 0.0
        %3984 = vmatprep.mubr.f32.mxu0 0.0
        %3985 = vmatmul.mubr.f32.gmra.mrb[0].mxu0 %v3915
        %v3986 = vpop.f32.mrb[0].mxu0
        %v3987 = vadd.f32 0.0, %v3986
        %v3988 = vpop.f32.mrb[0].mxu0
        %3989 = vdwg.mxu0
        %v3990 = vadd.f32 %v3905, %v3987
        %s3991 = scalar_lea.vmem %s9, 168
        %v3992 = vld [vmem:[%s3991] sm:$0xff]
        %v3993 = vld [vmem:[%s3991 + $0x8] sm:$0xff]
        %v3994 = vld [vmem:[%s3991 + $0x10] sm:$0xff]
        %v3995 = vld [vmem:[%s3991 + $0x18] sm:$0xff]
        %v3996 = vld [vmem:[%s3991 + $0x20] sm:$0xff]
        %v3997 = vld [vmem:[%s3991 + $0x28] sm:$0xff]
        %v3998 = vld [vmem:[%s3991 + $0x30] sm:$0x1]
        %v3999 = vrot.slane %v3733, 3
        %v4000 = vsel %vm3742, %v3999, 0
        %v4003 = vsel %vm3746, %v3998, 0
        %4005 = vmatprep.subr.mxu0 0.0
        %4006 = vmatpush1.msra.mxu0 %v3992
        %4007 = vmatprep.subr.mxu0 0.0
        %4008 = vmatpush1.msra.mxu0 %v3993
        %4009 = vmatprep.subr.mxu0 0.0
        %4010 = vmatpush1.msra.mxu0 %v3994
        %4011 = vmatprep.subr.mxu0 0.0
        %4012 = vmatpush1.msra.mxu0 %v3995
        %4013 = vmatprep.subr.mxu0 0.0
        %4014 = vmatpush1.msra.mxu0 %v3996
        %4015 = vmatprep.subr.mxu0 0.0
        %4016 = vmatpush1.msra.mxu0 %v3997
        %4017 = vmatprep.subr.mxu0 0.0
        %4018 = vmatpush1.msra.mxu0 %v4003
        %4019 = vmatprep.subr.mxu0 0.0
        %4020 = vmatpush1.msra.mxu0 0.0
        %4021 = vmatprep.subr.mxu0 0.0
        %4022 = vmatpush1.msra.mxu0 0.0
        %4023 = vmatprep.subr.mxu0 0.0
        %4024 = vmatpush1.msra.mxu0 0.0
        %4025 = vmatprep.subr.mxu0 0.0
        %4026 = vmatpush1.msra.mxu0 0.0
        %4027 = vmatprep.subr.mxu0 0.0
        %4028 = vmatpush1.msra.mxu0 0.0
        %4029 = vmatprep.subr.mxu0 0.0
        %4030 = vmatpush1.msra.mxu0 0.0
        %4031 = vmatprep.subr.mxu0 0.0
        %4032 = vmatpush1.msra.mxu0 0.0
        %4033 = vmatprep.subr.mxu0 0.0
        %4034 = vmatpush1.msra.mxu0 0.0
        %4035 = vmatprep.subr.mxu0 0.0
        %4036 = vmatpush1.msra.mxu0 0.0
        %4037 = vmatprep.subr.mxu0 0.0
        %4038 = vmatpush1.msra.mxu0 0.0
        %4039 = vmatprep.subr.mxu0 0.0
        %4040 = vmatpush1.msra.mxu0 0.0
        %4041 = vmatprep.subr.mxu0 0.0
        %4042 = vmatpush1.msra.mxu0 0.0
        %4043 = vmatprep.subr.mxu0 0.0
        %4044 = vmatpush1.msra.mxu0 0.0
        %4045 = vmatprep.subr.mxu0 0.0
        %4046 = vmatpush1.msra.mxu0 0.0
        %4047 = vmatprep.subr.mxu0 0.0
        %4048 = vmatpush1.msra.mxu0 0.0
        %4049 = vmatprep.subr.mxu0 0.0
        %4050 = vmatpush1.msra.mxu0 0.0
        %4051 = vmatprep.subr.mxu0 0.0
        %4052 = vmatpush1.msra.mxu0 0.0
        %4053 = vmatprep.subr.mxu0 0.0
        %4054 = vmatpush1.msra.mxu0 0.0
        %4055 = vmatprep.subr.mxu0 0.0
        %4056 = vmatpush1.msra.mxu0 0.0
        %4057 = vmatprep.subr.mxu0 0.0
        %4058 = vmatpush1.msra.mxu0 0.0
        %4059 = vmatprep.subr.mxu0 0.0
        %4060 = vmatpush1.msra.mxu0 0.0
        %4061 = vmatprep.subr.mxu0 0.0
        %4062 = vmatpush1.msra.mxu0 0.0
        %4063 = vmatprep.subr.mxu0 0.0
        %4064 = vmatpush1.msra.mxu0 0.0
        %4065 = vmatprep.subr.mxu0 0.0
        %4066 = vmatpush1.msra.mxu0 0.0
        %4067 = vmatprep.subr.mxu0 0.0
        %4068 = vmatpush1.msra.mxu0 0.0
        %4069 = vmatprep.mubr.f32.mxu0 0.0
        %4070 = vmatmul.mubr.f32.gmra.mrb[0].mxu0 %v4000
        %v4071 = vpop.f32.mrb[0].mxu0
        %v4072 = vadd.f32 0.0, %v4071
        %v4073 = vpop.f32.mrb[0].mxu0
        %4074 = vdwg.mxu0
        %v4075 = vadd.f32 %v3990, %v4072
        %s4076 = scalar_lea.vmem %s9, 224
        %v4077 = vld [vmem:[%s4076] sm:$0xff]
        %v4078 = vld [vmem:[%s4076 + $0x8] sm:$0xff]
        %v4079 = vld [vmem:[%s4076 + $0x10] sm:$0xff]
        %v4080 = vld [vmem:[%s4076 + $0x18] sm:$0xff]
        %v4081 = vld [vmem:[%s4076 + $0x20] sm:$0xff]
        %v4082 = vld [vmem:[%s4076 + $0x28] sm:$0xff]
        %v4083 = vld [vmem:[%s4076 + $0x30] sm:$0x1]
        %v4084 = vrot.slane %v3733, 4
        %v4085 = vsel %vm3742, %v4084, 0
        %v4088 = vsel %vm3746, %v4083, 0
        %4090 = vmatprep.subr.mxu0 0.0
        %4091 = vmatpush1.msra.mxu0 %v4077
        %4092 = vmatprep.subr.mxu0 0.0
        %4093 = vmatpush1.msra.mxu0 %v4078
        %4094 = vmatprep.subr.mxu0 0.0
        %4095 = vmatpush1.msra.mxu0 %v4079
        %4096 = vmatprep.subr.mxu0 0.0
        %4097 = vmatpush1.msra.mxu0 %v4080
        %4098 = vmatprep.subr.mxu0 0.0
        %4099 = vmatpush1.msra.mxu0 %v4081
        %4100 = vmatprep.subr.mxu0 0.0
        %4101 = vmatpush1.msra.mxu0 %v4082
        %4102 = vmatprep.subr.mxu0 0.0
        %4103 = vmatpush1.msra.mxu0 %v4088
        %4104 = vmatprep.subr.mxu0 0.0
        %4105 = vmatpush1.msra.mxu0 0.0
        %4106 = vmatprep.subr.mxu0 0.0
        %4107 = vmatpush1.msra.mxu0 0.0
        %4108 = vmatprep.subr.mxu0 0.0
        %4109 = vmatpush1.msra.mxu0 0.0
        %4110 = vmatprep.subr.mxu0 0.0
        %4111 = vmatpush1.msra.mxu0 0.0
        %4112 = vmatprep.subr.mxu0 0.0
        %4113 = vmatpush1.msra.mxu0 0.0
        %4114 = vmatprep.subr.mxu0 0.0
        %4115 = vmatpush1.msra.mxu0 0.0
        %4116 = vmatprep.subr.mxu0 0.0
        %4117 = vmatpush1.msra.mxu0 0.0
        %4118 = vmatprep.subr.mxu0 0.0
        %4119 = vmatpush1.msra.mxu0 0.0
        %4120 = vmatprep.subr.mxu0 0.0
        %4121 = vmatpush1.msra.mxu0 0.0
        %4122 = vmatprep.subr.mxu0 0.0
        %4123 = vmatpush1.msra.mxu0 0.0
        %4124 = vmatprep.subr.mxu0 0.0
        %4125 = vmatpush1.msra.mxu0 0.0
        %4126 = vmatprep.subr.mxu0 0.0
        %4127 = vmatpush1.msra.mxu0 0.0
        %4128 = vmatprep.subr.mxu0 0.0
        %4129 = vmatpush1.msra.mxu0 0.0
        %4130 = vmatprep.subr.mxu0 0.0
        %4131 = vmatpush1.msra.mxu0 0.0
        %4132 = vmatprep.subr.mxu0 0.0
        %4133 = vmatpush1.msra.mxu0 0.0
        %4134 = vmatprep.subr.mxu0 0.0
        %4135 = vmatpush1.msra.mxu0 0.0
        %4136 = vmatprep.subr.mxu0 0.0
        %4137 = vmatpush1.msra.mxu0 0.0
        %4138 = vmatprep.subr.mxu0 0.0
        %4139 = vmatpush1.msra.mxu0 0.0
        %4140 = vmatprep.subr.mxu0 0.0
        %4141 = vmatpush1.msra.mxu0 0.0
        %4142 = vmatprep.subr.mxu0 0.0
        %4143 = vmatpush1.msra.mxu0 0.0
        %4144 = vmatprep.subr.mxu0 0.0
        %4145 = vmatpush1.msra.mxu0 0.0
        %4146 = vmatprep.subr.mxu0 0.0
        %4147 = vmatpush1.msra.mxu0 0.0
        %4148 = vmatprep.subr.mxu0 0.0
        %4149 = vmatpush1.msra.mxu0 0.0
        %4150 = vmatprep.subr.mxu0 0.0
        %4151 = vmatpush1.msra.mxu0 0.0
        %4152 = vmatprep.subr.mxu0 0.0
        %4153 = vmatpush1.msra.mxu0 0.0
        %4154 = vmatprep.mubr.f32.mxu0 0.0
        %4155 = vmatmul.mubr.f32.gmra.mrb[0].mxu0 %v4085
        %v4156 = vpop.f32.mrb[0].mxu0
        %v4157 = vadd.f32 0.0, %v4156
        %v4158 = vpop.f32.mrb[0].mxu0
        %4159 = vdwg.mxu0
        %v4160 = vadd.f32 %v4075, %v4157
        %s4161 = scalar_lea.vmem %s9, 280
        %v4162 = vld [vmem:[%s4161] sm:$0xff]
        %v4163 = vld [vmem:[%s4161 + $0x8] sm:$0xff]
        %v4164 = vld [vmem:[%s4161 + $0x10] sm:$0xff]
        %v4165 = vld [vmem:[%s4161 + $0x18] sm:$0xff]
        %v4166 = vld [vmem:[%s4161 + $0x20] sm:$0xff]
        %v4167 = vld [vmem:[%s4161 + $0x28] sm:$0xff]
        %v4168 = vld [vmem:[%s4161 + $0x30] sm:$0x1]
        %v4169 = vrot.slane %v3733, 5
        %v4170 = vsel %vm3742, %v4169, 0
        %v4173 = vsel %vm3746, %v4168, 0
        %4175 = vmatprep.subr.mxu0 0.0
        %4176 = vmatpush1.msra.mxu0 %v4162
        %4177 = vmatprep.subr.mxu0 0.0
        %4178 = vmatpush1.msra.mxu0 %v4163
        %4179 = vmatprep.subr.mxu0 0.0
        %4180 = vmatpush1.msra.mxu0 %v4164
        %4181 = vmatprep.subr.mxu0 0.0
        %4182 = vmatpush1.msra.mxu0 %v4165
        %4183 = vmatprep.subr.mxu0 0.0
        %4184 = vmatpush1.msra.mxu0 %v4166
        %4185 = vmatprep.subr.mxu0 0.0
        %4186 = vmatpush1.msra.mxu0 %v4167
        %4187 = vmatprep.subr.mxu0 0.0
        %4188 = vmatpush1.msra.mxu0 %v4173
        %4189 = vmatprep.subr.mxu0 0.0
        %4190 = vmatpush1.msra.mxu0 0.0
        %4191 = vmatprep.subr.mxu0 0.0
        %4192 = vmatpush1.msra.mxu0 0.0
        %4193 = vmatprep.subr.mxu0 0.0
        %4194 = vmatpush1.msra.mxu0 0.0
        %4195 = vmatprep.subr.mxu0 0.0
        %4196 = vmatpush1.msra.mxu0 0.0
        %4197 = vmatprep.subr.mxu0 0.0
        %4198 = vmatpush1.msra.mxu0 0.0
        %4199 = vmatprep.subr.mxu0 0.0
        %4200 = vmatpush1.msra.mxu0 0.0
        %4201 = vmatprep.subr.mxu0 0.0
        %4202 = vmatpush1.msra.mxu0 0.0
        %4203 = vmatprep.subr.mxu0 0.0
        %4204 = vmatpush1.msra.mxu0 0.0
        %4205 = vmatprep.subr.mxu0 0.0
        %4206 = vmatpush1.msra.mxu0 0.0
        %4207 = vmatprep.subr.mxu0 0.0
        %4208 = vmatpush1.msra.mxu0 0.0
        %4209 = vmatprep.subr.mxu0 0.0
        %4210 = vmatpush1.msra.mxu0 0.0
        %4211 = vmatprep.subr.mxu0 0.0
        %4212 = vmatpush1.msra.mxu0 0.0
        %4213 = vmatprep.subr.mxu0 0.0
        %4214 = vmatpush1.msra.mxu0 0.0
        %4215 = vmatprep.subr.mxu0 0.0
        %4216 = vmatpush1.msra.mxu0 0.0
        %4217 = vmatprep.subr.mxu0 0.0
        %4218 = vmatpush1.msra.mxu0 0.0
        %4219 = vmatprep.subr.mxu0 0.0
        %4220 = vmatpush1.msra.mxu0 0.0
        %4221 = vmatprep.subr.mxu0 0.0
        %4222 = vmatpush1.msra.mxu0 0.0
        %4223 = vmatprep.subr.mxu0 0.0
        %4224 = vmatpush1.msra.mxu0 0.0
        %4225 = vmatprep.subr.mxu0 0.0
        %4226 = vmatpush1.msra.mxu0 0.0
        %4227 = vmatprep.subr.mxu0 0.0
        %4228 = vmatpush1.msra.mxu0 0.0
        %4229 = vmatprep.subr.mxu0 0.0
        %4230 = vmatpush1.msra.mxu0 0.0
        %4231 = vmatprep.subr.mxu0 0.0
        %4232 = vmatpush1.msra.mxu0 0.0
        %4233 = vmatprep.subr.mxu0 0.0
        %4234 = vmatpush1.msra.mxu0 0.0
        %4235 = vmatprep.subr.mxu0 0.0
        %4236 = vmatpush1.msra.mxu0 0.0
        %4237 = vmatprep.subr.mxu0 0.0
        %4238 = vmatpush1.msra.mxu0 0.0
        %4239 = vmatprep.mubr.f32.mxu0 0.0
        %4240 = vmatmul.mubr.f32.gmra.mrb[0].mxu0 %v4170
        %v4241 = vpop.f32.mrb[0].mxu0
        %v4242 = vadd.f32 0.0, %v4241
        %v4243 = vpop.f32.mrb[0].mxu0
        %4244 = vdwg.mxu0
        %v4245 = vadd.f32 %v4160, %v4242
        %s4246 = scalar_lea.vmem %s9, 336
        %v4247 = vld [vmem:[%s4246] sm:$0xff]
        %v4248 = vld [vmem:[%s4246 + $0x8] sm:$0xff]
        %v4249 = vld [vmem:[%s4246 + $0x10] sm:$0xff]
        %v4250 = vld [vmem:[%s4246 + $0x18] sm:$0xff]
        %v4251 = vld [vmem:[%s4246 + $0x20] sm:$0xff]
        %v4252 = vld [vmem:[%s4246 + $0x28] sm:$0xff]
        %v4253 = vld [vmem:[%s4246 + $0x30] sm:$0x1]
        %v4254 = vrot.slane %v3733, 6
        %v4255 = vsel %vm3742, %v4254, 0
        %v4258 = vsel %vm3746, %v4253, 0
        %4260 = vmatprep.subr.mxu0 0.0
        %4261 = vmatpush1.msra.mxu0 %v4247
        %4262 = vmatprep.subr.mxu0 0.0
        %4263 = vmatpush1.msra.mxu0 %v4248
        %4264 = vmatprep.subr.mxu0 0.0
        %4265 = vmatpush1.msra.mxu0 %v4249
        %4266 = vmatprep.subr.mxu0 0.0
        %4267 = vmatpush1.msra.mxu0 %v4250
        %4268 = vmatprep.subr.mxu0 0.0
        %4269 = vmatpush1.msra.mxu0 %v4251
        %4270 = vmatprep.subr.mxu0 0.0
        %4271 = vmatpush1.msra.mxu0 %v4252
        %4272 = vmatprep.subr.mxu0 0.0
        %4273 = vmatpush1.msra.mxu0 %v4258
        %4274 = vmatprep.subr.mxu0 0.0
        %4275 = vmatpush1.msra.mxu0 0.0
        %4276 = vmatprep.subr.mxu0 0.0
        %4277 = vmatpush1.msra.mxu0 0.0
        %4278 = vmatprep.subr.mxu0 0.0
        %4279 = vmatpush1.msra.mxu0 0.0
        %4280 = vmatprep.subr.mxu0 0.0
        %4281 = vmatpush1.msra.mxu0 0.0
        %4282 = vmatprep.subr.mxu0 0.0
        %4283 = vmatpush1.msra.mxu0 0.0
        %4284 = vmatprep.subr.mxu0 0.0
        %4285 = vmatpush1.msra.mxu0 0.0
        %4286 = vmatprep.subr.mxu0 0.0
        %4287 = vmatpush1.msra.mxu0 0.0
        %4288 = vmatprep.subr.mxu0 0.0
        %4289 = vmatpush1.msra.mxu0 0.0
        %4290 = vmatprep.subr.mxu0 0.0
        %4291 = vmatpush1.msra.mxu0 0.0
        %4292 = vmatprep.subr.mxu0 0.0
        %4293 = vmatpush1.msra.mxu0 0.0
        %4294 = vmatprep.subr.mxu0 0.0
        %4295 = vmatpush1.msra.mxu0 0.0
        %4296 = vmatprep.subr.mxu0 0.0
        %4297 = vmatpush1.msra.mxu0 0.0
        %4298 = vmatprep.subr.mxu0 0.0
        %4299 = vmatpush1.msra.mxu0 0.0
        %4300 = vmatprep.subr.mxu0 0.0
        %4301 = vmatpush1.msra.mxu0 0.0
        %4302 = vmatprep.subr.mxu0 0.0
        %4303 = vmatpush1.msra.mxu0 0.0
        %4304 = vmatprep.subr.mxu0 0.0
        %4305 = vmatpush1.msra.mxu0 0.0
        %4306 = vmatprep.subr.mxu0 0.0
        %4307 = vmatpush1.msra.mxu0 0.0
        %4308 = vmatprep.subr.mxu0 0.0
        %4309 = vmatpush1.msra.mxu0 0.0
        %4310 = vmatprep.subr.mxu0 0.0
        %4311 = vmatpush1.msra.mxu0 0.0
        %4312 = vmatprep.subr.mxu0 0.0
        %4313 = vmatpush1.msra.mxu0 0.0
        %4314 = vmatprep.subr.mxu0 0.0
        %4315 = vmatpush1.msra.mxu0 0.0
        %4316 = vmatprep.subr.mxu0 0.0
        %4317 = vmatpush1.msra.mxu0 0.0
        %4318 = vmatprep.subr.mxu0 0.0
        %4319 = vmatpush1.msra.mxu0 0.0
        %4320 = vmatprep.subr.mxu0 0.0
        %4321 = vmatpush1.msra.mxu0 0.0
        %4322 = vmatprep.subr.mxu0 0.0
        %4323 = vmatpush1.msra.mxu0 0.0
        %4324 = vmatprep.mubr.f32.mxu0 0.0
        %4325 = vmatmul.mubr.f32.gmra.mrb[0].mxu0 %v4255
        %v4326 = vpop.f32.mrb[0].mxu0
        %v4327 = vadd.f32 0.0, %v4326
        %v4328 = vpop.f32.mrb[0].mxu0
        %4329 = vdwg.mxu0
        %v4330 = vadd.f32 %v4245, %v4327
        %s4331 = scalar_lea.vmem %s9, 392
        %v4332 = vld [vmem:[%s4331] sm:$0xff]
        %v4333 = vld [vmem:[%s4331 + $0x8] sm:$0xff]
        %v4334 = vld [vmem:[%s4331 + $0x10] sm:$0xff]
        %v4335 = vld [vmem:[%s4331 + $0x18] sm:$0xff]
        %v4336 = vld [vmem:[%s4331 + $0x20] sm:$0xff]
        %v4337 = vld [vmem:[%s4331 + $0x28] sm:$0xff]
        %v4338 = vld [vmem:[%s4331 + $0x30] sm:$0x1]
        %v4339 = vrot.slane %v3733, 7
        %v4340 = vsel %vm3742, %v4339, 0
        %v4343 = vsel %vm3746, %v4338, 0
        %4345 = vmatprep.subr.mxu0 0.0
        %4346 = vmatpush1.msra.mxu0 %v4332
        %4347 = vmatprep.subr.mxu0 0.0
        %4348 = vmatpush1.msra.mxu0 %v4333
        %4349 = vmatprep.subr.mxu0 0.0
        %4350 = vmatpush1.msra.mxu0 %v4334
        %4351 = vmatprep.subr.mxu0 0.0
        %4352 = vmatpush1.msra.mxu0 %v4335
        %4353 = vmatprep.subr.mxu0 0.0
        %4354 = vmatpush1.msra.mxu0 %v4336
        %4355 = vmatprep.subr.mxu0 0.0
        %4356 = vmatpush1.msra.mxu0 %v4337
        %4357 = vmatprep.subr.mxu0 0.0
        %4358 = vmatpush1.msra.mxu0 %v4343
        %4359 = vmatprep.subr.mxu0 0.0
        %4360 = vmatpush1.msra.mxu0 0.0
        %4361 = vmatprep.subr.mxu0 0.0
        %4362 = vmatpush1.msra.mxu0 0.0
        %4363 = vmatprep.subr.mxu0 0.0
        %4364 = vmatpush1.msra.mxu0 0.0
        %4365 = vmatprep.subr.mxu0 0.0
        %4366 = vmatpush1.msra.mxu0 0.0
        %4367 = vmatprep.subr.mxu0 0.0
        %4368 = vmatpush1.msra.mxu0 0.0
        %4369 = vmatprep.subr.mxu0 0.0
        %4370 = vmatpush1.msra.mxu0 0.0
        %4371 = vmatprep.subr.mxu0 0.0
        %4372 = vmatpush1.msra.mxu0 0.0
        %4373 = vmatprep.subr.mxu0 0.0
        %4374 = vmatpush1.msra.mxu0 0.0
        %4375 = vmatprep.subr.mxu0 0.0
        %4376 = vmatpush1.msra.mxu0 0.0
        %4377 = vmatprep.subr.mxu0 0.0
        %4378 = vmatpush1.msra.mxu0 0.0
        %4379 = vmatprep.subr.mxu0 0.0
        %4380 = vmatpush1.msra.mxu0 0.0
        %4381 = vmatprep.subr.mxu0 0.0
        %4382 = vmatpush1.msra.mxu0 0.0
        %4383 = vmatprep.subr.mxu0 0.0
        %4384 = vmatpush1.msra.mxu0 0.0
        %4385 = vmatprep.subr.mxu0 0.0
        %4386 = vmatpush1.msra.mxu0 0.0
        %4387 = vmatprep.subr.mxu0 0.0
        %4388 = vmatpush1.msra.mxu0 0.0
        %4389 = vmatprep.subr.mxu0 0.0
        %4390 = vmatpush1.msra.mxu0 0.0
        %4391 = vmatprep.subr.mxu0 0.0
        %4392 = vmatpush1.msra.mxu0 0.0
        %4393 = vmatprep.subr.mxu0 0.0
        %4394 = vmatpush1.msra.mxu0 0.0
        %4395 = vmatprep.subr.mxu0 0.0
        %4396 = vmatpush1.msra.mxu0 0.0
        %4397 = vmatprep.subr.mxu0 0.0
        %4398 = vmatpush1.msra.mxu0 0.0
        %4399 = vmatprep.subr.mxu0 0.0
        %4400 = vmatpush1.msra.mxu0 0.0
        %4401 = vmatprep.subr.mxu0 0.0
        %4402 = vmatpush1.msra.mxu0 0.0
        %4403 = vmatprep.subr.mxu0 0.0
        %4404 = vmatpush1.msra.mxu0 0.0
        %4405 = vmatprep.subr.mxu0 0.0
        %4406 = vmatpush1.msra.mxu0 0.0
        %4407 = vmatprep.subr.mxu0 0.0
        %4408 = vmatpush1.msra.mxu0 0.0
        %4409 = vmatprep.mubr.f32.mxu0 0.0
        %4410 = vmatmul.mubr.f32.gmra.mrb[0].mxu0 %v4340
        %v4411 = vpop.f32.mrb[0].mxu0
        %v4412 = vadd.f32 0.0, %v4411
        %v4413 = vpop.f32.mrb[0].mxu0
        %4414 = vdwg.mxu0
        %v4415 = vadd.f32 %v4330, %v4412
        %vm4416 = vcmask 122880
        %4417 = vst.msk [vmem:[%s378] sm:$0x1] %vm4416, %v4415
        %s4418 = sand.u32 %s269, 1
        %s4419 = scalar_lea.sflag [#allocation5], %s4418
        %s4420 = sand.u32 %s269, 1
        %s4421 = scalar_lea.vmem [#allocation4], %s4420
        // Predicated region
        $region65: #{obj_det_cnn_forward.1} parent=63 // pred_check
          %p4422 = pneg %p279
        $region66: #{obj_det_cnn_forward.1} parent=63 // pred_check_branch
          %4424 = sbr.rel (%p4422) target = $region68
        $region67: #{obj_det_cnn_forward.1} parent=63 // pred_region
          %s4426 = ssub.s32 16, 16
          %4427 = vsyncadd %s4419, %s4426
          %s4428 = smul.addr %s25, 16
          %s4429 = scalar_lea.hbm %s11, %s4428
          %s4431 = sshll.u32 %s4421, 4
          %s4432 = int_to_ptr.vmem [resolvable:$true] %s4431
          %4434 = dma.vmem_to_hbm [thread:$0]  %s4432, 16, %s4429, %s4419
        $region68: #{obj_det_cnn_forward.1} parent=63 // pred_fallthru
          _
      $region64: #{obj_det_cnn_forward.1} parent=5 // pred_fallthru
        _
      %p4435 = scmp.le.s32.totalorder 2, %s20
      // Predicated region
      $region69: #{obj_det_cnn_forward.1} parent=5 // pred_check
        %p4436 = pneg %p4435
      $region70: #{obj_det_cnn_forward.1} parent=5 // pred_check_branch
        %4438 = sbr.rel (%p4436) target = $region72
      $region71: #{obj_det_cnn_forward.1} parent=5 // pred_region
        %s4439 = ssub.s32 %s20, 2
        // Predicated region
        $region73: #{obj_det_cnn_forward.1} parent=71 // pred_check
          %p4440 = pneg %p285
        $region74: #{obj_det_cnn_forward.1} parent=71 // pred_check_branch
          %4442 = sbr.rel (%p4440) target = $region76
        $region75: #{obj_det_cnn_forward.1} parent=71 // pred_region
          %s4443 = sand.u32 %s270, 1
          %s4444 = scalar_lea.sflag [#allocation5], %s4443
          %s4445 = sand.u32 %s270, 1
          %s4446 = scalar_lea.vmem [#allocation4], %s4445
          %4447 = dma.done %s4444, 16
        $region76: #{obj_det_cnn_forward.1} parent=71 // pred_fallthru
          _
      $region72: #{obj_det_cnn_forward.1} parent=5 // pred_fallthru
        _
    $region6: #{obj_det_cnn_forward.1} parent=1 // loop_footer
      %s24 = sadd.s32 1, %s20
    $region7: #{obj_det_cnn_forward.1} parent=1 // loop_footer_branch
      %19 = sbr.rel target = $region3
    $region8: #{obj_det_cnn_forward.1} parent=1 // loop_exit
      _
    %4448 = vsyncpa [#allocation5], 1
    %s4449 = scalar_lea.sflag [#allocation5], 1
    %4450 = vsyncpa %s4449, 1

</llo_original>
